<compile_context>
chip_gen: v5e
topology: v5e:2x2
jax: 0.10.0
libtpu: 0.0.40
codegen_flags: <defaults>
</compile_context>

<pallas_src>
import functools

import jax
import jax.numpy as jnp
import numpy as np
from jax import lax
from jax.experimental import pallas as pl
from jax.experimental.pallas import tpu as pltpu


# ---------------------------------------------------------------------------
# Generation-aware VMEM budget / tile picking
# ---------------------------------------------------------------------------
@functools.lru_cache(maxsize=None)
def _vmem_limit_bytes():
    """~80% of physical VMEM; conservative 48 MiB fallback (v7x has 64 MiB)."""
    cap = 0
    try:
        cap = int(pltpu.get_tpu_info().vmem_capacity_bytes)
    except Exception:
        cap = 0
    if cap <= 0:
        return 48 * 1024 * 1024
    return max(32 * 1024 * 1024, min(int(cap * 0.8), 112 * 1024 * 1024))


def _pick_seq_tile(L, D, FF):
    """Largest seq tile (multiple of 16) that divides L and fits the budget."""
    budget = int(_vmem_limit_bytes() * 0.6)
    # single-buffered bf16 weights + f32 biases
    weights = (4 * D * D + D * D + 2 * D * FF) * 2 + (3 * D + FF) * 4
    for tm in (512, 384, 256, 128, 64, 32, 16):
        if L % tm:
            continue
        # double-buffered bf16 in/out tiles + f32 in-kernel temporaries
        act = tm * (D * (2 * 2 * 2 + 2 + 4 + 4 + 2) + FF * 4)
        if weights + act <= budget:
            return tm
    return 16


# ---------------------------------------------------------------------------
# Kernels
# ---------------------------------------------------------------------------
def _layer_kernel(x_ref, halo_ref, wc_ref, bc_ref, wg_ref, bg_ref,
                  w1_ref, b1_ref, w2_ref, b2_ref, out_ref):
    # x_ref:    (1, TM, D)   bf16 — central sequence tile
    # halo_ref: (1, 1, 3, D) bf16 — [left (reflect), right0, right1]
    # wc_ref:   (4, D, D)    bf16 — conv weight as (K, C_in, C_out)
    # out_ref:  (1, TM, D)   bf16
    TM = out_ref.shape[1]

    xc = x_ref[0]                                            # (TM, D)  bf16
    hal = halo_ref[0, 0]                                     # (3, D)   bf16
    window = jnp.concatenate([hal[0:1], xc, hal[1:3]], axis=0)   # (TM+3, D) bf16

    # Conv1d(k=4, padding='same', reflect) as four accumulating bf16 MXU
    # matmuls with f32 accumulation (no (TM,4D) f32 temporary, no wide cast).
    y = bc_ref[...]                                          # (1, D) f32
    y = y + jnp.dot(window[0:TM],     wc_ref[0], preferred_element_type=jnp.float32)
    y = y + jnp.dot(window[1:TM + 1], wc_ref[1], preferred_element_type=jnp.float32)
    y = y + jnp.dot(window[2:TM + 2], wc_ref[2], preferred_element_type=jnp.float32)
    y = y + jnp.dot(window[3:TM + 3], wc_ref[3], preferred_element_type=jnp.float32)

    # Gating: y * sigmoid(Linear(y))   (matches the torch forward).
    gate = jax.nn.sigmoid(
        jnp.dot(y.astype(jnp.bfloat16), wg_ref[...],
                preferred_element_type=jnp.float32) + bg_ref[...])
    h = (y * gate).astype(jnp.bfloat16)

    # FFN: Linear -> ReLU -> Linear (bf16 inputs, f32 accumulation).
    h1 = jnp.maximum(
        jnp.dot(h, w1_ref[...], preferred_element_type=jnp.float32) + b1_ref[...],
        0.0)
    out = jnp.dot(h1.astype(jnp.bfloat16), w2_ref[...],
                  preferred_element_type=jnp.float32) + b2_ref[...]

    # nn.Dropout is identity at inference.
    out_ref[0] = out.astype(out_ref.dtype)


def _proj_kernel(x_ref, w_ref, b_ref, out_ref):
    # x_ref: (1, TM, D) bf16, w_ref: (D, TV) bf16, b_ref: (1, TV) f32
    out_ref[0] = (jnp.dot(x_ref[0], w_ref[...],
                          preferred_element_type=jnp.float32)
                  + b_ref[...]).astype(out_ref.dtype)


# ---------------------------------------------------------------------------
# Wrappers
# ---------------------------------------------------------------------------
def _const_spec(shape):
    """Grid-invariant operand: constant block index, single-buffered."""
    zeros = (0,) * len(shape)
    return pl.BlockSpec(shape, lambda b, s, _z=zeros: _z,
                        pipeline_mode=pl.Buffered(1))


def _halo_gather(x, seq_tile):
    """Per-tile conv halo rows with reflect boundary handling.

    For tile s covering rows [r0, r0+TM): the reflect-padded conv window is
    rows [x[r0-1], x[r0:r0+TM], x[r0+TM], x[r0+TM+1]]; boundary tiles reflect
    to rows 1 / L-2 / L-3 (torch reflect pad left=1, right=2 for k=4 'same').
    """
    B, L, D = x.shape
    nt = L // seq_tile
    idx = np.zeros((nt, 3), dtype=np.int32)
    for s in range(nt):
        r0 = s * seq_tile
        idx[s, 0] = 1 if s == 0 else r0 - 1
        idx[s, 1] = L - 2 if s == nt - 1 else r0 + seq_tile
        idx[s, 2] = L - 3 if s == nt - 1 else r0 + seq_tile + 1
    return jnp.take(x, jnp.asarray(idx), axis=1)             # (B, nt, 3, D)


def hyena_layer(x, lp, *, seq_tile):
    B, L, D = x.shape
    FF = lp['w1'].shape[1]
    nt = L // seq_tile

    halos = _halo_gather(x, seq_tile)

    flops = 2 * B * L * (4 * D * D + D * D + 2 * D * FF)
    bytes_accessed = int(
        x.size * 2 + halos.size * 2                          # bf16 activations in
        + (4 * D * D + D * D + 2 * D * FF) * 2               # bf16 weights (1x)
        + (3 * D + FF) * 4                                   # f32 biases
        + B * L * D * 2)                                     # bf16 activations out
    cost = pl.CostEstimate(flops=int(flops), transcendentals=int(B * L * D),
                           bytes_accessed=bytes_accessed)

    grid_spec = pltpu.PrefetchScalarGridSpec(
        num_scalar_prefetch=0,
        grid=(B, nt),
        in_specs=[
            pl.BlockSpec((1, seq_tile, D), lambda b, s: (b, s, 0)),
            pl.BlockSpec((1, 1, 3, D),     lambda b, s: (b, s, 0, 0)),
            _const_spec((4, D, D)),   # conv weight (K, C_in, C_out)
            _const_spec((1, D)),      # conv bias
            _const_spec((D, D)),      # gate weight
            _const_spec((1, D)),      # gate bias
            _const_spec((D, FF)),     # ffn w1
            _const_spec((1, FF)),     # ffn b1
            _const_spec((FF, D)),     # ffn w2
            _const_spec((1, D)),      # ffn b2
        ],
        out_specs=pl.BlockSpec((1, seq_tile, D), lambda b, s: (b, s, 0)),
    )
    return pl.pallas_call(
        _layer_kernel,
        out_shape=jax.ShapeDtypeStruct((B, L, D), jnp.bfloat16),
        grid_spec=grid_spec,
        compiler_params=pltpu.CompilerParams(
            dimension_semantics=("parallel", "parallel"),
            vmem_limit_bytes=_vmem_limit_bytes()),
        cost_estimate=cost,
        input_output_aliases={0: 0},   # tile fully read before written; halos pre-gathered
    )(x, halos, lp['wc'], lp['bc'], lp['wg'], lp['bg'],
      lp['w1'], lp['b1'], lp['w2'], lp['b2'])


def output_proj(x, w, b, *, seq_tile, vocab_tile, out_dtype=jnp.bfloat16):
    B, L, D = x.shape
    V = w.shape[1]
    nt, nv = L // seq_tile, V // vocab_tile
    out_bytes = jnp.dtype(out_dtype).itemsize

    # HBM-bound: weight re-streamed B*nt times with v innermost — larger
    # seq_tile / vocab_tile and bf16 logits shrink the dominant HBM terms.
    cost = pl.CostEstimate(
        flops=int(2 * B * L * D * V), transcendentals=0,
        bytes_accessed=int(x.size * 2 + B * nt * w.size * 2 + b.size * 4
                           + B * L * V * out_bytes))

    grid_spec = pltpu.PrefetchScalarGridSpec(
        num_scalar_prefetch=0,
        grid=(B, nt, nv),
        in_specs=[
            pl.BlockSpec((1, seq_tile, D), lambda b, s, v: (b, s, 0)),
            pl.BlockSpec((D, vocab_tile),  lambda b, s, v: (0, v)),
            pl.BlockSpec((1, vocab_tile),  lambda b, s, v: (0, v)),
        ],
        out_specs=pl.BlockSpec((1, seq_tile, vocab_tile),
                               lambda b, s, v: (b, s, v)),
    )
    return pl.pallas_call(
        _proj_kernel,
        out_shape=jax.ShapeDtypeStruct((B, L, V), out_dtype),
        grid_spec=grid_spec,
        compiler_params=pltpu.CompilerParams(
            dimension_semantics=("parallel", "parallel", "parallel"),
            vmem_limit_bytes=_vmem_limit_bytes()),
        cost_estimate=cost,
    )(x, w, b)


def hyena_forward(tokens, params, *, seq_tile=None, vocab_tile=256,
                  logits_dtype=jnp.bfloat16):
    # Embedding gather (plain-JAX glue).
    x = jnp.take(params['emb'], tokens, axis=0)              # (B, L, D) bf16
    B, L, D = x.shape
    V = params['w_out'].shape[1]
    FF = params['layers'][0]['w1'].shape[1]
    if seq_tile is None:
        seq_tile = _pick_seq_tile(L, D, FF)
    vocab_tile = min(vocab_tile, V)
    assert L >= 4 and L % seq_tile == 0
    assert seq_tile % 16 == 0            # bf16 packs 2 rows per sublane
    assert D % 128 == 0 and FF % 128 == 0
    assert V % vocab_tile == 0 and vocab_tile % 128 == 0
    for lp in params['layers']:
        x = hyena_layer(x, lp, seq_tile=seq_tile)
    return output_proj(x, params['w_out'], params['b_out'],
                       seq_tile=seq_tile, vocab_tile=vocab_tile,
                       out_dtype=logits_dtype)


# ---------------------------------------------------------------------------
# Deterministic parameter init (synthetic; shapes from the nn.Module)
# bf16 weights (MXU path), f32 biases.
# ---------------------------------------------------------------------------
def init_params(key, vocab, d_model, n_layers, ff):
    keys = jax.random.split(key, n_layers + 2)
    params = {'emb': (jax.random.normal(keys[0], (vocab, d_model)) * 0.1
                      ).astype(jnp.bfloat16)}
    layers = []
    for i in range(n_layers):
        k = jax.random.split(keys[1 + i], 8)
        layers.append(dict(
            # torch conv weight (C_out, C_in, K) stored here as (K, C_in, C_out)
            wc=(jax.random.normal(k[0], (4, d_model, d_model)) * 0.1).astype(jnp.bfloat16),
            bc=jax.random.normal(k[1], (1, d_model)) * 0.1,
            wg=(jax.random.normal(k[2], (d_model, d_model)) * 0.1).astype(jnp.bfloat16),
            bg=jax.random.normal(k[3], (1, d_model)) * 0.1,
            w1=(jax.random.normal(k[4], (d_model, ff)) * 0.1).astype(jnp.bfloat16),
            b1=jax.random.normal(k[5], (1, ff)) * 0.1,
            w2=(jax.random.normal(k[6], (ff, d_model)) * 0.1).astype(jnp.bfloat16),
            b2=jax.random.normal(k[7], (1, d_model)) * 0.1,
        ))
    params['layers'] = layers
    ko = jax.random.split(keys[-1], 2)
    params['w_out'] = (jax.random.normal(ko[0], (d_model, vocab)) * 0.1).astype(jnp.bfloat16)
    params['b_out'] = jax.random.normal(ko[1], (1, vocab)) * 0.1
    return params


# ---------------------------------------------------------------------------
# Pure-JAX reference (independent conv via lax.conv) with the SAME bf16
# cast points / f32 accumulation as the kernel, for correctness check.
# ---------------------------------------------------------------------------
def reference_forward(tokens, params):
    x = jnp.take(params['emb'], tokens, axis=0)              # bf16
    for lp in params['layers']:
        # torch 'same' padding for k=4: total=3 -> left=1, right=2; reflect mode.
        xpad = jnp.pad(x, ((0, 0), (1, 2), (0, 0)), mode='reflect')
        xp = jnp.transpose(xpad, (0, 2, 1))                  # (B, D, L+3)
        w = jnp.transpose(lp['wc'], (2, 1, 0))               # (C_out, C_in, K)
        y = lax.conv_general_dilated(
            xp, w, window_strides=(1,), padding='VALID',
            dimension_numbers=('NCH', 'OIH', 'NCH'),
            preferred_element_type=jnp.float32)
        y = jnp.transpose(y, (0, 2, 1)) + lp['bc']           # (B, L, D) f32
        gate = jax.nn.sigmoid(
            jnp.einsum('bld,de->ble', y.astype(jnp.bfloat16), lp['wg'],
                       preferred_element_type=jnp.float32) + lp['bg'])
        h = (y * gate).astype(jnp.bfloat16)
        h1 = jnp.maximum(
            jnp.einsum('bld,df->blf', h, lp['w1'],
                       preferred_element_type=jnp.float32) + lp['b1'], 0.0)
        x = (jnp.einsum('blf,fd->bld', h1.astype(jnp.bfloat16), lp['w2'],
                        preferred_element_type=jnp.float32) + lp['b2']
             ).astype(jnp.bfloat16)
    return (jnp.einsum('bld,dv->blv', x, params['w_out'],
                       preferred_element_type=jnp.float32) + params['b_out'])


if __name__ == "__main__":
    # Lane-dense 128-multiple sizes; 3 sequence tiles so the first / interior /
    # last halo paths are all exercised; B*nt = 6 parallel grid steps keeps
    # both v7x TensorCores fed.
    vocab_size, d_model, n_layers, dim_feedforward = 256, 128, 2, 256
    batch, seq_len = 2, 768
    seq_tile, vocab_tile = 256, 256

    key = jax.random.PRNGKey(0)
    pkey, tkey = jax.random.split(key)
    params = init_params(pkey, vocab_size, d_model, n_layers, dim_feedforward)
    tokens = jax.random.randint(tkey, (batch, seq_len), 0, vocab_size,
                                dtype=jnp.int32)

    fwd = jax.jit(functools.partial(hyena_forward,
                                    seq_tile=seq_tile, vocab_tile=vocab_tile))
    out = jax.block_until_ready(fwd(tokens, params))
    assert out.shape == (batch, seq_len, vocab_size)
    assert out.dtype == jnp.bfloat16

    ref = reference_forward(tokens, params)
    np.testing.assert_allclose(np.asarray(out.astype(jnp.float32)),
                               np.asarray(ref), rtol=2e-2, atol=2e-2)
    print("KERNEL_OK")
</pallas_src>

<mosaic_0001>
module attributes {stable_mosaic.version = 11 : i64} {
  func.func @_layer_kernel(%arg0: i32, %arg1: i32, %arg2: memref<1x256x128xbf16, #tpu.memory_space<vmem>>, %arg3: memref<1x1x3x128xbf16, #tpu.memory_space<vmem>>, %arg4: memref<4x128x128xbf16, #tpu.memory_space<vmem>>, %arg5: memref<1x128xf32, #tpu.memory_space<vmem>>, %arg6: memref<128x128xbf16, #tpu.memory_space<vmem>>, %arg7: memref<1x128xf32, #tpu.memory_space<vmem>>, %arg8: memref<128x256xbf16, #tpu.memory_space<vmem>>, %arg9: memref<1x256xf32, #tpu.memory_space<vmem>>, %arg10: memref<256x128xbf16, #tpu.memory_space<vmem>>, %arg11: memref<1x128xf32, #tpu.memory_space<vmem>>, %arg12: memref<1x256x128xbf16, #tpu.memory_space<vmem>>) attributes {dimension_semantics = [#tpu.dimension_semantics<parallel>, #tpu.dimension_semantics<parallel>], iteration_bounds = array<i64: 2, 3>, scalar_prefetch = 0 : i64, scratch_operands = 0 : i64, tpu.core_type = #tpu.core_type<tc>, window_params = [{transform_indices = @transform_0, window_bounds = array<i64: 1, 256, 128>}, {transform_indices = @transform_1, window_bounds = array<i64: 1, 1, 3, 128>}, {pipeline_mode = #tpu.pipeline_mode<synchronous>, transform_indices = @transform_2, window_bounds = array<i64: 4, 128, 128>}, {pipeline_mode = #tpu.pipeline_mode<synchronous>, transform_indices = @transform_3, window_bounds = array<i64: 1, 128>}, {pipeline_mode = #tpu.pipeline_mode<synchronous>, transform_indices = @transform_4, window_bounds = array<i64: 128, 128>}, {pipeline_mode = #tpu.pipeline_mode<synchronous>, transform_indices = @transform_5, window_bounds = array<i64: 1, 128>}, {pipeline_mode = #tpu.pipeline_mode<synchronous>, transform_indices = @transform_6, window_bounds = array<i64: 128, 256>}, {pipeline_mode = #tpu.pipeline_mode<synchronous>, transform_indices = @transform_7, window_bounds = array<i64: 1, 256>}, {pipeline_mode = #tpu.pipeline_mode<synchronous>, transform_indices = @transform_8, window_bounds = array<i64: 256, 128>}, {pipeline_mode = #tpu.pipeline_mode<synchronous>, transform_indices = @transform_9, window_bounds = array<i64: 1, 128>}, {transform_indices = @transform_10, window_bounds = array<i64: 1, 256, 128>}]} {
    %c0 = arith.constant 0 : index
    %c0_0 = arith.constant 0 : index
    %c0_1 = arith.constant 0 : index
    %0 = vector.load %arg2[%c0, %c0_0, %c0_1] : memref<1x256x128xbf16, #tpu.memory_space<vmem>>, vector<1x256x128xbf16>
    %1 = vector.shape_cast %0 : vector<1x256x128xbf16> to vector<256x128xbf16>
    %c0_2 = arith.constant 0 : index
    %c0_3 = arith.constant 0 : index
    %c0_4 = arith.constant 0 : index
    %c0_5 = arith.constant 0 : index
    %2 = vector.load %arg3[%c0_2, %c0_3, %c0_4, %c0_5] : memref<1x1x3x128xbf16, #tpu.memory_space<vmem>>, vector<1x1x3x128xbf16>
    %3 = vector.shape_cast %2 : vector<1x1x3x128xbf16> to vector<3x128xbf16>
    %4 = vector.extract_strided_slice %3 {offsets = [0, 0], sizes = [1, 128], strides = [1, 1]} : vector<3x128xbf16> to vector<1x128xbf16>
    %5 = vector.extract_strided_slice %3 {offsets = [1, 0], sizes = [2, 128], strides = [1, 1]} : vector<3x128xbf16> to vector<2x128xbf16>
    %6 = tpu.concatenate %4, %1, %5 in 0 : vector<1x128xbf16>, vector<256x128xbf16>, vector<2x128xbf16> -> vector<259x128xbf16>
    %c0_6 = arith.constant 0 : index
    %c0_7 = arith.constant 0 : index
    %7 = vector.load %arg5[%c0_6, %c0_7] : memref<1x128xf32, #tpu.memory_space<vmem>>, vector<1x128xf32>
    %8 = vector.extract_strided_slice %6 {offsets = [0, 0], sizes = [256, 128], strides = [1, 1]} : vector<259x128xbf16> to vector<256x128xbf16>
    %c0_8 = arith.constant 0 : index
    %c0_9 = arith.constant 0 : index
    %c0_10 = arith.constant 0 : index
    %9 = vector.load %arg4[%c0_8, %c0_9, %c0_10] : memref<4x128x128xbf16, #tpu.memory_space<vmem>>, vector<1x128x128xbf16>
    %10 = vector.shape_cast %9 : vector<1x128x128xbf16> to vector<128x128xbf16>
    %cst = arith.constant dense<0.000000e+00> : vector<256x128xf32>
    %11 = tpu.matmul %8, %10, %cst {dimension_numbers = #tpu.dot_dimension_numbers<[1], [0], [0], [1], [0, 0, 1, 1], [], []>} : vector<256x128xbf16>, vector<128x128xbf16>, vector<256x128xf32> -> vector<256x128xf32>
    %12 = vector.broadcast %7 : vector<1x128xf32> to vector<256x128xf32>
    %13 = arith.addf %12, %11 : vector<256x128xf32>
    %14 = vector.extract_strided_slice %6 {offsets = [1, 0], sizes = [256, 128], strides = [1, 1]} : vector<259x128xbf16> to vector<256x128xbf16>
    %c1 = arith.constant 1 : index
    %c0_11 = arith.constant 0 : index
    %c0_12 = arith.constant 0 : index
    %15 = vector.load %arg4[%c1, %c0_11, %c0_12] : memref<4x128x128xbf16, #tpu.memory_space<vmem>>, vector<1x128x128xbf16>
    %16 = vector.shape_cast %15 : vector<1x128x128xbf16> to vector<128x128xbf16>
    %cst_13 = arith.constant dense<0.000000e+00> : vector<256x128xf32>
    %17 = tpu.matmul %14, %16, %cst_13 {dimension_numbers = #tpu.dot_dimension_numbers<[1], [0], [0], [1], [0, 0, 1, 1], [], []>} : vector<256x128xbf16>, vector<128x128xbf16>, vector<256x128xf32> -> vector<256x128xf32>
    %18 = arith.addf %13, %17 : vector<256x128xf32>
    %19 = vector.extract_strided_slice %6 {offsets = [2, 0], sizes = [256, 128], strides = [1, 1]} : vector<259x128xbf16> to vector<256x128xbf16>
    %c2 = arith.constant 2 : index
    %c0_14 = arith.constant 0 : index
    %c0_15 = arith.constant 0 : index
    %20 = vector.load %arg4[%c2, %c0_14, %c0_15] : memref<4x128x128xbf16, #tpu.memory_space<vmem>>, vector<1x128x128xbf16>
    %21 = vector.shape_cast %20 : vector<1x128x128xbf16> to vector<128x128xbf16>
    %cst_16 = arith.constant dense<0.000000e+00> : vector<256x128xf32>
    %22 = tpu.matmul %19, %21, %cst_16 {dimension_numbers = #tpu.dot_dimension_numbers<[1], [0], [0], [1], [0, 0, 1, 1], [], []>} : vector<256x128xbf16>, vector<128x128xbf16>, vector<256x128xf32> -> vector<256x128xf32>
    %23 = arith.addf %18, %22 : vector<256x128xf32>
    %24 = vector.extract_strided_slice %6 {offsets = [3, 0], sizes = [256, 128], strides = [1, 1]} : vector<259x128xbf16> to vector<256x128xbf16>
    %c3 = arith.constant 3 : index
    %c0_17 = arith.constant 0 : index
    %c0_18 = arith.constant 0 : index
    %25 = vector.load %arg4[%c3, %c0_17, %c0_18] : memref<4x128x128xbf16, #tpu.memory_space<vmem>>, vector<1x128x128xbf16>
    %26 = vector.shape_cast %25 : vector<1x128x128xbf16> to vector<128x128xbf16>
    %cst_19 = arith.constant dense<0.000000e+00> : vector<256x128xf32>
    %27 = tpu.matmul %24, %26, %cst_19 {dimension_numbers = #tpu.dot_dimension_numbers<[1], [0], [0], [1], [0, 0, 1, 1], [], []>} : vector<256x128xbf16>, vector<128x128xbf16>, vector<256x128xf32> -> vector<256x128xf32>
    %28 = arith.addf %23, %27 : vector<256x128xf32>
    %29 = arith.truncf %28 : vector<256x128xf32> to vector<256x128xbf16>
    %c0_20 = arith.constant 0 : index
    %c0_21 = arith.constant 0 : index
    %30 = vector.load %arg6[%c0_20, %c0_21] : memref<128x128xbf16, #tpu.memory_space<vmem>>, vector<128x128xbf16>
    %cst_22 = arith.constant dense<0.000000e+00> : vector<256x128xf32>
    %31 = tpu.matmul %29, %30, %cst_22 {dimension_numbers = #tpu.dot_dimension_numbers<[1], [0], [0], [1], [0, 0, 1, 1], [], []>} : vector<256x128xbf16>, vector<128x128xbf16>, vector<256x128xf32> -> vector<256x128xf32>
    %c0_23 = arith.constant 0 : index
    %c0_24 = arith.constant 0 : index
    %32 = vector.load %arg7[%c0_23, %c0_24] : memref<1x128xf32, #tpu.memory_space<vmem>>, vector<1x128xf32>
    %33 = vector.broadcast %32 : vector<1x128xf32> to vector<256x128xf32>
    %34 = arith.addf %31, %33 : vector<256x128xf32>
    %35 = arith.negf %34 : vector<256x128xf32>
    %36 = math.exp %35 : vector<256x128xf32>
    %cst_25 = arith.constant 1.000000e+00 : f32
    %37 = vector.broadcast %cst_25 : f32 to vector<256x128xf32>
    %38 = arith.addf %37, %36 : vector<256x128xf32>
    %39 = arith.divf %37, %38 : vector<256x128xf32>
    %40 = arith.mulf %28, %39 : vector<256x128xf32>
    %41 = arith.truncf %40 : vector<256x128xf32> to vector<256x128xbf16>
    %c0_26 = arith.constant 0 : index
    %c0_27 = arith.constant 0 : index
    %42 = vector.load %arg8[%c0_26, %c0_27] : memref<128x256xbf16, #tpu.memory_space<vmem>>, vector<128x256xbf16>
    %cst_28 = arith.constant dense<0.000000e+00> : vector<256x256xf32>
    %43 = tpu.matmul %41, %42, %cst_28 {dimension_numbers = #tpu.dot_dimension_numbers<[1], [0], [0], [1], [0, 0, 1, 1], [], []>} : vector<256x128xbf16>, vector<128x256xbf16>, vector<256x256xf32> -> vector<256x256xf32>
    %c0_29 = arith.constant 0 : index
    %c0_30 = arith.constant 0 : index
    %44 = vector.load %arg9[%c0_29, %c0_30] : memref<1x256xf32, #tpu.memory_space<vmem>>, vector<1x256xf32>
    %45 = vector.broadcast %44 : vector<1x256xf32> to vector<256x256xf32>
    %46 = arith.addf %43, %45 : vector<256x256xf32>
    %cst_31 = arith.constant 0.000000e+00 : f32
    %47 = vector.broadcast %cst_31 : f32 to vector<256x256xf32>
    %48 = arith.maximumf %46, %47 : vector<256x256xf32>
    %49 = arith.truncf %48 : vector<256x256xf32> to vector<256x256xbf16>
    %c0_32 = arith.constant 0 : index
    %c0_33 = arith.constant 0 : index
    %50 = vector.load %arg10[%c0_32, %c0_33] : memref<256x128xbf16, #tpu.memory_space<vmem>>, vector<256x128xbf16>
    %cst_34 = arith.constant dense<0.000000e+00> : vector<256x128xf32>
    %51 = tpu.matmul %49, %50, %cst_34 {dimension_numbers = #tpu.dot_dimension_numbers<[1], [0], [0], [1], [0, 0, 1, 1], [], []>} : vector<256x256xbf16>, vector<256x128xbf16>, vector<256x128xf32> -> vector<256x128xf32>
    %c0_35 = arith.constant 0 : index
    %c0_36 = arith.constant 0 : index
    %52 = vector.load %arg11[%c0_35, %c0_36] : memref<1x128xf32, #tpu.memory_space<vmem>>, vector<1x128xf32>
    %53 = vector.broadcast %52 : vector<1x128xf32> to vector<256x128xf32>
    %54 = arith.addf %51, %53 : vector<256x128xf32>
    %55 = arith.truncf %54 : vector<256x128xf32> to vector<256x128xbf16>
    %c0_37 = arith.constant 0 : index
    %c0_38 = arith.constant 0 : index
    %c0_39 = arith.constant 0 : index
    %56 = vector.load %arg12[%c0_37, %c0_38, %c0_39] : memref<1x256x128xbf16, #tpu.memory_space<vmem>>, vector<1x256x128xbf16>
    %57 = vector.shape_cast %56 : vector<1x256x128xbf16> to vector<256x128xbf16>
    %58 = vector.shape_cast %55 : vector<256x128xbf16> to vector<1x256x128xbf16>
    tpu.vector_store %arg12[%c0_37, %c0_38, %c0_39], %58 {strides = array<i32>} : memref<1x256x128xbf16, #tpu.memory_space<vmem>>, vector<1x256x128xbf16>,
    return
  }
  func.func @transform_0(%arg0: i32, %arg1: i32) -> (i32, i32, i32) {
    %c0_i32 = arith.constant 0 : i32
    %c0_i32_0 = arith.constant 0 : i32
    return %arg0, %arg1, %c0_i32 : i32, i32, i32
  }
  func.func @transform_1(%arg0: i32, %arg1: i32) -> (i32, i32, i32, i32) {
    %c0_i32 = arith.constant 0 : i32
    %c0_i32_0 = arith.constant 0 : i32
    %c0_i32_1 = arith.constant 0 : i32
    return %arg0, %arg1, %c0_i32, %c0_i32_0 : i32, i32, i32, i32
  }
  func.func @transform_2(%arg0: i32, %arg1: i32) -> (i32, i32, i32) {
    %c0_i32 = arith.constant 0 : i32
    %c0_i32_0 = arith.constant 0 : i32
    %c0_i32_1 = arith.constant 0 : i32
    %c0_i32_2 = arith.constant 0 : i32
    return %c0_i32, %c0_i32_0, %c0_i32_1 : i32, i32, i32
  }
  func.func @transform_3(%arg0: i32, %arg1: i32) -> (i32, i32) {
    %c0_i32 = arith.constant 0 : i32
    %c0_i32_0 = arith.constant 0 : i32
    %c0_i32_1 = arith.constant 0 : i32
    return %c0_i32, %c0_i32_0 : i32, i32
  }
  func.func @transform_4(%arg0: i32, %arg1: i32) -> (i32, i32) {
    %c0_i32 = arith.constant 0 : i32
    %c0_i32_0 = arith.constant 0 : i32
    %c0_i32_1 = arith.constant 0 : i32
    return %c0_i32, %c0_i32_0 : i32, i32
  }
  func.func @transform_5(%arg0: i32, %arg1: i32) -> (i32, i32) {
    %c0_i32 = arith.constant 0 : i32
    %c0_i32_0 = arith.constant 0 : i32
    %c0_i32_1 = arith.constant 0 : i32
    return %c0_i32, %c0_i32_0 : i32, i32
  }
  func.func @transform_6(%arg0: i32, %arg1: i32) -> (i32, i32) {
    %c0_i32 = arith.constant 0 : i32
    %c0_i32_0 = arith.constant 0 : i32
    %c0_i32_1 = arith.constant 0 : i32
    return %c0_i32, %c0_i32_0 : i32, i32
  }
  func.func @transform_7(%arg0: i32, %arg1: i32) -> (i32, i32) {
    %c0_i32 = arith.constant 0 : i32
    %c0_i32_0 = arith.constant 0 : i32
    %c0_i32_1 = arith.constant 0 : i32
    return %c0_i32, %c0_i32_0 : i32, i32
  }
  func.func @transform_8(%arg0: i32, %arg1: i32) -> (i32, i32) {
    %c0_i32 = arith.constant 0 : i32
    %c0_i32_0 = arith.constant 0 : i32
    %c0_i32_1 = arith.constant 0 : i32
    return %c0_i32, %c0_i32_0 : i32, i32
  }
  func.func @transform_9(%arg0: i32, %arg1: i32) -> (i32, i32) {
    %c0_i32 = arith.constant 0 : i32
    %c0_i32_0 = arith.constant 0 : i32
    %c0_i32_1 = arith.constant 0 : i32
    return %c0_i32, %c0_i32_0 : i32, i32
  }
  func.func @transform_10(%arg0: i32, %arg1: i32) -> (i32, i32, i32) {
    %c0_i32 = arith.constant 0 : i32
    %c0_i32_0 = arith.constant 0 : i32
    return %arg0, %arg1, %c0_i32 : i32, i32, i32
  }
}

module attributes {stable_mosaic.version = 11 : i64} {
  func.func @_proj_kernel(%arg0: i32, %arg1: i32, %arg2: i32, %arg3: memref<1x256x128xbf16, #tpu.memory_space<vmem>>, %arg4: memref<128x256xbf16, #tpu.memory_space<vmem>>, %arg5: memref<1x256xf32, #tpu.memory_space<vmem>>, %arg6: memref<1x256x256xbf16, #tpu.memory_space<vmem>>) attributes {dimension_semantics = [#tpu.dimension_semantics<parallel>, #tpu.dimension_semantics<parallel>, #tpu.dimension_semantics<parallel>], iteration_bounds = array<i64: 2, 3, 1>, scalar_prefetch = 0 : i64, scratch_operands = 0 : i64, tpu.core_type = #tpu.core_type<tc>, window_params = [{transform_indices = @transform_0, window_bounds = array<i64: 1, 256, 128>}, {transform_indices = @transform_1, window_bounds = array<i64: 128, 256>}, {transform_indices = @transform_2, window_bounds = array<i64: 1, 256>}, {transform_indices = @transform_3, window_bounds = array<i64: 1, 256, 256>}]} {
    %c0 = arith.constant 0 : index
    %c0_0 = arith.constant 0 : index
    %c0_1 = arith.constant 0 : index
    %0 = vector.load %arg3[%c0, %c0_0, %c0_1] : memref<1x256x128xbf16, #tpu.memory_space<vmem>>, vector<1x256x128xbf16>
    %1 = vector.shape_cast %0 : vector<1x256x128xbf16> to vector<256x128xbf16>
    %c0_2 = arith.constant 0 : index
    %c0_3 = arith.constant 0 : index
    %2 = vector.load %arg4[%c0_2, %c0_3] : memref<128x256xbf16, #tpu.memory_space<vmem>>, vector<128x256xbf16>
    %cst = arith.constant dense<0.000000e+00> : vector<256x256xf32>
    %3 = tpu.matmul %1, %2, %cst {dimension_numbers = #tpu.dot_dimension_numbers<[1], [0], [0], [1], [0, 0, 1, 1], [], []>} : vector<256x128xbf16>, vector<128x256xbf16>, vector<256x256xf32> -> vector<256x256xf32>
    %c0_4 = arith.constant 0 : index
    %c0_5 = arith.constant 0 : index
    %4 = vector.load %arg5[%c0_4, %c0_5] : memref<1x256xf32, #tpu.memory_space<vmem>>, vector<1x256xf32>
    %5 = vector.broadcast %4 : vector<1x256xf32> to vector<256x256xf32>
    %6 = arith.addf %3, %5 : vector<256x256xf32>
    %7 = arith.truncf %6 : vector<256x256xf32> to vector<256x256xbf16>
    %c0_6 = arith.constant 0 : index
    %c0_7 = arith.constant 0 : index
    %c0_8 = arith.constant 0 : index
    %8 = vector.load %arg6[%c0_6, %c0_7, %c0_8] : memref<1x256x256xbf16, #tpu.memory_space<vmem>>, vector<1x256x256xbf16>
    %9 = vector.shape_cast %8 : vector<1x256x256xbf16> to vector<256x256xbf16>
    %10 = vector.shape_cast %7 : vector<256x256xbf16> to vector<1x256x256xbf16>
    tpu.vector_store %arg6[%c0_6, %c0_7, %c0_8], %10 {strides = array<i32>} : memref<1x256x256xbf16, #tpu.memory_space<vmem>>, vector<1x256x256xbf16>,
    return
  }
  func.func @transform_0(%arg0: i32, %arg1: i32, %arg2: i32) -> (i32, i32, i32) {
    %c0_i32 = arith.constant 0 : i32
    %c0_i32_0 = arith.constant 0 : i32
    return %arg0, %arg1, %c0_i32 : i32, i32, i32
  }
  func.func @transform_1(%arg0: i32, %arg1: i32, %arg2: i32) -> (i32, i32) {
    %c0_i32 = arith.constant 0 : i32
    %c0_i32_0 = arith.constant 0 : i32
    return %c0_i32, %arg2 : i32, i32
  }
  func.func @transform_2(%arg0: i32, %arg1: i32, %arg2: i32) -> (i32, i32) {
    %c0_i32 = arith.constant 0 : i32
    %c0_i32_0 = arith.constant 0 : i32
    return %c0_i32, %arg2 : i32, i32
  }
  func.func @transform_3(%arg0: i32, %arg1: i32, %arg2: i32) -> (i32, i32, i32) {
    %c0_i32 = arith.constant 0 : i32
    return %arg0, %arg1, %arg2 : i32, i32, i32
  }
}

</mosaic_0001>

<llo_original>
// kernel: hyena_forward.5
$region0: #{hyena_forward.5}
  #allocation0 [shape = 'u32[]', space=smem, size = 0x4, offset = 0x4, fixed_abs, tag = 'smem constant byte address 0x4 - core index']
  #allocation1 [shape = 'u32[72,128]{1,0:T(1,128)}', space=vmem, size = 0x9000, scoped, tag = 'internal scratch']
  %s0 = inlined_call_operand.vmem [shape: bf16[2,768,128], index: 0, kind: input, shape index: {}]
  %s1 = inlined_call_operand.vmem [shape: bf16[128,256], index: 1, kind: input, shape index: {}]
  %s2 = inlined_call_operand.vmem [shape: f32[1,256], index: 2, kind: input, shape index: {}]
  %s3 = inlined_call_operand.hbm [shape: bf16[2,768,256], index: 3, kind: output, shape index: {}]
  %s4 = sld [smem:[#allocation0]]
  $region45: #{hyena_forward.5} parent=0
    _
  %s6 = ssub.s32 1, %s4
  %s7 = scalar_select 0, %s6, %s4
  $region1: #{hyena_forward.5} parent=0
    #allocation2 [shape = 'u8[262144]{0}', space=vmem, size = 0x40000, scoped, tag = 'output window, operand 0']
    #allocation3 [shape = 's32[2]{0}', space=sflag, size = 0x8, scoped, tag = 'scoped memory for hyena_forward.5']
    %8 = vsyncpa [#allocation3], 0
    %s9 = scalar_lea.sflag [#allocation3], 1
    %10 = vsyncpa %s9, 0
    loop: start=0, step=1, limit=8
    $region2: #{hyena_forward.5} parent=1 // loop_pre_header
      _
    $region3: #{hyena_forward.5} parent=1 // loop_header
      %s12 = sphi 0, %s16
      %p13 = scmp.ge.s32.totalorder %s12, 8
      %s19 = sphi 0, %s38
      %s20 = sphi 0, %s34
      %s21 = sphi 0, %s30
      %s22 = sphi 0, %s19
      %s23 = sphi 0, %s20
      %s24 = sphi 0, %s21
      %s25 = sphi 0, %s22
      %s26 = sphi 0, %s23
      %s27 = sphi 0, %s24
      %s43 = sphi 0, %s45
      %s46 = sphi 0, %s43
      %s47 = sphi 0, %s46
      %s63 = sphi 0, %s47
      %s69 = sphi 0, %s71
      %s72 = sphi 0, %s69
      %s73 = sphi 0, %s72
      %s89 = sphi 0, %s73
      %s95 = sphi 0, %s97
      %s98 = sphi 0, %s95
      %s99 = sphi 0, %s98
      %s115 = sphi 0, %s99
      %s125 = sphi 0, %s127
      %s128 = sphi 0, %s125
      %s129 = sphi 0, %s128
      %s145 = sphi 0, %s129
    $region4: #{hyena_forward.5} parent=1 // loop_header_branch
      %15 = sbr.rel (%p13) target = $region8
    $region5: #{hyena_forward.5} parent=1 // loop_body
      %s17 = ssub.s32 %s12, 1
      %s18 = ssub.s32 %s12, 2
      %s28 = sadd.s32 1, %s21
      %p29 = scmp.ge.s32.totalorder %s28, 1
      %s30 = scalar_select %p29, 0, %s28
      %s31 = sadd.s32 1, %s20
      %s32 = scalar_select %p29, %s31, %s20
      %p33 = scmp.ge.s32.totalorder %s32, 3
      %s34 = scalar_select %p33, 0, %s32
      %s35 = sadd.s32 1, %s19
      %s36 = scalar_select %p33, %s35, %s19
      %p37 = scmp.ge.s32.totalorder %s36, 2
      %s38 = scalar_select %p37, 0, %s36
      %s39 = ssub.s32 %s19, %s38
      %s40 = ssub.s32 %s20, %s34
      %s41 = sor.u32 %s39, %s40
      %p42 = scmp.eq.s32.totalorder %s41, 0
      %s44 = sadd.s32 %s43, 1
      %s45 = scalar_select %p42, %s43, %s44
      %p48 = pneg %p42
      %p49 = scmp.eq.s32.totalorder %s12, 5
      %p50 = por %p48, %p49
      %p51 = scmp.ne.s32.totalorder %s43, %s46
      %p52 = scmp.eq.s32.totalorder %s12, 0
      %p53 = por %p51, %p52
      %p54 = scmp.ne.s32.totalorder %s43, %s46
      %p55 = scmp.eq.s32.totalorder %s17, 5
      %p56 = por %p54, %p55
      %p57 = scmp.ne.s32.totalorder %s46, %s47
      %p58 = scmp.eq.s32.totalorder %s17, 0
      %p59 = por %p57, %p58
      %p60 = scmp.ne.s32.totalorder %s46, %s47
      %p61 = scmp.eq.s32.totalorder %s18, 5
      %p62 = por %p60, %p61
      %p64 = scmp.ne.s32.totalorder %s47, %s63
      %p65 = scmp.eq.s32.totalorder %s18, 0
      %p66 = por %p64, %p65
      %s67 = ssub.s32 %s21, %s30
      %p68 = scmp.eq.s32.totalorder %s67, 0
      %s70 = sadd.s32 %s69, 1
      %s71 = scalar_select %p68, %s69, %s70
      %p74 = pneg %p68
      %p75 = scmp.eq.s32.totalorder %s12, 5
      %p76 = por %p74, %p75
      %p77 = scmp.ne.s32.totalorder %s69, %s72
      %p78 = scmp.eq.s32.totalorder %s12, 0
      %p79 = por %p77, %p78
      %p80 = scmp.ne.s32.totalorder %s69, %s72
      %p81 = scmp.eq.s32.totalorder %s17, 5
      %p82 = por %p80, %p81
      %p83 = scmp.ne.s32.totalorder %s72, %s73
      %p84 = scmp.eq.s32.totalorder %s17, 0
      %p85 = por %p83, %p84
      %p86 = scmp.ne.s32.totalorder %s72, %s73
      %p87 = scmp.eq.s32.totalorder %s18, 5
      %p88 = por %p86, %p87
      %p90 = scmp.ne.s32.totalorder %s73, %s89
      %p91 = scmp.eq.s32.totalorder %s18, 0
      %p92 = por %p90, %p91
      %s93 = ssub.s32 %s21, %s30
      %p94 = scmp.eq.s32.totalorder %s93, 0
      %s96 = sadd.s32 %s95, 1
      %s97 = scalar_select %p94, %s95, %s96
      %p100 = pneg %p94
      %p101 = scmp.eq.s32.totalorder %s12, 5
      %p102 = por %p100, %p101
      %p103 = scmp.ne.s32.totalorder %s95, %s98
      %p104 = scmp.eq.s32.totalorder %s12, 0
      %p105 = por %p103, %p104
      %p106 = scmp.ne.s32.totalorder %s95, %s98
      %p107 = scmp.eq.s32.totalorder %s17, 5
      %p108 = por %p106, %p107
      %p109 = scmp.ne.s32.totalorder %s98, %s99
      %p110 = scmp.eq.s32.totalorder %s17, 0
      %p111 = por %p109, %p110
      %p112 = scmp.ne.s32.totalorder %s98, %s99
      %p113 = scmp.eq.s32.totalorder %s18, 5
      %p114 = por %p112, %p113
      %p116 = scmp.ne.s32.totalorder %s99, %s115
      %p117 = scmp.eq.s32.totalorder %s18, 0
      %p118 = por %p116, %p117
      %s119 = ssub.s32 %s19, %s38
      %s120 = ssub.s32 %s20, %s34
      %s121 = sor.u32 %s119, %s120
      %s122 = ssub.s32 %s21, %s30
      %s123 = sor.u32 %s121, %s122
      %p124 = scmp.eq.s32.totalorder %s123, 0
      %s126 = sadd.s32 %s125, 1
      %s127 = scalar_select %p124, %s125, %s126
      %p130 = pneg %p124
      %p131 = scmp.eq.s32.totalorder %s12, 5
      %p132 = por %p130, %p131
      %p133 = scmp.ne.s32.totalorder %s125, %s128
      %p134 = scmp.eq.s32.totalorder %s12, 0
      %p135 = por %p133, %p134
      %p136 = scmp.ne.s32.totalorder %s125, %s128
      %p137 = scmp.eq.s32.totalorder %s17, 5
      %p138 = por %p136, %p137
      %p139 = scmp.ne.s32.totalorder %s128, %s129
      %p140 = scmp.eq.s32.totalorder %s17, 0
      %p141 = por %p139, %p140
      %p142 = scmp.ne.s32.totalorder %s128, %s129
      %p143 = scmp.eq.s32.totalorder %s18, 5
      %p144 = por %p142, %p143
      %p146 = scmp.ne.s32.totalorder %s129, %s145
      %p147 = scmp.eq.s32.totalorder %s18, 0
      %p148 = por %p146, %p147
      %p149 = scmp.le.s32.totalorder 1, %s12
      %p150 = scmp.lt.s32.totalorder %s12, 7
      %p151 = pnand %p149, %p150
      %p152 = pneg %p151
      // Predicated region
      $region9: #{hyena_forward.5} parent=5 // pred_check
        _
      $region10: #{hyena_forward.5} parent=5 // pred_check_branch
        %154 = sbr.rel (%p151) target = $region12
      $region11: #{hyena_forward.5} parent=5 // pred_region
        %s155 = ssub.s32 %s12, 1
        // Predicated region
        $region13: #{hyena_forward.5} parent=11 // pred_check
          %p156 = pneg %p85
        $region14: #{hyena_forward.5} parent=11 // pred_check_branch
          %158 = sbr.rel (%p156) target = $region16
        $region15: #{hyena_forward.5} parent=11 // pred_region
          %s159 = smul.u32 2, %s24
          %p160 = scmp.lt.s32.totalorder %s159, 1
          %s161 = scalar_select %p160, %s159, 1
          %s162 = smul.addr %s161, 4
          %s163 = scalar_lea.vmem %s1, %s162
          %s164 = smul.u32 2, %s24
        $region16: #{hyena_forward.5} parent=11 // pred_fallthru
          _
        // Predicated region
        $region17: #{hyena_forward.5} parent=11 // pred_check
          %p165 = pneg %p111
        $region18: #{hyena_forward.5} parent=11 // pred_check_branch
          %167 = sbr.rel (%p165) target = $region20
        $region19: #{hyena_forward.5} parent=11 // pred_region
          %s168 = smul.u32 2, %s24
          %p169 = scmp.lt.s32.totalorder %s168, 1
          %s170 = scalar_select %p169, %s168, 1
          %s171 = scalar_lea.vmem %s2, %s170
          %s172 = smul.u32 2, %s24
        $region20: #{hyena_forward.5} parent=11 // pred_fallthru
          _
      $region12: #{hyena_forward.5} parent=5 // pred_fallthru
        _
      %p173 = scmp.lt.s32.totalorder %s12, 6
      // Predicated region
      $region21: #{hyena_forward.5} parent=5 // pred_check
        %p174 = pneg %p173
      $region22: #{hyena_forward.5} parent=5 // pred_check_branch
        %176 = sbr.rel (%p174) target = $region24
      $region23: #{hyena_forward.5} parent=5 // pred_region
        // Predicated region
        $region25: #{hyena_forward.5} parent=23 // pred_check
          %p177 = pneg %p53
        $region26: #{hyena_forward.5} parent=23 // pred_check_branch
          %179 = sbr.rel (%p177) target = $region28
        $region27: #{hyena_forward.5} parent=23 // pred_region
          %s180 = smul.u32 32, %s20
          %p181 = scmp.lt.s32.totalorder %s19, 1
          %s182 = scalar_select %p181, %s19, 1
          %p183 = scmp.lt.s32.totalorder %s180, 95
          %s184 = scalar_select %p183, %s180, 95
          %s185 = smul.addr %s182, 96
          %s186 = sadd.s32 %s184, %s185
          %s187 = smul.addr %s186, 4
          %s188 = scalar_lea.vmem %s0, %s187
          %s189 = smul.u32 32, %s20
        $region28: #{hyena_forward.5} parent=23 // pred_fallthru
          _
      $region24: #{hyena_forward.5} parent=5 // pred_fallthru
        _
      %p190 = scmp.le.s32.totalorder 1, %s12
      %p191 = scmp.lt.s32.totalorder %s12, 7
      %p192 = pnand %p190, %p191
      %p193 = pneg %p192
      // Predicated region
      $region29: #{hyena_forward.5} parent=5 // pred_check
        _
      $region30: #{hyena_forward.5} parent=5 // pred_check_branch
        %195 = sbr.rel (%p192) target = $region32
      $region31: #{hyena_forward.5} parent=5 // pred_region
        %s196 = ssub.s32 %s12, 1
        %s197 = smul.u32 32, %s23
        %p198 = scmp.lt.s32.totalorder %s22, 1
        %s199 = scalar_select %p198, %s22, 1
        %p200 = scmp.lt.s32.totalorder %s197, 95
        %s201 = scalar_select %p200, %s197, 95
        %s202 = smul.addr %s199, 96
        %s203 = sadd.s32 %s201, %s202
        %s204 = smul.addr %s203, 4
        %s205 = scalar_lea.vmem %s0, %s204
        %p206 = pneg %p59
        %p207 = pneg %p56
        %s208 = smul.u32 2, %s24
        %p209 = scmp.lt.s32.totalorder %s208, 1
        %s210 = scalar_select %p209, %s208, 1
        %s211 = smul.addr %s210, 4
        %s212 = scalar_lea.vmem %s1, %s211
        %p213 = pneg %p85
        %p214 = pneg %p82
        %s215 = smul.u32 2, %s24
        %p216 = scmp.lt.s32.totalorder %s215, 1
        %s217 = scalar_select %p216, %s215, 1
        %s218 = scalar_lea.vmem %s2, %s217
        %p219 = pneg %p111
        %p220 = pneg %p108
        %p221 = pneg %p141
        %p222 = pneg %p138
        %s223 = sand.u32 %s128, 1
        %s224 = scalar_lea.sflag [#allocation3], %s223
        %s225 = sand.u32 %s128, 1
        %s226 = smul.addr %s225, 256
        %s227 = scalar_lea.vmem [#allocation2], %s226
        %s228 = smul.u32 32, %s23
        %p229 = scmp.lt.s32.totalorder %s22, 1
        %s230 = scalar_select %p229, %s22, 1
        %p231 = scmp.lt.s32.totalorder %s228, 95
        %s232 = scalar_select %p231, %s228, 95
        %s233 = smul.addr %s230, 96
        %s234 = sadd.s32 %s232, %s233
        %s235 = smul.addr %s234, 4
        %s236 = scalar_lea.vmem %s0, %s235
        %s237 = smul.u32 32, %s23
        %s238 = smul.u32 2, %s24
        %p239 = scmp.lt.s32.totalorder %s238, 1
        %s240 = scalar_select %p239, %s238, 1
        %s241 = smul.addr %s240, 4
        %s242 = scalar_lea.vmem %s1, %s241
        %s243 = smul.u32 2, %s24
        %s244 = smul.u32 2, %s24
        %p245 = scmp.lt.s32.totalorder %s244, 1
        %s246 = scalar_select %p245, %s244, 1
        %s247 = scalar_lea.vmem %s2, %s246
        %s248 = smul.u32 2, %s24
        %s249 = smul.u32 32, %s23
        %s250 = smul.u32 2, %s24
        %v251 = vld [vmem:[%s236] sm:$0xf]
        %v252 = vld [vmem:[%s236 + $0x4] sm:$0xf]
        %v253 = vld [vmem:[%s236 + $0x8] sm:$0xf]
        %v254 = vld [vmem:[%s236 + $0xc] sm:$0xf]
        %v255 = vld [vmem:[%s236 + $0x10] sm:$0xf]
        %v256 = vld [vmem:[%s236 + $0x14] sm:$0xf]
        %v257 = vld [vmem:[%s236 + $0x18] sm:$0xf]
        %v258 = vld [vmem:[%s236 + $0x1c] sm:$0xf]
        %v259 = vld [vmem:[%s236 + $0x20] sm:$0xf]
        %v260 = vld [vmem:[%s236 + $0x24] sm:$0xf]
        %v261 = vld [vmem:[%s236 + $0x28] sm:$0xf]
        %v262 = vld [vmem:[%s236 + $0x2c] sm:$0xf]
        %v263 = vld [vmem:[%s236 + $0x30] sm:$0xf]
        %v264 = vld [vmem:[%s236 + $0x34] sm:$0xf]
        %v265 = vld [vmem:[%s236 + $0x38] sm:$0xf]
        %v266 = vld [vmem:[%s236 + $0x3c] sm:$0xf]
        %v267 = vld [vmem:[%s236 + $0x40] sm:$0xf]
        %v268 = vld [vmem:[%s236 + $0x44] sm:$0xf]
        %v269 = vld [vmem:[%s236 + $0x48] sm:$0xf]
        %v270 = vld [vmem:[%s236 + $0x4c] sm:$0xf]
        %v271 = vld [vmem:[%s236 + $0x50] sm:$0xf]
        %v272 = vld [vmem:[%s236 + $0x54] sm:$0xf]
        %v273 = vld [vmem:[%s236 + $0x58] sm:$0xf]
        %v274 = vld [vmem:[%s236 + $0x5c] sm:$0xf]
        %v275 = vld [vmem:[%s236 + $0x60] sm:$0xf]
        %v276 = vld [vmem:[%s236 + $0x64] sm:$0xf]
        %v277 = vld [vmem:[%s236 + $0x68] sm:$0xf]
        %v278 = vld [vmem:[%s236 + $0x6c] sm:$0xf]
        %v279 = vld [vmem:[%s236 + $0x70] sm:$0xf]
        %v280 = vld [vmem:[%s236 + $0x74] sm:$0xf]
        %v281 = vld [vmem:[%s236 + $0x78] sm:$0xf]
        %v282 = vld [vmem:[%s236 + $0x7c] sm:$0xf]
        %v283 = vld [vmem:[%s242] sm:$0xff]
        %v284 = vld [vmem:[%s242 + $0x8] sm:$0xff]
        %v285 = vld [vmem:[%s242 + $0x10] sm:$0xff]
        %v286 = vld [vmem:[%s242 + $0x18] sm:$0xff]
        %v287 = vld [vmem:[%s242 + $0x20] sm:$0xff]
        %v288 = vld [vmem:[%s242 + $0x28] sm:$0xff]
        %v289 = vld [vmem:[%s242 + $0x30] sm:$0xff]
        %v290 = vld [vmem:[%s242 + $0x38] sm:$0xff]
        %v291 = vld [vmem:[%s242 + $0x40] sm:$0xff]
        %v292 = vld [vmem:[%s242 + $0x48] sm:$0xff]
        %v293 = vld [vmem:[%s242 + $0x50] sm:$0xff]
        %v294 = vld [vmem:[%s242 + $0x58] sm:$0xff]
        %v295 = vld [vmem:[%s242 + $0x60] sm:$0xff]
        %v296 = vld [vmem:[%s242 + $0x68] sm:$0xff]
        %v297 = vld [vmem:[%s242 + $0x70] sm:$0xff]
        %v298 = vld [vmem:[%s242 + $0x78] sm:$0xff]
        %v299 = vld [vmem:[%s247] sm:$0x3]
        %v301 = vperm.slane %v299, 0
        %v302 = vperm.slane %v299, 1
        %v337 = vunpack.c.l.b16 %v251
        %v338 = vunpack.c.l.b16 %v252
        %v339 = vunpack.c.l.b16 %v253
        %v340 = vunpack.c.l.b16 %v254
        %v341 = vunpack.c.l.b16 %v255
        %v342 = vunpack.c.l.b16 %v256
        %v343 = vunpack.c.l.b16 %v257
        %v344 = vunpack.c.l.b16 %v258
        %v345 = vunpack.c.l.b16 %v259
        %v346 = vunpack.c.l.b16 %v260
        %v347 = vunpack.c.l.b16 %v261
        %v348 = vunpack.c.l.b16 %v262
        %v349 = vunpack.c.l.b16 %v263
        %v350 = vunpack.c.l.b16 %v264
        %v351 = vunpack.c.l.b16 %v265
        %v352 = vunpack.c.l.b16 %v266
        %v353 = vunpack.c.l.b16 %v267
        %v354 = vunpack.c.l.b16 %v268
        %v355 = vunpack.c.l.b16 %v269
        %v356 = vunpack.c.l.b16 %v270
        %v357 = vunpack.c.l.b16 %v271
        %v358 = vunpack.c.l.b16 %v272
        %v359 = vunpack.c.l.b16 %v273
        %v360 = vunpack.c.l.b16 %v274
        %v361 = vunpack.c.l.b16 %v275
        %v362 = vunpack.c.l.b16 %v276
        %v363 = vunpack.c.l.b16 %v277
        %v364 = vunpack.c.l.b16 %v278
        %v365 = vunpack.c.l.b16 %v279
        %v366 = vunpack.c.l.b16 %v280
        %v367 = vunpack.c.l.b16 %v281
        %v368 = vunpack.c.l.b16 %v282
        %v369 = vpack.c.b16 %v338, %v337
        %v370 = vpack.c.b16 %v340, %v339
        %v371 = vpack.c.b16 %v342, %v341
        %v372 = vpack.c.b16 %v344, %v343
        %v373 = vpack.c.b16 %v346, %v345
        %v374 = vpack.c.b16 %v348, %v347
        %v375 = vpack.c.b16 %v350, %v349
        %v376 = vpack.c.b16 %v352, %v351
        %v377 = vpack.c.b16 %v354, %v353
        %v378 = vpack.c.b16 %v356, %v355
        %v379 = vpack.c.b16 %v358, %v357
        %v380 = vpack.c.b16 %v360, %v359
        %v381 = vpack.c.b16 %v362, %v361
        %v382 = vpack.c.b16 %v364, %v363
        %v383 = vpack.c.b16 %v366, %v365
        %v384 = vpack.c.b16 %v368, %v367
        %v417 = vunpack.c.l.b16 %v283
        %v418 = vunpack.c.h.b16 %v283
        %v419 = vunpack.c.l.b16 %v284
        %v420 = vunpack.c.h.b16 %v284
        %v421 = vunpack.c.l.b16 %v285
        %v422 = vunpack.c.h.b16 %v285
        %v423 = vunpack.c.l.b16 %v286
        %v424 = vunpack.c.h.b16 %v286
        %v425 = vunpack.c.l.b16 %v287
        %v426 = vunpack.c.h.b16 %v287
        %v427 = vunpack.c.l.b16 %v288
        %v428 = vunpack.c.h.b16 %v288
        %v429 = vunpack.c.l.b16 %v289
        %v430 = vunpack.c.h.b16 %v289
        %v431 = vunpack.c.l.b16 %v290
        %v432 = vunpack.c.h.b16 %v290
        %v433 = vunpack.c.l.b16 %v291
        %v434 = vunpack.c.h.b16 %v291
        %v435 = vunpack.c.l.b16 %v292
        %v436 = vunpack.c.h.b16 %v292
        %v437 = vunpack.c.l.b16 %v293
        %v438 = vunpack.c.h.b16 %v293
        %v439 = vunpack.c.l.b16 %v294
        %v440 = vunpack.c.h.b16 %v294
        %v441 = vunpack.c.l.b16 %v295
        %v442 = vunpack.c.h.b16 %v295
        %v443 = vunpack.c.l.b16 %v296
        %v444 = vunpack.c.h.b16 %v296
        %v445 = vunpack.c.l.b16 %v297
        %v446 = vunpack.c.h.b16 %v297
        %v447 = vunpack.c.l.b16 %v298
        %v448 = vunpack.c.h.b16 %v298
        %v449 = vpack.c.b16 %v419, %v417
        %v450 = vpack.c.b16 %v420, %v418
        %v451 = vpack.c.b16 %v423, %v421
        %v452 = vpack.c.b16 %v424, %v422
        %v453 = vpack.c.b16 %v427, %v425
        %v454 = vpack.c.b16 %v428, %v426
        %v455 = vpack.c.b16 %v431, %v429
        %v456 = vpack.c.b16 %v432, %v430
        %v457 = vpack.c.b16 %v435, %v433
        %v458 = vpack.c.b16 %v436, %v434
        %v459 = vpack.c.b16 %v439, %v437
        %v460 = vpack.c.b16 %v440, %v438
        %v461 = vpack.c.b16 %v443, %v441
        %v462 = vpack.c.b16 %v444, %v442
        %v463 = vpack.c.b16 %v447, %v445
        %v464 = vpack.c.b16 %v448, %v446
        %481 = vmatpush.bf16.msra.mxu0 %v463
        %482 = vmatpush.bf16.msra.mxu0 %v461
        %483 = vmatpush.bf16.msra.mxu0 %v459
        %484 = vmatpush.bf16.msra.mxu0 %v457
        %485 = vmatpush.bf16.msra.mxu0 %v455
        %486 = vmatpush.bf16.msra.mxu0 %v453
        %487 = vmatpush.bf16.msra.mxu0 %v451
        %488 = vmatpush.bf16.msra.mxu0 %v449
        %489 = vmatmul.bf16.gmra.mxu0 %v369
        %v490 = vpop.f32.mrf.mxu0
        %v491 = vadd.f32 %v301, %v490
        %v492 = vpop.f32.mrf.mxu0
        %v493 = vadd.f32 %v301, %v492
        %494 = vmatmul.bf16.gmra.mxu0 %v370
        %v495 = vpop.f32.mrf.mxu0
        %v496 = vadd.f32 %v301, %v495
        %v497 = vpop.f32.mrf.mxu0
        %v498 = vadd.f32 %v301, %v497
        %499 = vmatmul.bf16.gmra.mxu0 %v371
        %v500 = vpop.f32.mrf.mxu0
        %v501 = vadd.f32 %v301, %v500
        %v502 = vpop.f32.mrf.mxu0
        %v503 = vadd.f32 %v301, %v502
        %504 = vmatmul.bf16.gmra.mxu0 %v372
        %v505 = vpop.f32.mrf.mxu0
        %v506 = vadd.f32 %v301, %v505
        %v507 = vpop.f32.mrf.mxu0
        %v508 = vadd.f32 %v301, %v507
        %509 = vmatmul.bf16.gmra.mxu0 %v373
        %v510 = vpop.f32.mrf.mxu0
        %v511 = vadd.f32 %v301, %v510
        %v512 = vpop.f32.mrf.mxu0
        %v513 = vadd.f32 %v301, %v512
        %514 = vmatmul.bf16.gmra.mxu0 %v374
        %v515 = vpop.f32.mrf.mxu0
        %v516 = vadd.f32 %v301, %v515
        %v517 = vpop.f32.mrf.mxu0
        %v518 = vadd.f32 %v301, %v517
        %519 = vmatmul.bf16.gmra.mxu0 %v375
        %v520 = vpop.f32.mrf.mxu0
        %v521 = vadd.f32 %v301, %v520
        %v522 = vpop.f32.mrf.mxu0
        %v523 = vadd.f32 %v301, %v522
        %524 = vmatmul.bf16.gmra.mxu0 %v376
        %v525 = vpop.f32.mrf.mxu0
        %v526 = vadd.f32 %v301, %v525
        %v527 = vpop.f32.mrf.mxu0
        %v528 = vadd.f32 %v301, %v527
        %529 = vmatmul.bf16.gmra.mxu0 %v377
        %v530 = vpop.f32.mrf.mxu0
        %v531 = vadd.f32 %v301, %v530
        %v532 = vpop.f32.mrf.mxu0
        %v533 = vadd.f32 %v301, %v532
        %534 = vmatmul.bf16.gmra.mxu0 %v378
        %v535 = vpop.f32.mrf.mxu0
        %v536 = vadd.f32 %v301, %v535
        %v537 = vpop.f32.mrf.mxu0
        %v538 = vadd.f32 %v301, %v537
        %539 = vmatmul.bf16.gmra.mxu0 %v379
        %v540 = vpop.f32.mrf.mxu0
        %v541 = vadd.f32 %v301, %v540
        %v542 = vpop.f32.mrf.mxu0
        %v543 = vadd.f32 %v301, %v542
        %544 = vmatmul.bf16.gmra.mxu0 %v380
        %v545 = vpop.f32.mrf.mxu0
        %v546 = vadd.f32 %v301, %v545
        %v547 = vpop.f32.mrf.mxu0
        %v548 = vadd.f32 %v301, %v547
        %549 = vmatmul.bf16.gmra.mxu0 %v381
        %v550 = vpop.f32.mrf.mxu0
        %v551 = vadd.f32 %v301, %v550
        %v552 = vpop.f32.mrf.mxu0
        %v553 = vadd.f32 %v301, %v552
        %554 = vmatmul.bf16.gmra.mxu0 %v382
        %v555 = vpop.f32.mrf.mxu0
        %v556 = vadd.f32 %v301, %v555
        %v557 = vpop.f32.mrf.mxu0
        %v558 = vadd.f32 %v301, %v557
        %559 = vmatmul.bf16.gmra.mxu0 %v383
        %v560 = vpop.f32.mrf.mxu0
        %v561 = vadd.f32 %v301, %v560
        %v562 = vpop.f32.mrf.mxu0
        %v563 = vadd.f32 %v301, %v562
        %564 = vmatmul.bf16.gmra.mxu0 %v384
        %v565 = vpop.f32.mrf.mxu0
        %v566 = vadd.f32 %v301, %v565
        %v567 = vpop.f32.mrf.mxu0
        %v568 = vadd.f32 %v301, %v567
        %569 = vdwg.mxu0
        %570 = vmatpush.bf16.msra.mxu0 %v464
        %571 = vmatpush.bf16.msra.mxu0 %v462
        %572 = vmatpush.bf16.msra.mxu0 %v460
        %573 = vmatpush.bf16.msra.mxu0 %v458
        %574 = vmatpush.bf16.msra.mxu0 %v456
        %575 = vmatpush.bf16.msra.mxu0 %v454
        %576 = vmatpush.bf16.msra.mxu0 %v452
        %577 = vmatpush.bf16.msra.mxu0 %v450
        %578 = vmatmul.bf16.gmra.mxu0 %v369
        %v579 = vpop.f32.mrf.mxu0
        %v580 = vadd.f32 %v302, %v579
        %v581 = vpop.f32.mrf.mxu0
        %v582 = vadd.f32 %v302, %v581
        %583 = vmatmul.bf16.gmra.mxu0 %v370
        %v584 = vpop.f32.mrf.mxu0
        %v585 = vadd.f32 %v302, %v584
        %v586 = vpop.f32.mrf.mxu0
        %v587 = vadd.f32 %v302, %v586
        %588 = vmatmul.bf16.gmra.mxu0 %v371
        %v589 = vpop.f32.mrf.mxu0
        %v590 = vadd.f32 %v302, %v589
        %v591 = vpop.f32.mrf.mxu0
        %v592 = vadd.f32 %v302, %v591
        %593 = vmatmul.bf16.gmra.mxu0 %v372
        %v594 = vpop.f32.mrf.mxu0
        %v595 = vadd.f32 %v302, %v594
        %v596 = vpop.f32.mrf.mxu0
        %v597 = vadd.f32 %v302, %v596
        %598 = vmatmul.bf16.gmra.mxu0 %v373
        %v599 = vpop.f32.mrf.mxu0
        %v600 = vadd.f32 %v302, %v599
        %v601 = vpop.f32.mrf.mxu0
        %v602 = vadd.f32 %v302, %v601
        %603 = vmatmul.bf16.gmra.mxu0 %v374
        %v604 = vpop.f32.mrf.mxu0
        %v605 = vadd.f32 %v302, %v604
        %v606 = vpop.f32.mrf.mxu0
        %v607 = vadd.f32 %v302, %v606
        %608 = vmatmul.bf16.gmra.mxu0 %v375
        %v609 = vpop.f32.mrf.mxu0
        %v610 = vadd.f32 %v302, %v609
        %v611 = vpop.f32.mrf.mxu0
        %v612 = vadd.f32 %v302, %v611
        %613 = vmatmul.bf16.gmra.mxu0 %v376
        %v614 = vpop.f32.mrf.mxu0
        %v615 = vadd.f32 %v302, %v614
        %v616 = vpop.f32.mrf.mxu0
        %v617 = vadd.f32 %v302, %v616
        %618 = vmatmul.bf16.gmra.mxu0 %v377
        %v619 = vpop.f32.mrf.mxu0
        %v620 = vadd.f32 %v302, %v619
        %v621 = vpop.f32.mrf.mxu0
        %v622 = vadd.f32 %v302, %v621
        %623 = vmatmul.bf16.gmra.mxu0 %v378
        %v624 = vpop.f32.mrf.mxu0
        %v625 = vadd.f32 %v302, %v624
        %v626 = vpop.f32.mrf.mxu0
        %v627 = vadd.f32 %v302, %v626
        %628 = vmatmul.bf16.gmra.mxu0 %v379
        %v629 = vpop.f32.mrf.mxu0
        %v630 = vadd.f32 %v302, %v629
        %v631 = vpop.f32.mrf.mxu0
        %v632 = vadd.f32 %v302, %v631
        %633 = vmatmul.bf16.gmra.mxu0 %v380
        %v634 = vpop.f32.mrf.mxu0
        %v635 = vadd.f32 %v302, %v634
        %v636 = vpop.f32.mrf.mxu0
        %v637 = vadd.f32 %v302, %v636
        %638 = vmatmul.bf16.gmra.mxu0 %v381
        %v639 = vpop.f32.mrf.mxu0
        %v640 = vadd.f32 %v302, %v639
        %v641 = vpop.f32.mrf.mxu0
        %v642 = vadd.f32 %v302, %v641
        %643 = vmatmul.bf16.gmra.mxu0 %v382
        %v644 = vpop.f32.mrf.mxu0
        %v645 = vadd.f32 %v302, %v644
        %v646 = vpop.f32.mrf.mxu0
        %v647 = vadd.f32 %v302, %v646
        %648 = vmatmul.bf16.gmra.mxu0 %v383
        %v649 = vpop.f32.mrf.mxu0
        %v650 = vadd.f32 %v302, %v649
        %v651 = vpop.f32.mrf.mxu0
        %v652 = vadd.f32 %v302, %v651
        %653 = vmatmul.bf16.gmra.mxu0 %v384
        %v654 = vpop.f32.mrf.mxu0
        %v655 = vadd.f32 %v302, %v654
        %v656 = vpop.f32.mrf.mxu0
        %v657 = vadd.f32 %v302, %v656
        %658 = vdwg.mxu0
        %v659 = vpack.c.bf16 %v580, %v491
        %v660 = vpack.c.bf16 %v582, %v493
        %v661 = vpack.c.bf16 %v585, %v496
        %v662 = vpack.c.bf16 %v587, %v498
        %v663 = vpack.c.bf16 %v590, %v501
        %v664 = vpack.c.bf16 %v592, %v503
        %v665 = vpack.c.bf16 %v595, %v506
        %v666 = vpack.c.bf16 %v597, %v508
        %v667 = vpack.c.bf16 %v600, %v511
        %v668 = vpack.c.bf16 %v602, %v513
        %v669 = vpack.c.bf16 %v605, %v516
        %v670 = vpack.c.bf16 %v607, %v518
        %v671 = vpack.c.bf16 %v610, %v521
        %v672 = vpack.c.bf16 %v612, %v523
        %v673 = vpack.c.bf16 %v615, %v526
        %v674 = vpack.c.bf16 %v617, %v528
        %v675 = vpack.c.bf16 %v620, %v531
        %v676 = vpack.c.bf16 %v622, %v533
        %v677 = vpack.c.bf16 %v625, %v536
        %v678 = vpack.c.bf16 %v627, %v538
        %v679 = vpack.c.bf16 %v630, %v541
        %v680 = vpack.c.bf16 %v632, %v543
        %v681 = vpack.c.bf16 %v635, %v546
        %v682 = vpack.c.bf16 %v637, %v548
        %v683 = vpack.c.bf16 %v640, %v551
        %v684 = vpack.c.bf16 %v642, %v553
        %v685 = vpack.c.bf16 %v645, %v556
        %v686 = vpack.c.bf16 %v647, %v558
        %v687 = vpack.c.bf16 %v650, %v561
        %v688 = vpack.c.bf16 %v652, %v563
        %v689 = vpack.c.bf16 %v655, %v566
        %v690 = vpack.c.bf16 %v657, %v568
        %691 = vst [vmem:[%s227] sm:$0xff] %v659
        %692 = vst [vmem:[%s227 + $0x8] sm:$0xff] %v660
        %693 = vst [vmem:[%s227 + $0x10] sm:$0xff] %v661
        %694 = vst [vmem:[%s227 + $0x18] sm:$0xff] %v662
        %695 = vst [vmem:[%s227 + $0x20] sm:$0xff] %v663
        %696 = vst [vmem:[%s227 + $0x28] sm:$0xff] %v664
        %697 = vst [vmem:[%s227 + $0x30] sm:$0xff] %v665
        %698 = vst [vmem:[%s227 + $0x38] sm:$0xff] %v666
        %699 = vst [vmem:[%s227 + $0x40] sm:$0xff] %v667
        %700 = vst [vmem:[%s227 + $0x48] sm:$0xff] %v668
        %701 = vst [vmem:[%s227 + $0x50] sm:$0xff] %v669
        %702 = vst [vmem:[%s227 + $0x58] sm:$0xff] %v670
        %703 = vst [vmem:[%s227 + $0x60] sm:$0xff] %v671
        %704 = vst [vmem:[%s227 + $0x68] sm:$0xff] %v672
        %705 = vst [vmem:[%s227 + $0x70] sm:$0xff] %v673
        %706 = vst [vmem:[%s227 + $0x78] sm:$0xff] %v674
        %707 = vst [vmem:[%s227 + $0x80] sm:$0xff] %v675
        %708 = vst [vmem:[%s227 + $0x88] sm:$0xff] %v676
        %709 = vst [vmem:[%s227 + $0x90] sm:$0xff] %v677
        %710 = vst [vmem:[%s227 + $0x98] sm:$0xff] %v678
        %711 = vst [vmem:[%s227 + $0xa0] sm:$0xff] %v679
        %712 = vst [vmem:[%s227 + $0xa8] sm:$0xff] %v680
        %713 = vst [vmem:[%s227 + $0xb0] sm:$0xff] %v681
        %714 = vst [vmem:[%s227 + $0xb8] sm:$0xff] %v682
        %715 = vst [vmem:[%s227 + $0xc0] sm:$0xff] %v683
        %716 = vst [vmem:[%s227 + $0xc8] sm:$0xff] %v684
        %717 = vst [vmem:[%s227 + $0xd0] sm:$0xff] %v685
        %718 = vst [vmem:[%s227 + $0xd8] sm:$0xff] %v686
        %719 = vst [vmem:[%s227 + $0xe0] sm:$0xff] %v687
        %720 = vst [vmem:[%s227 + $0xe8] sm:$0xff] %v688
        %721 = vst [vmem:[%s227 + $0xf0] sm:$0xff] %v689
        %722 = vst [vmem:[%s227 + $0xf8] sm:$0xff] %v690
        %s723 = sand.u32 %s128, 1
        %s724 = scalar_lea.sflag [#allocation3], %s723
        %s725 = sand.u32 %s128, 1
        %s726 = smul.addr %s725, 256
        %s727 = scalar_lea.vmem [#allocation2], %s726
        // Predicated region
        $region33: #{hyena_forward.5} parent=31 // pred_check
          %p728 = pneg %p138
        $region34: #{hyena_forward.5} parent=31 // pred_check_branch
          %730 = sbr.rel (%p728) target = $region36
        $region35: #{hyena_forward.5} parent=31 // pred_region
          %s731 = smul.u32 32, %s23
          %s732 = smul.u32 2, %s24
          %734 = vsyncadd %s724, 0
          %s735 = smul.addr %s731, 2
          %s736 = sadd.s32 %s732, %s735
          %s737 = smul.addr %s22, 192
          %s738 = sadd.s32 %s736, %s737
          %s739 = smul.addr %s738, 4
          %s740 = scalar_lea.hbm %s3, %s739
          %s741 = sshll.u32 %s727, 4
          %s742 = int_to_ptr.vmem [resolvable:$true] %s741
          %s743 = sshll.u32 %s740, 4
          %s744 = int_to_ptr.hbm [resolvable:$true] %s743
          %749 = dma.vmem_to_hbm [thread:$0]  %s742, 4096, %s744, %s724, 128, 128, 8
        $region36: #{hyena_forward.5} parent=31 // pred_fallthru
          _
      $region32: #{hyena_forward.5} parent=5 // pred_fallthru
        _
      %p750 = scmp.le.s32.totalorder 2, %s12
      // Predicated region
      $region37: #{hyena_forward.5} parent=5 // pred_check
        %p751 = pneg %p750
      $region38: #{hyena_forward.5} parent=5 // pred_check_branch
        %753 = sbr.rel (%p751) target = $region40
      $region39: #{hyena_forward.5} parent=5 // pred_region
        %s754 = ssub.s32 %s12, 2
        // Predicated region
        $region41: #{hyena_forward.5} parent=39 // pred_check
          %p755 = pneg %p144
        $region42: #{hyena_forward.5} parent=39 // pred_check_branch
          %757 = sbr.rel (%p755) target = $region44
        $region43: #{hyena_forward.5} parent=39 // pred_region
          %s758 = sand.u32 %s129, 1
          %s759 = scalar_lea.sflag [#allocation3], %s758
          %s760 = sand.u32 %s129, 1
          %s761 = smul.addr %s760, 256
          %s762 = scalar_lea.vmem [#allocation2], %s761
          %764 = dma.done %s759, 4096
        $region44: #{hyena_forward.5} parent=39 // pred_fallthru
          _
      $region40: #{hyena_forward.5} parent=5 // pred_fallthru
        _
    $region6: #{hyena_forward.5} parent=1 // loop_footer
      %s16 = sadd.s32 1, %s12
    $region7: #{hyena_forward.5} parent=1 // loop_footer_branch
      %11 = sbr.rel target = $region3
    $region8: #{hyena_forward.5} parent=1 // loop_exit
      _
    %765 = vsyncpa [#allocation3], 1
    %s766 = scalar_lea.sflag [#allocation3], 1
    %767 = vsyncpa %s766, 1

// kernel: hyena_forward.3
$region0: #{hyena_forward.3}
  #allocation0 [shape = 'u32[]', space=smem, size = 0x4, offset = 0x4, fixed_abs, tag = 'smem constant byte address 0x4 - core index']
  #allocation1 [shape = 'u32[72,128]{1,0:T(1,128)}', space=vmem, size = 0x9000, scoped, tag = 'internal scratch']
  %s0 = inlined_call_operand.vmem [shape: bf16[2,768,128], index: 0, kind: input, shape index: {}, may-alias: {0,10}]
  %s1 = inlined_call_operand.vmem [shape: bf16[2,3,3,128], index: 1, kind: input, shape index: {}]
  %s2 = inlined_call_operand.vmem [shape: bf16[4,128,128], index: 2, kind: input, shape index: {}]
  %s3 = inlined_call_operand.vmem [shape: f32[1,128], index: 3, kind: input, shape index: {}]
  %s4 = inlined_call_operand.vmem [shape: bf16[128,128], index: 4, kind: input, shape index: {}]
  %s5 = inlined_call_operand.vmem [shape: f32[1,128], index: 5, kind: input, shape index: {}]
  %s6 = inlined_call_operand.vmem [shape: bf16[128,256], index: 6, kind: input, shape index: {}]
  %s7 = inlined_call_operand.vmem [shape: f32[1,256], index: 7, kind: input, shape index: {}]
  %s8 = inlined_call_operand.vmem [shape: bf16[256,128], index: 8, kind: input, shape index: {}]
  %s9 = inlined_call_operand.vmem [shape: f32[1,128], index: 9, kind: input, shape index: {}]
  %s10 = inlined_call_operand.vmem [shape: bf16[2,768,128], index: 10, kind: output, shape index: {}, may-alias: {0,10}]
  %s11 = sld [smem:[#allocation0]]
  $region73: #{hyena_forward.3} parent=0
    _
  %s13 = ssub.s32 1, %s11
  %s14 = scalar_select 0, %s13, %s11
  loop: start=0, step=1, limit=8
  $region2: #{hyena_forward.3} parent=0 // loop_pre_header
    _
  $region3: #{hyena_forward.3} parent=0 // loop_header
    %s16 = sphi 0, %s20
    %p17 = scmp.ge.s32.totalorder %s16, 8
    %s23 = sphi 0, %s35
    %s24 = sphi 0, %s31
    %s25 = sphi 0, %s23
    %s26 = sphi 0, %s24
    %s27 = sphi 0, %s25
    %s28 = sphi 0, %s26
    %s40 = sphi 0, %s42
    %s43 = sphi 0, %s40
    %s44 = sphi 0, %s43
    %s60 = sphi 0, %s44
    %s68 = sphi 0, %s70
    %s71 = sphi 0, %s68
    %s72 = sphi 0, %s71
    %s88 = sphi 0, %s72
    %s92 = sphi 0, %s92
    %s94 = sphi 0, %s92
    %s95 = sphi 0, %s94
    %s109 = sphi 0, %s95
    %s113 = sphi 0, %s113
    %s115 = sphi 0, %s113
    %s116 = sphi 0, %s115
    %s130 = sphi 0, %s116
    %s134 = sphi 0, %s134
    %s136 = sphi 0, %s134
    %s137 = sphi 0, %s136
    %s151 = sphi 0, %s137
    %s155 = sphi 0, %s155
    %s157 = sphi 0, %s155
    %s158 = sphi 0, %s157
    %s172 = sphi 0, %s158
    %s176 = sphi 0, %s176
    %s178 = sphi 0, %s176
    %s179 = sphi 0, %s178
    %s193 = sphi 0, %s179
    %s197 = sphi 0, %s197
    %s199 = sphi 0, %s197
    %s200 = sphi 0, %s199
    %s214 = sphi 0, %s200
    %s218 = sphi 0, %s218
    %s220 = sphi 0, %s218
    %s221 = sphi 0, %s220
    %s235 = sphi 0, %s221
    %s239 = sphi 0, %s239
    %s241 = sphi 0, %s239
    %s242 = sphi 0, %s241
    %s256 = sphi 0, %s242
    %s264 = sphi 0, %s266
    %s267 = sphi 0, %s264
    %s268 = sphi 0, %s267
    %s284 = sphi 0, %s268
  $region4: #{hyena_forward.3} parent=0 // loop_header_branch
    %19 = sbr.rel (%p17) target = $region8
  $region5: #{hyena_forward.3} parent=0 // loop_body
    %s21 = ssub.s32 %s16, 1
    %s22 = ssub.s32 %s16, 2
    %s29 = sadd.s32 1, %s24
    %p30 = scmp.ge.s32.totalorder %s29, 3
    %s31 = scalar_select %p30, 0, %s29
    %s32 = sadd.s32 1, %s23
    %s33 = scalar_select %p30, %s32, %s23
    %p34 = scmp.ge.s32.totalorder %s33, 2
    %s35 = scalar_select %p34, 0, %s33
    %s36 = ssub.s32 %s23, %s35
    %s37 = ssub.s32 %s24, %s31
    %s38 = sor.u32 %s36, %s37
    %p39 = scmp.eq.s32.totalorder %s38, 0
    %s41 = sadd.s32 %s40, 1
    %s42 = scalar_select %p39, %s40, %s41
    %p45 = pneg %p39
    %p46 = scmp.eq.s32.totalorder %s16, 5
    %p47 = por %p45, %p46
    %p48 = scmp.ne.s32.totalorder %s40, %s43
    %p49 = scmp.eq.s32.totalorder %s16, 0
    %p50 = por %p48, %p49
    %p51 = scmp.ne.s32.totalorder %s40, %s43
    %p52 = scmp.eq.s32.totalorder %s21, 5
    %p53 = por %p51, %p52
    %p54 = scmp.ne.s32.totalorder %s43, %s44
    %p55 = scmp.eq.s32.totalorder %s21, 0
    %p56 = por %p54, %p55
    %p57 = scmp.ne.s32.totalorder %s43, %s44
    %p58 = scmp.eq.s32.totalorder %s22, 5
    %p59 = por %p57, %p58
    %p61 = scmp.ne.s32.totalorder %s44, %s60
    %p62 = scmp.eq.s32.totalorder %s22, 0
    %p63 = por %p61, %p62
    %s64 = ssub.s32 %s23, %s35
    %s65 = ssub.s32 %s24, %s31
    %s66 = sor.u32 %s64, %s65
    %p67 = scmp.eq.s32.totalorder %s66, 0
    %s69 = sadd.s32 %s68, 1
    %s70 = scalar_select %p67, %s68, %s69
    %p73 = pneg %p67
    %p74 = scmp.eq.s32.totalorder %s16, 5
    %p75 = por %p73, %p74
    %p76 = scmp.ne.s32.totalorder %s68, %s71
    %p77 = scmp.eq.s32.totalorder %s16, 0
    %p78 = por %p76, %p77
    %p79 = scmp.ne.s32.totalorder %s68, %s71
    %p80 = scmp.eq.s32.totalorder %s21, 5
    %p81 = por %p79, %p80
    %p82 = scmp.ne.s32.totalorder %s71, %s72
    %p83 = scmp.eq.s32.totalorder %s21, 0
    %p84 = por %p82, %p83
    %p85 = scmp.ne.s32.totalorder %s71, %s72
    %p86 = scmp.eq.s32.totalorder %s22, 5
    %p87 = por %p85, %p86
    %p89 = scmp.ne.s32.totalorder %s72, %s88
    %p90 = scmp.eq.s32.totalorder %s22, 0
    %p91 = por %p89, %p90
    %s93 = sadd.s32 %s92, 1
    %p96 = scmp.eq.s32.totalorder %s16, 5
    %p97 = scmp.ne.s32.totalorder %s92, %s94
    %p98 = scmp.eq.s32.totalorder %s16, 0
    %p99 = por %p97, %p98
    %p100 = scmp.ne.s32.totalorder %s92, %s94
    %p101 = scmp.eq.s32.totalorder %s21, 5
    %p102 = por %p100, %p101
    %p103 = scmp.ne.s32.totalorder %s94, %s95
    %p104 = scmp.eq.s32.totalorder %s21, 0
    %p105 = por %p103, %p104
    %p106 = scmp.ne.s32.totalorder %s94, %s95
    %p107 = scmp.eq.s32.totalorder %s22, 5
    %p108 = por %p106, %p107
    %p110 = scmp.ne.s32.totalorder %s95, %s109
    %p111 = scmp.eq.s32.totalorder %s22, 0
    %p112 = por %p110, %p111
    %s114 = sadd.s32 %s113, 1
    %p117 = scmp.eq.s32.totalorder %s16, 5
    %p118 = scmp.ne.s32.totalorder %s113, %s115
    %p119 = scmp.eq.s32.totalorder %s16, 0
    %p120 = por %p118, %p119
    %p121 = scmp.ne.s32.totalorder %s113, %s115
    %p122 = scmp.eq.s32.totalorder %s21, 5
    %p123 = por %p121, %p122
    %p124 = scmp.ne.s32.totalorder %s115, %s116
    %p125 = scmp.eq.s32.totalorder %s21, 0
    %p126 = por %p124, %p125
    %p127 = scmp.ne.s32.totalorder %s115, %s116
    %p128 = scmp.eq.s32.totalorder %s22, 5
    %p129 = por %p127, %p128
    %p131 = scmp.ne.s32.totalorder %s116, %s130
    %p132 = scmp.eq.s32.totalorder %s22, 0
    %p133 = por %p131, %p132
    %s135 = sadd.s32 %s134, 1
    %p138 = scmp.eq.s32.totalorder %s16, 5
    %p139 = scmp.ne.s32.totalorder %s134, %s136
    %p140 = scmp.eq.s32.totalorder %s16, 0
    %p141 = por %p139, %p140
    %p142 = scmp.ne.s32.totalorder %s134, %s136
    %p143 = scmp.eq.s32.totalorder %s21, 5
    %p144 = por %p142, %p143
    %p145 = scmp.ne.s32.totalorder %s136, %s137
    %p146 = scmp.eq.s32.totalorder %s21, 0
    %p147 = por %p145, %p146
    %p148 = scmp.ne.s32.totalorder %s136, %s137
    %p149 = scmp.eq.s32.totalorder %s22, 5
    %p150 = por %p148, %p149
    %p152 = scmp.ne.s32.totalorder %s137, %s151
    %p153 = scmp.eq.s32.totalorder %s22, 0
    %p154 = por %p152, %p153
    %s156 = sadd.s32 %s155, 1
    %p159 = scmp.eq.s32.totalorder %s16, 5
    %p160 = scmp.ne.s32.totalorder %s155, %s157
    %p161 = scmp.eq.s32.totalorder %s16, 0
    %p162 = por %p160, %p161
    %p163 = scmp.ne.s32.totalorder %s155, %s157
    %p164 = scmp.eq.s32.totalorder %s21, 5
    %p165 = por %p163, %p164
    %p166 = scmp.ne.s32.totalorder %s157, %s158
    %p167 = scmp.eq.s32.totalorder %s21, 0
    %p168 = por %p166, %p167
    %p169 = scmp.ne.s32.totalorder %s157, %s158
    %p170 = scmp.eq.s32.totalorder %s22, 5
    %p171 = por %p169, %p170
    %p173 = scmp.ne.s32.totalorder %s158, %s172
    %p174 = scmp.eq.s32.totalorder %s22, 0
    %p175 = por %p173, %p174
    %s177 = sadd.s32 %s176, 1
    %p180 = scmp.eq.s32.totalorder %s16, 5
    %p181 = scmp.ne.s32.totalorder %s176, %s178
    %p182 = scmp.eq.s32.totalorder %s16, 0
    %p183 = por %p181, %p182
    %p184 = scmp.ne.s32.totalorder %s176, %s178
    %p185 = scmp.eq.s32.totalorder %s21, 5
    %p186 = por %p184, %p185
    %p187 = scmp.ne.s32.totalorder %s178, %s179
    %p188 = scmp.eq.s32.totalorder %s21, 0
    %p189 = por %p187, %p188
    %p190 = scmp.ne.s32.totalorder %s178, %s179
    %p191 = scmp.eq.s32.totalorder %s22, 5
    %p192 = por %p190, %p191
    %p194 = scmp.ne.s32.totalorder %s179, %s193
    %p195 = scmp.eq.s32.totalorder %s22, 0
    %p196 = por %p194, %p195
    %s198 = sadd.s32 %s197, 1
    %p201 = scmp.eq.s32.totalorder %s16, 5
    %p202 = scmp.ne.s32.totalorder %s197, %s199
    %p203 = scmp.eq.s32.totalorder %s16, 0
    %p204 = por %p202, %p203
    %p205 = scmp.ne.s32.totalorder %s197, %s199
    %p206 = scmp.eq.s32.totalorder %s21, 5
    %p207 = por %p205, %p206
    %p208 = scmp.ne.s32.totalorder %s199, %s200
    %p209 = scmp.eq.s32.totalorder %s21, 0
    %p210 = por %p208, %p209
    %p211 = scmp.ne.s32.totalorder %s199, %s200
    %p212 = scmp.eq.s32.totalorder %s22, 5
    %p213 = por %p211, %p212
    %p215 = scmp.ne.s32.totalorder %s200, %s214
    %p216 = scmp.eq.s32.totalorder %s22, 0
    %p217 = por %p215, %p216
    %s219 = sadd.s32 %s218, 1
    %p222 = scmp.eq.s32.totalorder %s16, 5
    %p223 = scmp.ne.s32.totalorder %s218, %s220
    %p224 = scmp.eq.s32.totalorder %s16, 0
    %p225 = por %p223, %p224
    %p226 = scmp.ne.s32.totalorder %s218, %s220
    %p227 = scmp.eq.s32.totalorder %s21, 5
    %p228 = por %p226, %p227
    %p229 = scmp.ne.s32.totalorder %s220, %s221
    %p230 = scmp.eq.s32.totalorder %s21, 0
    %p231 = por %p229, %p230
    %p232 = scmp.ne.s32.totalorder %s220, %s221
    %p233 = scmp.eq.s32.totalorder %s22, 5
    %p234 = por %p232, %p233
    %p236 = scmp.ne.s32.totalorder %s221, %s235
    %p237 = scmp.eq.s32.totalorder %s22, 0
    %p238 = por %p236, %p237
    %s240 = sadd.s32 %s239, 1
    %p243 = scmp.eq.s32.totalorder %s16, 5
    %p244 = scmp.ne.s32.totalorder %s239, %s241
    %p245 = scmp.eq.s32.totalorder %s16, 0
    %p246 = por %p244, %p245
    %p247 = scmp.ne.s32.totalorder %s239, %s241
    %p248 = scmp.eq.s32.totalorder %s21, 5
    %p249 = por %p247, %p248
    %p250 = scmp.ne.s32.totalorder %s241, %s242
    %p251 = scmp.eq.s32.totalorder %s21, 0
    %p252 = por %p250, %p251
    %p253 = scmp.ne.s32.totalorder %s241, %s242
    %p254 = scmp.eq.s32.totalorder %s22, 5
    %p255 = por %p253, %p254
    %p257 = scmp.ne.s32.totalorder %s242, %s256
    %p258 = scmp.eq.s32.totalorder %s22, 0
    %p259 = por %p257, %p258
    %s260 = ssub.s32 %s23, %s35
    %s261 = ssub.s32 %s24, %s31
    %s262 = sor.u32 %s260, %s261
    %p263 = scmp.eq.s32.totalorder %s262, 0
    %s265 = sadd.s32 %s264, 1
    %s266 = scalar_select %p263, %s264, %s265
    %p269 = pneg %p263
    %p270 = scmp.eq.s32.totalorder %s16, 5
    %p271 = por %p269, %p270
    %p272 = scmp.ne.s32.totalorder %s264, %s267
    %p273 = scmp.eq.s32.totalorder %s16, 0
    %p274 = por %p272, %p273
    %p275 = scmp.ne.s32.totalorder %s264, %s267
    %p276 = scmp.eq.s32.totalorder %s21, 5
    %p277 = por %p275, %p276
    %p278 = scmp.ne.s32.totalorder %s267, %s268
    %p279 = scmp.eq.s32.totalorder %s21, 0
    %p280 = por %p278, %p279
    %p281 = scmp.ne.s32.totalorder %s267, %s268
    %p282 = scmp.eq.s32.totalorder %s22, 5
    %p283 = por %p281, %p282
    %p285 = scmp.ne.s32.totalorder %s268, %s284
    %p286 = scmp.eq.s32.totalorder %s22, 0
    %p287 = por %p285, %p286
    %p288 = scmp.le.s32.totalorder 1, %s16
    %p289 = scmp.lt.s32.totalorder %s16, 7
    %p290 = pnand %p288, %p289
    %p291 = pneg %p290
    // Predicated region
    $region9: #{hyena_forward.3} parent=5 // pred_check
      _
    $region10: #{hyena_forward.3} parent=5 // pred_check_branch
      %293 = sbr.rel (%p290) target = $region12
    $region11: #{hyena_forward.3} parent=5 // pred_region
      %s294 = ssub.s32 %s16, 1
      // Predicated region
      $region13: #{hyena_forward.3} parent=11 // pred_check
        %p295 = pneg %p105
      $region14: #{hyena_forward.3} parent=11 // pred_check_branch
        %297 = sbr.rel (%p295) target = $region16
      $region15: #{hyena_forward.3} parent=11 // pred_region
        _
      $region16: #{hyena_forward.3} parent=11 // pred_fallthru
        _
      // Predicated region
      $region17: #{hyena_forward.3} parent=11 // pred_check
        %p298 = pneg %p126
      $region18: #{hyena_forward.3} parent=11 // pred_check_branch
        %300 = sbr.rel (%p298) target = $region20
      $region19: #{hyena_forward.3} parent=11 // pred_region
        _
      $region20: #{hyena_forward.3} parent=11 // pred_fallthru
        _
      // Predicated region
      $region21: #{hyena_forward.3} parent=11 // pred_check
        %p301 = pneg %p147
      $region22: #{hyena_forward.3} parent=11 // pred_check_branch
        %303 = sbr.rel (%p301) target = $region24
      $region23: #{hyena_forward.3} parent=11 // pred_region
        _
      $region24: #{hyena_forward.3} parent=11 // pred_fallthru
        _
      // Predicated region
      $region25: #{hyena_forward.3} parent=11 // pred_check
        %p304 = pneg %p168
      $region26: #{hyena_forward.3} parent=11 // pred_check_branch
        %306 = sbr.rel (%p304) target = $region28
      $region27: #{hyena_forward.3} parent=11 // pred_region
        _
      $region28: #{hyena_forward.3} parent=11 // pred_fallthru
        _
      // Predicated region
      $region29: #{hyena_forward.3} parent=11 // pred_check
        %p307 = pneg %p189
      $region30: #{hyena_forward.3} parent=11 // pred_check_branch
        %309 = sbr.rel (%p307) target = $region32
      $region31: #{hyena_forward.3} parent=11 // pred_region
        _
      $region32: #{hyena_forward.3} parent=11 // pred_fallthru
        _
      // Predicated region
      $region33: #{hyena_forward.3} parent=11 // pred_check
        %p310 = pneg %p210
      $region34: #{hyena_forward.3} parent=11 // pred_check_branch
        %312 = sbr.rel (%p310) target = $region36
      $region35: #{hyena_forward.3} parent=11 // pred_region
        _
      $region36: #{hyena_forward.3} parent=11 // pred_fallthru
        _
      // Predicated region
      $region37: #{hyena_forward.3} parent=11 // pred_check
        %p313 = pneg %p231
      $region38: #{hyena_forward.3} parent=11 // pred_check_branch
        %315 = sbr.rel (%p313) target = $region40
      $region39: #{hyena_forward.3} parent=11 // pred_region
        _
      $region40: #{hyena_forward.3} parent=11 // pred_fallthru
        _
      // Predicated region
      $region41: #{hyena_forward.3} parent=11 // pred_check
        %p316 = pneg %p252
      $region42: #{hyena_forward.3} parent=11 // pred_check_branch
        %318 = sbr.rel (%p316) target = $region44
      $region43: #{hyena_forward.3} parent=11 // pred_region
        _
      $region44: #{hyena_forward.3} parent=11 // pred_fallthru
        _
    $region12: #{hyena_forward.3} parent=5 // pred_fallthru
      _
    %p319 = scmp.lt.s32.totalorder %s16, 6
    // Predicated region
    $region45: #{hyena_forward.3} parent=5 // pred_check
      %p320 = pneg %p319
    $region46: #{hyena_forward.3} parent=5 // pred_check_branch
      %322 = sbr.rel (%p320) target = $region48
    $region47: #{hyena_forward.3} parent=5 // pred_region
      // Predicated region
      $region49: #{hyena_forward.3} parent=47 // pred_check
        %p323 = pneg %p50
      $region50: #{hyena_forward.3} parent=47 // pred_check_branch
        %325 = sbr.rel (%p323) target = $region52
      $region51: #{hyena_forward.3} parent=47 // pred_region
        %s326 = smul.u32 32, %s24
        %p327 = scmp.lt.s32.totalorder %s23, 1
        %s328 = scalar_select %p327, %s23, 1
        %p329 = scmp.lt.s32.totalorder %s326, 95
        %s330 = scalar_select %p329, %s326, 95
        %s331 = smul.addr %s328, 96
        %s332 = sadd.s32 %s330, %s331
        %s333 = smul.addr %s332, 4
        %s334 = scalar_lea.vmem %s0, %s333
        %s335 = smul.u32 32, %s24
      $region52: #{hyena_forward.3} parent=47 // pred_fallthru
        _
      // Predicated region
      $region53: #{hyena_forward.3} parent=47 // pred_check
        %p336 = pneg %p78
      $region54: #{hyena_forward.3} parent=47 // pred_check_branch
        %338 = sbr.rel (%p336) target = $region56
      $region55: #{hyena_forward.3} parent=47 // pred_region
        %p339 = scmp.lt.s32.totalorder %s23, 1
        %s340 = scalar_select %p339, %s23, 1
        %p341 = scmp.lt.s32.totalorder %s24, 2
        %s342 = scalar_select %p341, %s24, 2
        %s343 = smul.addr %s340, 3
        %s344 = sadd.s32 %s342, %s343
        %s345 = smul.addr %s344, 2
        %s346 = scalar_lea.vmem %s1, %s345
      $region56: #{hyena_forward.3} parent=47 // pred_fallthru
        _
    $region48: #{hyena_forward.3} parent=5 // pred_fallthru
      _
    %p347 = scmp.le.s32.totalorder 1, %s16
    %p348 = scmp.lt.s32.totalorder %s16, 7
    %p349 = pnand %p347, %p348
    %p350 = pneg %p349
    // Predicated region
    $region57: #{hyena_forward.3} parent=5 // pred_check
      _
    $region58: #{hyena_forward.3} parent=5 // pred_check_branch
      %352 = sbr.rel (%p349) target = $region60
    $region59: #{hyena_forward.3} parent=5 // pred_region
      %s353 = ssub.s32 %s16, 1
      %s354 = smul.u32 32, %s26
      %p355 = scmp.lt.s32.totalorder %s25, 1
      %s356 = scalar_select %p355, %s25, 1
      %p357 = scmp.lt.s32.totalorder %s354, 95
      %s358 = scalar_select %p357, %s354, 95
      %s359 = smul.addr %s356, 96
      %s360 = sadd.s32 %s358, %s359
      %s361 = smul.addr %s360, 4
      %s362 = scalar_lea.vmem %s0, %s361
      %p363 = pneg %p56
      %p364 = pneg %p53
      %p365 = scmp.lt.s32.totalorder %s25, 1
      %s366 = scalar_select %p365, %s25, 1
      %p367 = scmp.lt.s32.totalorder %s26, 2
      %s368 = scalar_select %p367, %s26, 2
      %s369 = smul.addr %s366, 3
      %s370 = sadd.s32 %s368, %s369
      %s371 = smul.addr %s370, 2
      %s372 = scalar_lea.vmem %s1, %s371
      %p373 = pneg %p84
      %p374 = pneg %p81
      %p375 = pneg %p105
      %p376 = pneg %p102
      %p377 = pneg %p126
      %p378 = pneg %p123
      %p379 = pneg %p147
      %p380 = pneg %p144
      %p381 = pneg %p168
      %p382 = pneg %p165
      %p383 = pneg %p189
      %p384 = pneg %p186
      %p385 = pneg %p210
      %p386 = pneg %p207
      %p387 = pneg %p231
      %p388 = pneg %p228
      %p389 = pneg %p252
      %p390 = pneg %p249
      %p391 = pneg %p280
      %p392 = pneg %p277
      %s393 = smul.u32 32, %s26
      %p394 = scmp.lt.s32.totalorder %s25, 1
      %s395 = scalar_select %p394, %s25, 1
      %p396 = scmp.lt.s32.totalorder %s393, 95
      %s397 = scalar_select %p396, %s393, 95
      %s398 = smul.addr %s395, 96
      %s399 = sadd.s32 %s397, %s398
      %s400 = smul.addr %s399, 4
      %s401 = scalar_lea.vmem %s10, %s400
      %s402 = smul.u32 32, %s26
      %p403 = scmp.lt.s32.totalorder %s25, 1
      %s404 = scalar_select %p403, %s25, 1
      %p405 = scmp.lt.s32.totalorder %s402, 95
      %s406 = scalar_select %p405, %s402, 95
      %s407 = smul.addr %s404, 96
      %s408 = sadd.s32 %s406, %s407
      %s409 = smul.addr %s408, 4
      %s410 = scalar_lea.vmem %s0, %s409
      %s411 = smul.u32 32, %s26
      %p412 = scmp.lt.s32.totalorder %s25, 1
      %s413 = scalar_select %p412, %s25, 1
      %p414 = scmp.lt.s32.totalorder %s26, 2
      %s415 = scalar_select %p414, %s26, 2
      %s416 = smul.addr %s413, 3
      %s417 = sadd.s32 %s415, %s416
      %s418 = smul.addr %s417, 2
      %s419 = scalar_lea.vmem %s1, %s418
      %s420 = smul.u32 32, %s26
      %p421 = scmp.lt.s32.totalorder %s25, 1
      %s422 = scalar_select %p421, %s25, 1
      %p423 = scmp.lt.s32.totalorder %s420, 95
      %s424 = scalar_select %p423, %s420, 95
      %s425 = smul.addr %s422, 96
      %s426 = sadd.s32 %s424, %s425
      %s427 = smul.addr %s426, 4
      %s428 = scalar_lea.vmem %s10, %s427
      %s429 = smul.u32 32, %s26
      %v430 = vld [vmem:[%s410] sm:$0xf]
      %v431 = vld [vmem:[%s410 + $0x4] sm:$0xf]
      %v432 = vld [vmem:[%s410 + $0x8] sm:$0xf]
      %v433 = vld [vmem:[%s410 + $0xc] sm:$0xf]
      %v434 = vld [vmem:[%s410 + $0x10] sm:$0xf]
      %v435 = vld [vmem:[%s410 + $0x14] sm:$0xf]
      %v436 = vld [vmem:[%s410 + $0x18] sm:$0xf]
      %v437 = vld [vmem:[%s410 + $0x1c] sm:$0xf]
      %v438 = vld [vmem:[%s410 + $0x20] sm:$0xf]
      %v439 = vld [vmem:[%s410 + $0x24] sm:$0xf]
      %v440 = vld [vmem:[%s410 + $0x28] sm:$0xf]
      %v441 = vld [vmem:[%s410 + $0x2c] sm:$0xf]
      %v442 = vld [vmem:[%s410 + $0x30] sm:$0xf]
      %v443 = vld [vmem:[%s410 + $0x34] sm:$0xf]
      %v444 = vld [vmem:[%s410 + $0x38] sm:$0xf]
      %v445 = vld [vmem:[%s410 + $0x3c] sm:$0xf]
      %v446 = vld [vmem:[%s410 + $0x40] sm:$0xf]
      %v447 = vld [vmem:[%s410 + $0x44] sm:$0xf]
      %v448 = vld [vmem:[%s410 + $0x48] sm:$0xf]
      %v449 = vld [vmem:[%s410 + $0x4c] sm:$0xf]
      %v450 = vld [vmem:[%s410 + $0x50] sm:$0xf]
      %v451 = vld [vmem:[%s410 + $0x54] sm:$0xf]
      %v452 = vld [vmem:[%s410 + $0x58] sm:$0xf]
      %v453 = vld [vmem:[%s410 + $0x5c] sm:$0xf]
      %v454 = vld [vmem:[%s410 + $0x60] sm:$0xf]
      %v455 = vld [vmem:[%s410 + $0x64] sm:$0xf]
      %v456 = vld [vmem:[%s410 + $0x68] sm:$0xf]
      %v457 = vld [vmem:[%s410 + $0x6c] sm:$0xf]
      %v458 = vld [vmem:[%s410 + $0x70] sm:$0xf]
      %v459 = vld [vmem:[%s410 + $0x74] sm:$0xf]
      %v460 = vld [vmem:[%s410 + $0x78] sm:$0xf]
      %v461 = vld [vmem:[%s410 + $0x7c] sm:$0xf]
      %v462 = vld [vmem:[%s419] sm:$0x3]
      %v495 = vunpack.c.l.b16 %v430
      %v496 = vunpack.c.l.b16 %v431
      %v497 = vunpack.c.l.b16 %v432
      %v498 = vunpack.c.l.b16 %v433
      %v499 = vunpack.c.l.b16 %v434
      %v500 = vunpack.c.l.b16 %v435
      %v501 = vunpack.c.l.b16 %v436
      %v502 = vunpack.c.l.b16 %v437
      %v503 = vunpack.c.l.b16 %v438
      %v504 = vunpack.c.l.b16 %v439
      %v505 = vunpack.c.l.b16 %v440
      %v506 = vunpack.c.l.b16 %v441
      %v507 = vunpack.c.l.b16 %v442
      %v508 = vunpack.c.l.b16 %v443
      %v509 = vunpack.c.l.b16 %v444
      %v510 = vunpack.c.l.b16 %v445
      %v511 = vunpack.c.l.b16 %v446
      %v512 = vunpack.c.l.b16 %v447
      %v513 = vunpack.c.l.b16 %v448
      %v514 = vunpack.c.l.b16 %v449
      %v515 = vunpack.c.l.b16 %v450
      %v516 = vunpack.c.l.b16 %v451
      %v517 = vunpack.c.l.b16 %v452
      %v518 = vunpack.c.l.b16 %v453
      %v519 = vunpack.c.l.b16 %v454
      %v520 = vunpack.c.l.b16 %v455
      %v521 = vunpack.c.l.b16 %v456
      %v522 = vunpack.c.l.b16 %v457
      %v523 = vunpack.c.l.b16 %v458
      %v524 = vunpack.c.l.b16 %v459
      %v525 = vunpack.c.l.b16 %v460
      %v526 = vunpack.c.l.b16 %v461
      %v527 = vpack.c.b16 %v496, %v495
      %v528 = vpack.c.b16 %v498, %v497
      %v529 = vpack.c.b16 %v500, %v499
      %v530 = vpack.c.b16 %v502, %v501
      %v531 = vpack.c.b16 %v504, %v503
      %v532 = vpack.c.b16 %v506, %v505
      %v533 = vpack.c.b16 %v508, %v507
      %v534 = vpack.c.b16 %v510, %v509
      %v535 = vpack.c.b16 %v512, %v511
      %v536 = vpack.c.b16 %v514, %v513
      %v537 = vpack.c.b16 %v516, %v515
      %v538 = vpack.c.b16 %v518, %v517
      %v539 = vpack.c.b16 %v520, %v519
      %v540 = vpack.c.b16 %v522, %v521
      %v541 = vpack.c.b16 %v524, %v523
      %v542 = vpack.c.b16 %v526, %v525
      %vm543 = vsmask.f32 256
      %v545 = vshrl.u32 %v527, 16
      %v547 = vrot.slane %v545, 7
      %v548 = vshll.u32 %v527, 16
      %v550 = vor.u32 %v547, %v548
      %v552 = vshrl.u32 %v528, 16
      %v554 = vrot.slane %v552, 7
      %v555 = vshll.u32 %v528, 16
      %v557 = vor.u32 %v554, %v555
      %v558 = vsel %vm543, %v547, %v557
      %v560 = vshrl.u32 %v529, 16
      %v562 = vrot.slane %v560, 7
      %v563 = vshll.u32 %v529, 16
      %v565 = vor.u32 %v562, %v563
      %v566 = vsel %vm543, %v554, %v565
      %v568 = vshrl.u32 %v530, 16
      %v570 = vrot.slane %v568, 7
      %v571 = vshll.u32 %v530, 16
      %v573 = vor.u32 %v570, %v571
      %v574 = vsel %vm543, %v562, %v573
      %v576 = vshrl.u32 %v531, 16
      %v578 = vrot.slane %v576, 7
      %v579 = vshll.u32 %v531, 16
      %v581 = vor.u32 %v578, %v579
      %v582 = vsel %vm543, %v570, %v581
      %v584 = vshrl.u32 %v532, 16
      %v586 = vrot.slane %v584, 7
      %v587 = vshll.u32 %v532, 16
      %v589 = vor.u32 %v586, %v587
      %v590 = vsel %vm543, %v578, %v589
      %v592 = vshrl.u32 %v533, 16
      %v594 = vrot.slane %v592, 7
      %v595 = vshll.u32 %v533, 16
      %v597 = vor.u32 %v594, %v595
      %v598 = vsel %vm543, %v586, %v597
      %v600 = vshrl.u32 %v534, 16
      %v602 = vrot.slane %v600, 7
      %v603 = vshll.u32 %v534, 16
      %v605 = vor.u32 %v602, %v603
      %v606 = vsel %vm543, %v594, %v605
      %v608 = vshrl.u32 %v535, 16
      %v610 = vrot.slane %v608, 7
      %v611 = vshll.u32 %v535, 16
      %v613 = vor.u32 %v610, %v611
      %v614 = vsel %vm543, %v602, %v613
      %v616 = vshrl.u32 %v536, 16
      %v618 = vrot.slane %v616, 7
      %v619 = vshll.u32 %v536, 16
      %v621 = vor.u32 %v618, %v619
      %v622 = vsel %vm543, %v610, %v621
      %v624 = vshrl.u32 %v537, 16
      %v626 = vrot.slane %v624, 7
      %v627 = vshll.u32 %v537, 16
      %v629 = vor.u32 %v626, %v627
      %v630 = vsel %vm543, %v618, %v629
      %v632 = vshrl.u32 %v538, 16
      %v634 = vrot.slane %v632, 7
      %v635 = vshll.u32 %v538, 16
      %v637 = vor.u32 %v634, %v635
      %v638 = vsel %vm543, %v626, %v637
      %v640 = vshrl.u32 %v539, 16
      %v642 = vrot.slane %v640, 7
      %v643 = vshll.u32 %v539, 16
      %v645 = vor.u32 %v642, %v643
      %v646 = vsel %vm543, %v634, %v645
      %v648 = vshrl.u32 %v540, 16
      %v650 = vrot.slane %v648, 7
      %v651 = vshll.u32 %v540, 16
      %v653 = vor.u32 %v650, %v651
      %v654 = vsel %vm543, %v642, %v653
      %v656 = vshrl.u32 %v541, 16
      %v658 = vrot.slane %v656, 7
      %v659 = vshll.u32 %v541, 16
      %v661 = vor.u32 %v658, %v659
      %v662 = vsel %vm543, %v650, %v661
      %v664 = vshrl.u32 %v542, 16
      %v666 = vrot.slane %v664, 7
      %v667 = vshll.u32 %v542, 16
      %v669 = vor.u32 %v666, %v667
      %v670 = vsel %vm543, %v658, %v669
      %vm688 = vcmask 1040384
      %vm689 = vmand %vm688, %vm543
      %v690 = vsel %vm689, %v462, %v550
      %v691 = vsel %vm689, %v666, %v462
      %v692 = vld [vmem:[%s3] sm:$0x1]
      %v693 = vld [vmem:[%s2] sm:$0xf]
      %v694 = vld [vmem:[%s2 + $0x4] sm:$0xf]
      %v695 = vld [vmem:[%s2 + $0x8] sm:$0xf]
      %v696 = vld [vmem:[%s2 + $0xc] sm:$0xf]
      %v697 = vld [vmem:[%s2 + $0x10] sm:$0xf]
      %v698 = vld [vmem:[%s2 + $0x14] sm:$0xf]
      %v699 = vld [vmem:[%s2 + $0x18] sm:$0xf]
      %v700 = vld [vmem:[%s2 + $0x1c] sm:$0xf]
      %v701 = vld [vmem:[%s2 + $0x20] sm:$0xf]
      %v702 = vld [vmem:[%s2 + $0x24] sm:$0xf]
      %v703 = vld [vmem:[%s2 + $0x28] sm:$0xf]
      %v704 = vld [vmem:[%s2 + $0x2c] sm:$0xf]
      %v705 = vld [vmem:[%s2 + $0x30] sm:$0xf]
      %v706 = vld [vmem:[%s2 + $0x34] sm:$0xf]
      %v707 = vld [vmem:[%s2 + $0x38] sm:$0xf]
      %v708 = vld [vmem:[%s2 + $0x3c] sm:$0xf]
      %v725 = vunpack.c.l.b16 %v693
      %v726 = vunpack.c.l.b16 %v694
      %v727 = vunpack.c.l.b16 %v695
      %v728 = vunpack.c.l.b16 %v696
      %v729 = vunpack.c.l.b16 %v697
      %v730 = vunpack.c.l.b16 %v698
      %v731 = vunpack.c.l.b16 %v699
      %v732 = vunpack.c.l.b16 %v700
      %v733 = vunpack.c.l.b16 %v701
      %v734 = vunpack.c.l.b16 %v702
      %v735 = vunpack.c.l.b16 %v703
      %v736 = vunpack.c.l.b16 %v704
      %v737 = vunpack.c.l.b16 %v705
      %v738 = vunpack.c.l.b16 %v706
      %v739 = vunpack.c.l.b16 %v707
      %v740 = vunpack.c.l.b16 %v708
      %v741 = vpack.c.b16 %v726, %v725
      %v742 = vpack.c.b16 %v728, %v727
      %v743 = vpack.c.b16 %v730, %v729
      %v744 = vpack.c.b16 %v732, %v731
      %v745 = vpack.c.b16 %v734, %v733
      %v746 = vpack.c.b16 %v736, %v735
      %v747 = vpack.c.b16 %v738, %v737
      %v748 = vpack.c.b16 %v740, %v739
      %757 = vmatpush.bf16.msra.mxu0 %v748
      %758 = vmatpush.bf16.msra.mxu0 %v747
      %759 = vmatpush.bf16.msra.mxu0 %v746
      %760 = vmatpush.bf16.msra.mxu0 %v745
      %761 = vmatpush.bf16.msra.mxu0 %v744
      %762 = vmatpush.bf16.msra.mxu0 %v743
      %763 = vmatpush.bf16.msra.mxu0 %v742
      %764 = vmatpush.bf16.msra.mxu0 %v741
      %765 = vmatmul.bf16.gmra.mxu0 %v690
      %v766 = vpop.f32.mrf.mxu0
      %v767 = vadd.f32 0.0, %v766
      %v768 = vpop.f32.mrf.mxu0
      %v769 = vadd.f32 0.0, %v768
      %770 = vmatmul.bf16.gmra.mxu0 %v558
      %v771 = vpop.f32.mrf.mxu0
      %v772 = vadd.f32 0.0, %v771
      %v773 = vpop.f32.mrf.mxu0
      %v774 = vadd.f32 0.0, %v773
      %775 = vmatmul.bf16.gmra.mxu0 %v566
      %v776 = vpop.f32.mrf.mxu0
      %v777 = vadd.f32 0.0, %v776
      %v778 = vpop.f32.mrf.mxu0
      %v779 = vadd.f32 0.0, %v778
      %780 = vmatmul.bf16.gmra.mxu0 %v574
      %v781 = vpop.f32.mrf.mxu0
      %v782 = vadd.f32 0.0, %v781
      %v783 = vpop.f32.mrf.mxu0
      %v784 = vadd.f32 0.0, %v783
      %785 = vmatmul.bf16.gmra.mxu0 %v582
      %v786 = vpop.f32.mrf.mxu0
      %v787 = vadd.f32 0.0, %v786
      %v788 = vpop.f32.mrf.mxu0
      %v789 = vadd.f32 0.0, %v788
      %790 = vmatmul.bf16.gmra.mxu0 %v590
      %v791 = vpop.f32.mrf.mxu0
      %v792 = vadd.f32 0.0, %v791
      %v793 = vpop.f32.mrf.mxu0
      %v794 = vadd.f32 0.0, %v793
      %795 = vmatmul.bf16.gmra.mxu0 %v598
      %v796 = vpop.f32.mrf.mxu0
      %v797 = vadd.f32 0.0, %v796
      %v798 = vpop.f32.mrf.mxu0
      %v799 = vadd.f32 0.0, %v798
      %800 = vmatmul.bf16.gmra.mxu0 %v606
      %v801 = vpop.f32.mrf.mxu0
      %v802 = vadd.f32 0.0, %v801
      %v803 = vpop.f32.mrf.mxu0
      %v804 = vadd.f32 0.0, %v803
      %805 = vmatmul.bf16.gmra.mxu0 %v614
      %v806 = vpop.f32.mrf.mxu0
      %v807 = vadd.f32 0.0, %v806
      %v808 = vpop.f32.mrf.mxu0
      %v809 = vadd.f32 0.0, %v808
      %810 = vmatmul.bf16.gmra.mxu0 %v622
      %v811 = vpop.f32.mrf.mxu0
      %v812 = vadd.f32 0.0, %v811
      %v813 = vpop.f32.mrf.mxu0
      %v814 = vadd.f32 0.0, %v813
      %815 = vmatmul.bf16.gmra.mxu0 %v630
      %v816 = vpop.f32.mrf.mxu0
      %v817 = vadd.f32 0.0, %v816
      %v818 = vpop.f32.mrf.mxu0
      %v819 = vadd.f32 0.0, %v818
      %820 = vmatmul.bf16.gmra.mxu0 %v638
      %v821 = vpop.f32.mrf.mxu0
      %v822 = vadd.f32 0.0, %v821
      %v823 = vpop.f32.mrf.mxu0
      %v824 = vadd.f32 0.0, %v823
      %825 = vmatmul.bf16.gmra.mxu0 %v646
      %v826 = vpop.f32.mrf.mxu0
      %v827 = vadd.f32 0.0, %v826
      %v828 = vpop.f32.mrf.mxu0
      %v829 = vadd.f32 0.0, %v828
      %830 = vmatmul.bf16.gmra.mxu0 %v654
      %v831 = vpop.f32.mrf.mxu0
      %v832 = vadd.f32 0.0, %v831
      %v833 = vpop.f32.mrf.mxu0
      %v834 = vadd.f32 0.0, %v833
      %835 = vmatmul.bf16.gmra.mxu0 %v662
      %v836 = vpop.f32.mrf.mxu0
      %v837 = vadd.f32 0.0, %v836
      %v838 = vpop.f32.mrf.mxu0
      %v839 = vadd.f32 0.0, %v838
      %840 = vmatmul.bf16.gmra.mxu0 %v670
      %v841 = vpop.f32.mrf.mxu0
      %v842 = vadd.f32 0.0, %v841
      %v843 = vpop.f32.mrf.mxu0
      %v844 = vadd.f32 0.0, %v843
      %845 = vdwg.mxu0
      %v847 = vperm.slane %v692, 0
      %v849 = vadd.f32 %v847, %v767
      %v850 = vadd.f32 %v847, %v769
      %v851 = vadd.f32 %v847, %v772
      %v852 = vadd.f32 %v847, %v774
      %v853 = vadd.f32 %v847, %v777
      %v854 = vadd.f32 %v847, %v779
      %v855 = vadd.f32 %v847, %v782
      %v856 = vadd.f32 %v847, %v784
      %v857 = vadd.f32 %v847, %v787
      %v858 = vadd.f32 %v847, %v789
      %v859 = vadd.f32 %v847, %v792
      %v860 = vadd.f32 %v847, %v794
      %v861 = vadd.f32 %v847, %v797
      %v862 = vadd.f32 %v847, %v799
      %v863 = vadd.f32 %v847, %v802
      %v864 = vadd.f32 %v847, %v804
      %v865 = vadd.f32 %v847, %v807
      %v866 = vadd.f32 %v847, %v809
      %v867 = vadd.f32 %v847, %v812
      %v868 = vadd.f32 %v847, %v814
      %v869 = vadd.f32 %v847, %v817
      %v870 = vadd.f32 %v847, %v819
      %v871 = vadd.f32 %v847, %v822
      %v872 = vadd.f32 %v847, %v824
      %v873 = vadd.f32 %v847, %v827
      %v874 = vadd.f32 %v847, %v829
      %v875 = vadd.f32 %v847, %v832
      %v876 = vadd.f32 %v847, %v834
      %v877 = vadd.f32 %v847, %v837
      %v878 = vadd.f32 %v847, %v839
      %v879 = vadd.f32 %v847, %v842
      %v880 = vadd.f32 %v847, %v844
      %s881 = scalar_lea.vmem %s2, 64
      %v882 = vld [vmem:[%s881] sm:$0xf]
      %v883 = vld [vmem:[%s881 + $0x4] sm:$0xf]
      %v884 = vld [vmem:[%s881 + $0x8] sm:$0xf]
      %v885 = vld [vmem:[%s881 + $0xc] sm:$0xf]
      %v886 = vld [vmem:[%s881 + $0x10] sm:$0xf]
      %v887 = vld [vmem:[%s881 + $0x14] sm:$0xf]
      %v888 = vld [vmem:[%s881 + $0x18] sm:$0xf]
      %v889 = vld [vmem:[%s881 + $0x1c] sm:$0xf]
      %v890 = vld [vmem:[%s881 + $0x20] sm:$0xf]
      %v891 = vld [vmem:[%s881 + $0x24] sm:$0xf]
      %v892 = vld [vmem:[%s881 + $0x28] sm:$0xf]
      %v893 = vld [vmem:[%s881 + $0x2c] sm:$0xf]
      %v894 = vld [vmem:[%s881 + $0x30] sm:$0xf]
      %v895 = vld [vmem:[%s881 + $0x34] sm:$0xf]
      %v896 = vld [vmem:[%s881 + $0x38] sm:$0xf]
      %v897 = vld [vmem:[%s881 + $0x3c] sm:$0xf]
      %vm898 = vsmask.f32 7424
      %v900 = vshrl.u32 %v690, 16
      %v902 = vshll.u32 %v690, 16
      %v904 = vrot.slane %v902, 1
      %v905 = vor.u32 %v900, %v904
      %v907 = vshll.u32 %v558, 16
      %v909 = vrot.slane %v907, 1
      %v910 = vsel %vm898, %v905, %v909
      %v911 = vshrl.u32 %v558, 16
      %v913 = vor.u32 %v911, %v909
      %v915 = vshll.u32 %v566, 16
      %v917 = vrot.slane %v915, 1
      %v918 = vsel %vm898, %v913, %v917
      %v919 = vshrl.u32 %v566, 16
      %v921 = vor.u32 %v919, %v917
      %v923 = vshll.u32 %v574, 16
      %v925 = vrot.slane %v923, 1
      %v926 = vsel %vm898, %v921, %v925
      %v927 = vshrl.u32 %v574, 16
      %v929 = vor.u32 %v927, %v925
      %v931 = vshll.u32 %v582, 16
      %v933 = vrot.slane %v931, 1
      %v934 = vsel %vm898, %v929, %v933
      %v935 = vshrl.u32 %v582, 16
      %v937 = vor.u32 %v935, %v933
      %v939 = vshll.u32 %v590, 16
      %v941 = vrot.slane %v939, 1
      %v942 = vsel %vm898, %v937, %v941
      %v943 = vshrl.u32 %v590, 16
      %v945 = vor.u32 %v943, %v941
      %v947 = vshll.u32 %v598, 16
      %v949 = vrot.slane %v947, 1
      %v950 = vsel %vm898, %v945, %v949
      %v951 = vshrl.u32 %v598, 16
      %v953 = vor.u32 %v951, %v949
      %v955 = vshll.u32 %v606, 16
      %v957 = vrot.slane %v955, 1
      %v958 = vsel %vm898, %v953, %v957
      %v959 = vshrl.u32 %v606, 16
      %v961 = vor.u32 %v959, %v957
      %v963 = vshll.u32 %v614, 16
      %v965 = vrot.slane %v963, 1
      %v966 = vsel %vm898, %v961, %v965
      %v967 = vshrl.u32 %v614, 16
      %v969 = vor.u32 %v967, %v965
      %v971 = vshll.u32 %v622, 16
      %v973 = vrot.slane %v971, 1
      %v974 = vsel %vm898, %v969, %v973
      %v975 = vshrl.u32 %v622, 16
      %v977 = vor.u32 %v975, %v973
      %v979 = vshll.u32 %v630, 16
      %v981 = vrot.slane %v979, 1
      %v982 = vsel %vm898, %v977, %v981
      %v983 = vshrl.u32 %v630, 16
      %v985 = vor.u32 %v983, %v981
      %v987 = vshll.u32 %v638, 16
      %v989 = vrot.slane %v987, 1
      %v990 = vsel %vm898, %v985, %v989
      %v991 = vshrl.u32 %v638, 16
      %v993 = vor.u32 %v991, %v989
      %v995 = vshll.u32 %v646, 16
      %v997 = vrot.slane %v995, 1
      %v998 = vsel %vm898, %v993, %v997
      %v999 = vshrl.u32 %v646, 16
      %v1001 = vor.u32 %v999, %v997
      %v1003 = vshll.u32 %v654, 16
      %v1005 = vrot.slane %v1003, 1
      %v1006 = vsel %vm898, %v1001, %v1005
      %v1007 = vshrl.u32 %v654, 16
      %v1009 = vor.u32 %v1007, %v1005
      %v1011 = vshll.u32 %v662, 16
      %v1013 = vrot.slane %v1011, 1
      %v1014 = vsel %vm898, %v1009, %v1013
      %v1015 = vshrl.u32 %v662, 16
      %v1017 = vor.u32 %v1015, %v1013
      %v1019 = vshll.u32 %v670, 16
      %v1021 = vrot.slane %v1019, 1
      %v1022 = vsel %vm898, %v1017, %v1021
      %v1023 = vshrl.u32 %v670, 16
      %v1025 = vor.u32 %v1023, %v1021
      %v1027 = vshll.u32 %v691, 16
      %v1029 = vrot.slane %v1027, 1
      %v1030 = vsel %vm898, %v1025, %v1029
      %v1063 = vunpack.c.l.b16 %v882
      %v1064 = vunpack.c.l.b16 %v883
      %v1065 = vunpack.c.l.b16 %v884
      %v1066 = vunpack.c.l.b16 %v885
      %v1067 = vunpack.c.l.b16 %v886
      %v1068 = vunpack.c.l.b16 %v887
      %v1069 = vunpack.c.l.b16 %v888
      %v1070 = vunpack.c.l.b16 %v889
      %v1071 = vunpack.c.l.b16 %v890
      %v1072 = vunpack.c.l.b16 %v891
      %v1073 = vunpack.c.l.b16 %v892
      %v1074 = vunpack.c.l.b16 %v893
      %v1075 = vunpack.c.l.b16 %v894
      %v1076 = vunpack.c.l.b16 %v895
      %v1077 = vunpack.c.l.b16 %v896
      %v1078 = vunpack.c.l.b16 %v897
      %v1079 = vpack.c.b16 %v1064, %v1063
      %v1080 = vpack.c.b16 %v1066, %v1065
      %v1081 = vpack.c.b16 %v1068, %v1067
      %v1082 = vpack.c.b16 %v1070, %v1069
      %v1083 = vpack.c.b16 %v1072, %v1071
      %v1084 = vpack.c.b16 %v1074, %v1073
      %v1085 = vpack.c.b16 %v1076, %v1075
      %v1086 = vpack.c.b16 %v1078, %v1077
      %1095 = vmatpush.bf16.msra.mxu0 %v1086
      %1096 = vmatpush.bf16.msra.mxu0 %v1085
      %1097 = vmatpush.bf16.msra.mxu0 %v1084
      %1098 = vmatpush.bf16.msra.mxu0 %v1083
      %1099 = vmatpush.bf16.msra.mxu0 %v1082
      %1100 = vmatpush.bf16.msra.mxu0 %v1081
      %1101 = vmatpush.bf16.msra.mxu0 %v1080
      %1102 = vmatpush.bf16.msra.mxu0 %v1079
      %1103 = vmatmul.bf16.gmra.mxu0 %v910
      %v1104 = vpop.f32.mrf.mxu0
      %v1105 = vadd.f32 0.0, %v1104
      %v1106 = vpop.f32.mrf.mxu0
      %v1107 = vadd.f32 0.0, %v1106
      %1108 = vmatmul.bf16.gmra.mxu0 %v918
      %v1109 = vpop.f32.mrf.mxu0
      %v1110 = vadd.f32 0.0, %v1109
      %v1111 = vpop.f32.mrf.mxu0
      %v1112 = vadd.f32 0.0, %v1111
      %1113 = vmatmul.bf16.gmra.mxu0 %v926
      %v1114 = vpop.f32.mrf.mxu0
      %v1115 = vadd.f32 0.0, %v1114
      %v1116 = vpop.f32.mrf.mxu0
      %v1117 = vadd.f32 0.0, %v1116
      %1118 = vmatmul.bf16.gmra.mxu0 %v934
      %v1119 = vpop.f32.mrf.mxu0
      %v1120 = vadd.f32 0.0, %v1119
      %v1121 = vpop.f32.mrf.mxu0
      %v1122 = vadd.f32 0.0, %v1121
      %1123 = vmatmul.bf16.gmra.mxu0 %v942
      %v1124 = vpop.f32.mrf.mxu0
      %v1125 = vadd.f32 0.0, %v1124
      %v1126 = vpop.f32.mrf.mxu0
      %v1127 = vadd.f32 0.0, %v1126
      %1128 = vmatmul.bf16.gmra.mxu0 %v950
      %v1129 = vpop.f32.mrf.mxu0
      %v1130 = vadd.f32 0.0, %v1129
      %v1131 = vpop.f32.mrf.mxu0
      %v1132 = vadd.f32 0.0, %v1131
      %1133 = vmatmul.bf16.gmra.mxu0 %v958
      %v1134 = vpop.f32.mrf.mxu0
      %v1135 = vadd.f32 0.0, %v1134
      %v1136 = vpop.f32.mrf.mxu0
      %v1137 = vadd.f32 0.0, %v1136
      %1138 = vmatmul.bf16.gmra.mxu0 %v966
      %v1139 = vpop.f32.mrf.mxu0
      %v1140 = vadd.f32 0.0, %v1139
      %v1141 = vpop.f32.mrf.mxu0
      %v1142 = vadd.f32 0.0, %v1141
      %1143 = vmatmul.bf16.gmra.mxu0 %v974
      %v1144 = vpop.f32.mrf.mxu0
      %v1145 = vadd.f32 0.0, %v1144
      %v1146 = vpop.f32.mrf.mxu0
      %v1147 = vadd.f32 0.0, %v1146
      %1148 = vmatmul.bf16.gmra.mxu0 %v982
      %v1149 = vpop.f32.mrf.mxu0
      %v1150 = vadd.f32 0.0, %v1149
      %v1151 = vpop.f32.mrf.mxu0
      %v1152 = vadd.f32 0.0, %v1151
      %1153 = vmatmul.bf16.gmra.mxu0 %v990
      %v1154 = vpop.f32.mrf.mxu0
      %v1155 = vadd.f32 0.0, %v1154
      %v1156 = vpop.f32.mrf.mxu0
      %v1157 = vadd.f32 0.0, %v1156
      %1158 = vmatmul.bf16.gmra.mxu0 %v998
      %v1159 = vpop.f32.mrf.mxu0
      %v1160 = vadd.f32 0.0, %v1159
      %v1161 = vpop.f32.mrf.mxu0
      %v1162 = vadd.f32 0.0, %v1161
      %1163 = vmatmul.bf16.gmra.mxu0 %v1006
      %v1164 = vpop.f32.mrf.mxu0
      %v1165 = vadd.f32 0.0, %v1164
      %v1166 = vpop.f32.mrf.mxu0
      %v1167 = vadd.f32 0.0, %v1166
      %1168 = vmatmul.bf16.gmra.mxu0 %v1014
      %v1169 = vpop.f32.mrf.mxu0
      %v1170 = vadd.f32 0.0, %v1169
      %v1171 = vpop.f32.mrf.mxu0
      %v1172 = vadd.f32 0.0, %v1171
      %1173 = vmatmul.bf16.gmra.mxu0 %v1022
      %v1174 = vpop.f32.mrf.mxu0
      %v1175 = vadd.f32 0.0, %v1174
      %v1176 = vpop.f32.mrf.mxu0
      %v1177 = vadd.f32 0.0, %v1176
      %1178 = vmatmul.bf16.gmra.mxu0 %v1030
      %v1179 = vpop.f32.mrf.mxu0
      %v1180 = vadd.f32 0.0, %v1179
      %v1181 = vpop.f32.mrf.mxu0
      %v1182 = vadd.f32 0.0, %v1181
      %1183 = vdwg.mxu0
      %v1184 = vadd.f32 %v849, %v1105
      %v1185 = vadd.f32 %v850, %v1107
      %v1186 = vadd.f32 %v851, %v1110
      %v1187 = vadd.f32 %v852, %v1112
      %v1188 = vadd.f32 %v853, %v1115
      %v1189 = vadd.f32 %v854, %v1117
      %v1190 = vadd.f32 %v855, %v1120
      %v1191 = vadd.f32 %v856, %v1122
      %v1192 = vadd.f32 %v857, %v1125
      %v1193 = vadd.f32 %v858, %v1127
      %v1194 = vadd.f32 %v859, %v1130
      %v1195 = vadd.f32 %v860, %v1132
      %v1196 = vadd.f32 %v861, %v1135
      %v1197 = vadd.f32 %v862, %v1137
      %v1198 = vadd.f32 %v863, %v1140
      %v1199 = vadd.f32 %v864, %v1142
      %v1200 = vadd.f32 %v865, %v1145
      %v1201 = vadd.f32 %v866, %v1147
      %v1202 = vadd.f32 %v867, %v1150
      %v1203 = vadd.f32 %v868, %v1152
      %v1204 = vadd.f32 %v869, %v1155
      %v1205 = vadd.f32 %v870, %v1157
      %v1206 = vadd.f32 %v871, %v1160
      %v1207 = vadd.f32 %v872, %v1162
      %v1208 = vadd.f32 %v873, %v1165
      %v1209 = vadd.f32 %v874, %v1167
      %v1210 = vadd.f32 %v875, %v1170
      %v1211 = vadd.f32 %v876, %v1172
      %v1212 = vadd.f32 %v877, %v1175
      %v1213 = vadd.f32 %v878, %v1177
      %v1214 = vadd.f32 %v879, %v1180
      %v1215 = vadd.f32 %v880, %v1182
      %s1216 = scalar_lea.vmem %s2, 128
      %v1217 = vld [vmem:[%s1216] sm:$0xf]
      %v1218 = vld [vmem:[%s1216 + $0x4] sm:$0xf]
      %v1219 = vld [vmem:[%s1216 + $0x8] sm:$0xf]
      %v1220 = vld [vmem:[%s1216 + $0xc] sm:$0xf]
      %v1221 = vld [vmem:[%s1216 + $0x10] sm:$0xf]
      %v1222 = vld [vmem:[%s1216 + $0x14] sm:$0xf]
      %v1223 = vld [vmem:[%s1216 + $0x18] sm:$0xf]
      %v1224 = vld [vmem:[%s1216 + $0x1c] sm:$0xf]
      %v1225 = vld [vmem:[%s1216 + $0x20] sm:$0xf]
      %v1226 = vld [vmem:[%s1216 + $0x24] sm:$0xf]
      %v1227 = vld [vmem:[%s1216 + $0x28] sm:$0xf]
      %v1228 = vld [vmem:[%s1216 + $0x2c] sm:$0xf]
      %v1229 = vld [vmem:[%s1216 + $0x30] sm:$0xf]
      %v1230 = vld [vmem:[%s1216 + $0x34] sm:$0xf]
      %v1231 = vld [vmem:[%s1216 + $0x38] sm:$0xf]
      %v1232 = vld [vmem:[%s1216 + $0x3c] sm:$0xf]
      %vm1235 = vcmask 1046528
      %v1236 = vrot.slane %v690, 1
      %v1237 = vrot.slane %v558, 1
      %v1238 = vsel %vm1235, %v1236, %v1237
      %v1239 = vrot.slane %v566, 1
      %v1240 = vsel %vm1235, %v1237, %v1239
      %v1241 = vrot.slane %v574, 1
      %v1242 = vsel %vm1235, %v1239, %v1241
      %v1243 = vrot.slane %v582, 1
      %v1244 = vsel %vm1235, %v1241, %v1243
      %v1245 = vrot.slane %v590, 1
      %v1246 = vsel %vm1235, %v1243, %v1245
      %v1247 = vrot.slane %v598, 1
      %v1248 = vsel %vm1235, %v1245, %v1247
      %v1249 = vrot.slane %v606, 1
      %v1250 = vsel %vm1235, %v1247, %v1249
      %v1251 = vrot.slane %v614, 1
      %v1252 = vsel %vm1235, %v1249, %v1251
      %v1253 = vrot.slane %v622, 1
      %v1254 = vsel %vm1235, %v1251, %v1253
      %v1255 = vrot.slane %v630, 1
      %v1256 = vsel %vm1235, %v1253, %v1255
      %v1257 = vrot.slane %v638, 1
      %v1258 = vsel %vm1235, %v1255, %v1257
      %v1259 = vrot.slane %v646, 1
      %v1260 = vsel %vm1235, %v1257, %v1259
      %v1261 = vrot.slane %v654, 1
      %v1262 = vsel %vm1235, %v1259, %v1261
      %v1263 = vrot.slane %v662, 1
      %v1264 = vsel %vm1235, %v1261, %v1263
      %v1265 = vrot.slane %v670, 1
      %v1266 = vsel %vm1235, %v1263, %v1265
      %v1267 = vrot.slane %v691, 1
      %v1268 = vsel %vm1235, %v1265, %v1267
      %v1301 = vunpack.c.l.b16 %v1217
      %v1302 = vunpack.c.l.b16 %v1218
      %v1303 = vunpack.c.l.b16 %v1219
      %v1304 = vunpack.c.l.b16 %v1220
      %v1305 = vunpack.c.l.b16 %v1221
      %v1306 = vunpack.c.l.b16 %v1222
      %v1307 = vunpack.c.l.b16 %v1223
      %v1308 = vunpack.c.l.b16 %v1224
      %v1309 = vunpack.c.l.b16 %v1225
      %v1310 = vunpack.c.l.b16 %v1226
      %v1311 = vunpack.c.l.b16 %v1227
      %v1312 = vunpack.c.l.b16 %v1228
      %v1313 = vunpack.c.l.b16 %v1229
      %v1314 = vunpack.c.l.b16 %v1230
      %v1315 = vunpack.c.l.b16 %v1231
      %v1316 = vunpack.c.l.b16 %v1232
      %v1317 = vpack.c.b16 %v1302, %v1301
      %v1318 = vpack.c.b16 %v1304, %v1303
      %v1319 = vpack.c.b16 %v1306, %v1305
      %v1320 = vpack.c.b16 %v1308, %v1307
      %v1321 = vpack.c.b16 %v1310, %v1309
      %v1322 = vpack.c.b16 %v1312, %v1311
      %v1323 = vpack.c.b16 %v1314, %v1313
      %v1324 = vpack.c.b16 %v1316, %v1315
      %1333 = vmatpush.bf16.msra.mxu0 %v1324
      %1334 = vmatpush.bf16.msra.mxu0 %v1323
      %1335 = vmatpush.bf16.msra.mxu0 %v1322
      %1336 = vmatpush.bf16.msra.mxu0 %v1321
      %1337 = vmatpush.bf16.msra.mxu0 %v1320
      %1338 = vmatpush.bf16.msra.mxu0 %v1319
      %1339 = vmatpush.bf16.msra.mxu0 %v1318
      %1340 = vmatpush.bf16.msra.mxu0 %v1317
      %1341 = vmatmul.bf16.gmra.mxu0 %v1238
      %v1342 = vpop.f32.mrf.mxu0
      %v1343 = vadd.f32 0.0, %v1342
      %v1344 = vpop.f32.mrf.mxu0
      %v1345 = vadd.f32 0.0, %v1344
      %1346 = vmatmul.bf16.gmra.mxu0 %v1240
      %v1347 = vpop.f32.mrf.mxu0
      %v1348 = vadd.f32 0.0, %v1347
      %v1349 = vpop.f32.mrf.mxu0
      %v1350 = vadd.f32 0.0, %v1349
      %1351 = vmatmul.bf16.gmra.mxu0 %v1242
      %v1352 = vpop.f32.mrf.mxu0
      %v1353 = vadd.f32 0.0, %v1352
      %v1354 = vpop.f32.mrf.mxu0
      %v1355 = vadd.f32 0.0, %v1354
      %1356 = vmatmul.bf16.gmra.mxu0 %v1244
      %v1357 = vpop.f32.mrf.mxu0
      %v1358 = vadd.f32 0.0, %v1357
      %v1359 = vpop.f32.mrf.mxu0
      %v1360 = vadd.f32 0.0, %v1359
      %1361 = vmatmul.bf16.gmra.mxu0 %v1246
      %v1362 = vpop.f32.mrf.mxu0
      %v1363 = vadd.f32 0.0, %v1362
      %v1364 = vpop.f32.mrf.mxu0
      %v1365 = vadd.f32 0.0, %v1364
      %1366 = vmatmul.bf16.gmra.mxu0 %v1248
      %v1367 = vpop.f32.mrf.mxu0
      %v1368 = vadd.f32 0.0, %v1367
      %v1369 = vpop.f32.mrf.mxu0
      %v1370 = vadd.f32 0.0, %v1369
      %1371 = vmatmul.bf16.gmra.mxu0 %v1250
      %v1372 = vpop.f32.mrf.mxu0
      %v1373 = vadd.f32 0.0, %v1372
      %v1374 = vpop.f32.mrf.mxu0
      %v1375 = vadd.f32 0.0, %v1374
      %1376 = vmatmul.bf16.gmra.mxu0 %v1252
      %v1377 = vpop.f32.mrf.mxu0
      %v1378 = vadd.f32 0.0, %v1377
      %v1379 = vpop.f32.mrf.mxu0
      %v1380 = vadd.f32 0.0, %v1379
      %1381 = vmatmul.bf16.gmra.mxu0 %v1254
      %v1382 = vpop.f32.mrf.mxu0
      %v1383 = vadd.f32 0.0, %v1382
      %v1384 = vpop.f32.mrf.mxu0
      %v1385 = vadd.f32 0.0, %v1384
      %1386 = vmatmul.bf16.gmra.mxu0 %v1256
      %v1387 = vpop.f32.mrf.mxu0
      %v1388 = vadd.f32 0.0, %v1387
      %v1389 = vpop.f32.mrf.mxu0
      %v1390 = vadd.f32 0.0, %v1389
      %1391 = vmatmul.bf16.gmra.mxu0 %v1258
      %v1392 = vpop.f32.mrf.mxu0
      %v1393 = vadd.f32 0.0, %v1392
      %v1394 = vpop.f32.mrf.mxu0
      %v1395 = vadd.f32 0.0, %v1394
      %1396 = vmatmul.bf16.gmra.mxu0 %v1260
      %v1397 = vpop.f32.mrf.mxu0
      %v1398 = vadd.f32 0.0, %v1397
      %v1399 = vpop.f32.mrf.mxu0
      %v1400 = vadd.f32 0.0, %v1399
      %1401 = vmatmul.bf16.gmra.mxu0 %v1262
      %v1402 = vpop.f32.mrf.mxu0
      %v1403 = vadd.f32 0.0, %v1402
      %v1404 = vpop.f32.mrf.mxu0
      %v1405 = vadd.f32 0.0, %v1404
      %1406 = vmatmul.bf16.gmra.mxu0 %v1264
      %v1407 = vpop.f32.mrf.mxu0
      %v1408 = vadd.f32 0.0, %v1407
      %v1409 = vpop.f32.mrf.mxu0
      %v1410 = vadd.f32 0.0, %v1409
      %1411 = vmatmul.bf16.gmra.mxu0 %v1266
      %v1412 = vpop.f32.mrf.mxu0
      %v1413 = vadd.f32 0.0, %v1412
      %v1414 = vpop.f32.mrf.mxu0
      %v1415 = vadd.f32 0.0, %v1414
      %1416 = vmatmul.bf16.gmra.mxu0 %v1268
      %v1417 = vpop.f32.mrf.mxu0
      %v1418 = vadd.f32 0.0, %v1417
      %v1419 = vpop.f32.mrf.mxu0
      %v1420 = vadd.f32 0.0, %v1419
      %1421 = vdwg.mxu0
      %v1422 = vadd.f32 %v1184, %v1343
      %v1423 = vadd.f32 %v1185, %v1345
      %v1424 = vadd.f32 %v1186, %v1348
      %v1425 = vadd.f32 %v1187, %v1350
      %v1426 = vadd.f32 %v1188, %v1353
      %v1427 = vadd.f32 %v1189, %v1355
      %v1428 = vadd.f32 %v1190, %v1358
      %v1429 = vadd.f32 %v1191, %v1360
      %v1430 = vadd.f32 %v1192, %v1363
      %v1431 = vadd.f32 %v1193, %v1365
      %v1432 = vadd.f32 %v1194, %v1368
      %v1433 = vadd.f32 %v1195, %v1370
      %v1434 = vadd.f32 %v1196, %v1373
      %v1435 = vadd.f32 %v1197, %v1375
      %v1436 = vadd.f32 %v1198, %v1378
      %v1437 = vadd.f32 %v1199, %v1380
      %v1438 = vadd.f32 %v1200, %v1383
      %v1439 = vadd.f32 %v1201, %v1385
      %v1440 = vadd.f32 %v1202, %v1388
      %v1441 = vadd.f32 %v1203, %v1390
      %v1442 = vadd.f32 %v1204, %v1393
      %v1443 = vadd.f32 %v1205, %v1395
      %v1444 = vadd.f32 %v1206, %v1398
      %v1445 = vadd.f32 %v1207, %v1400
      %v1446 = vadd.f32 %v1208, %v1403
      %v1447 = vadd.f32 %v1209, %v1405
      %v1448 = vadd.f32 %v1210, %v1408
      %v1449 = vadd.f32 %v1211, %v1410
      %v1450 = vadd.f32 %v1212, %v1413
      %v1451 = vadd.f32 %v1213, %v1415
      %v1452 = vadd.f32 %v1214, %v1418
      %v1453 = vadd.f32 %v1215, %v1420
      %s1454 = scalar_lea.vmem %s2, 192
      %v1455 = vld [vmem:[%s1454] sm:$0xf]
      %v1456 = vld [vmem:[%s1454 + $0x4] sm:$0xf]
      %v1457 = vld [vmem:[%s1454 + $0x8] sm:$0xf]
      %v1458 = vld [vmem:[%s1454 + $0xc] sm:$0xf]
      %v1459 = vld [vmem:[%s1454 + $0x10] sm:$0xf]
      %v1460 = vld [vmem:[%s1454 + $0x14] sm:$0xf]
      %v1461 = vld [vmem:[%s1454 + $0x18] sm:$0xf]
      %v1462 = vld [vmem:[%s1454 + $0x1c] sm:$0xf]
      %v1463 = vld [vmem:[%s1454 + $0x20] sm:$0xf]
      %v1464 = vld [vmem:[%s1454 + $0x24] sm:$0xf]
      %v1465 = vld [vmem:[%s1454 + $0x28] sm:$0xf]
      %v1466 = vld [vmem:[%s1454 + $0x2c] sm:$0xf]
      %v1467 = vld [vmem:[%s1454 + $0x30] sm:$0xf]
      %v1468 = vld [vmem:[%s1454 + $0x34] sm:$0xf]
      %v1469 = vld [vmem:[%s1454 + $0x38] sm:$0xf]
      %v1470 = vld [vmem:[%s1454 + $0x3c] sm:$0xf]
      %vm1471 = vsmask.f32 6400
      %v1472 = vrot.slane %v900, 1
      %v1473 = vrot.slane %v902, 2
      %v1474 = vor.u32 %v1472, %v1473
      %v1475 = vrot.slane %v911, 1
      %v1476 = vrot.slane %v907, 2
      %v1477 = vor.u32 %v1475, %v1476
      %v1478 = vsel %vm1471, %v1474, %v1477
      %v1479 = vrot.slane %v919, 1
      %v1480 = vrot.slane %v915, 2
      %v1481 = vor.u32 %v1479, %v1480
      %v1482 = vsel %vm1471, %v1477, %v1481
      %v1483 = vrot.slane %v927, 1
      %v1484 = vrot.slane %v923, 2
      %v1485 = vor.u32 %v1483, %v1484
      %v1486 = vsel %vm1471, %v1481, %v1485
      %v1487 = vrot.slane %v935, 1
      %v1488 = vrot.slane %v931, 2
      %v1489 = vor.u32 %v1487, %v1488
      %v1490 = vsel %vm1471, %v1485, %v1489
      %v1491 = vrot.slane %v943, 1
      %v1492 = vrot.slane %v939, 2
      %v1493 = vor.u32 %v1491, %v1492
      %v1494 = vsel %vm1471, %v1489, %v1493
      %v1495 = vrot.slane %v951, 1
      %v1496 = vrot.slane %v947, 2
      %v1497 = vor.u32 %v1495, %v1496
      %v1498 = vsel %vm1471, %v1493, %v1497
      %v1499 = vrot.slane %v959, 1
      %v1500 = vrot.slane %v955, 2
      %v1501 = vor.u32 %v1499, %v1500
      %v1502 = vsel %vm1471, %v1497, %v1501
      %v1503 = vrot.slane %v967, 1
      %v1504 = vrot.slane %v963, 2
      %v1505 = vor.u32 %v1503, %v1504
      %v1506 = vsel %vm1471, %v1501, %v1505
      %v1507 = vrot.slane %v975, 1
      %v1508 = vrot.slane %v971, 2
      %v1509 = vor.u32 %v1507, %v1508
      %v1510 = vsel %vm1471, %v1505, %v1509
      %v1511 = vrot.slane %v983, 1
      %v1512 = vrot.slane %v979, 2
      %v1513 = vor.u32 %v1511, %v1512
      %v1514 = vsel %vm1471, %v1509, %v1513
      %v1515 = vrot.slane %v991, 1
      %v1516 = vrot.slane %v987, 2
      %v1517 = vor.u32 %v1515, %v1516
      %v1518 = vsel %vm1471, %v1513, %v1517
      %v1519 = vrot.slane %v999, 1
      %v1520 = vrot.slane %v995, 2
      %v1521 = vor.u32 %v1519, %v1520
      %v1522 = vsel %vm1471, %v1517, %v1521
      %v1523 = vrot.slane %v1007, 1
      %v1524 = vrot.slane %v1003, 2
      %v1525 = vor.u32 %v1523, %v1524
      %v1526 = vsel %vm1471, %v1521, %v1525
      %v1527 = vrot.slane %v1015, 1
      %v1528 = vrot.slane %v1011, 2
      %v1529 = vor.u32 %v1527, %v1528
      %v1530 = vsel %vm1471, %v1525, %v1529
      %v1531 = vrot.slane %v1023, 1
      %v1532 = vrot.slane %v1019, 2
      %v1533 = vor.u32 %v1531, %v1532
      %v1534 = vsel %vm1471, %v1529, %v1533
      %v1535 = vshrl.u32 %v691, 16
      %v1537 = vrot.slane %v1535, 1
      %v1538 = vrot.slane %v1027, 2
      %v1539 = vor.u32 %v1537, %v1538
      %v1540 = vsel %vm1471, %v1533, %v1539
      %v1573 = vunpack.c.l.b16 %v1455
      %v1574 = vunpack.c.l.b16 %v1456
      %v1575 = vunpack.c.l.b16 %v1457
      %v1576 = vunpack.c.l.b16 %v1458
      %v1577 = vunpack.c.l.b16 %v1459
      %v1578 = vunpack.c.l.b16 %v1460
      %v1579 = vunpack.c.l.b16 %v1461
      %v1580 = vunpack.c.l.b16 %v1462
      %v1581 = vunpack.c.l.b16 %v1463
      %v1582 = vunpack.c.l.b16 %v1464
      %v1583 = vunpack.c.l.b16 %v1465
      %v1584 = vunpack.c.l.b16 %v1466
      %v1585 = vunpack.c.l.b16 %v1467
      %v1586 = vunpack.c.l.b16 %v1468
      %v1587 = vunpack.c.l.b16 %v1469
      %v1588 = vunpack.c.l.b16 %v1470
      %v1589 = vpack.c.b16 %v1574, %v1573
      %v1590 = vpack.c.b16 %v1576, %v1575
      %v1591 = vpack.c.b16 %v1578, %v1577
      %v1592 = vpack.c.b16 %v1580, %v1579
      %v1593 = vpack.c.b16 %v1582, %v1581
      %v1594 = vpack.c.b16 %v1584, %v1583
      %v1595 = vpack.c.b16 %v1586, %v1585
      %v1596 = vpack.c.b16 %v1588, %v1587
      %1605 = vmatpush.bf16.msra.mxu0 %v1596
      %1606 = vmatpush.bf16.msra.mxu0 %v1595
      %1607 = vmatpush.bf16.msra.mxu0 %v1594
      %1608 = vmatpush.bf16.msra.mxu0 %v1593
      %1609 = vmatpush.bf16.msra.mxu0 %v1592
      %1610 = vmatpush.bf16.msra.mxu0 %v1591
      %1611 = vmatpush.bf16.msra.mxu0 %v1590
      %1612 = vmatpush.bf16.msra.mxu0 %v1589
      %1613 = vmatmul.bf16.gmra.mxu0 %v1478
      %v1614 = vpop.f32.mrf.mxu0
      %v1615 = vadd.f32 0.0, %v1614
      %v1616 = vpop.f32.mrf.mxu0
      %v1617 = vadd.f32 0.0, %v1616
      %1618 = vmatmul.bf16.gmra.mxu0 %v1482
      %v1619 = vpop.f32.mrf.mxu0
      %v1620 = vadd.f32 0.0, %v1619
      %v1621 = vpop.f32.mrf.mxu0
      %v1622 = vadd.f32 0.0, %v1621
      %1623 = vmatmul.bf16.gmra.mxu0 %v1486
      %v1624 = vpop.f32.mrf.mxu0
      %v1625 = vadd.f32 0.0, %v1624
      %v1626 = vpop.f32.mrf.mxu0
      %v1627 = vadd.f32 0.0, %v1626
      %1628 = vmatmul.bf16.gmra.mxu0 %v1490
      %v1629 = vpop.f32.mrf.mxu0
      %v1630 = vadd.f32 0.0, %v1629
      %v1631 = vpop.f32.mrf.mxu0
      %v1632 = vadd.f32 0.0, %v1631
      %1633 = vmatmul.bf16.gmra.mxu0 %v1494
      %v1634 = vpop.f32.mrf.mxu0
      %v1635 = vadd.f32 0.0, %v1634
      %v1636 = vpop.f32.mrf.mxu0
      %v1637 = vadd.f32 0.0, %v1636
      %1638 = vmatmul.bf16.gmra.mxu0 %v1498
      %v1639 = vpop.f32.mrf.mxu0
      %v1640 = vadd.f32 0.0, %v1639
      %v1641 = vpop.f32.mrf.mxu0
      %v1642 = vadd.f32 0.0, %v1641
      %1643 = vmatmul.bf16.gmra.mxu0 %v1502
      %v1644 = vpop.f32.mrf.mxu0
      %v1645 = vadd.f32 0.0, %v1644
      %v1646 = vpop.f32.mrf.mxu0
      %v1647 = vadd.f32 0.0, %v1646
      %1648 = vmatmul.bf16.gmra.mxu0 %v1506
      %v1649 = vpop.f32.mrf.mxu0
      %v1650 = vadd.f32 0.0, %v1649
      %v1651 = vpop.f32.mrf.mxu0
      %v1652 = vadd.f32 0.0, %v1651
      %1653 = vmatmul.bf16.gmra.mxu0 %v1510
      %v1654 = vpop.f32.mrf.mxu0
      %v1655 = vadd.f32 0.0, %v1654
      %v1656 = vpop.f32.mrf.mxu0
      %v1657 = vadd.f32 0.0, %v1656
      %1658 = vmatmul.bf16.gmra.mxu0 %v1514
      %v1659 = vpop.f32.mrf.mxu0
      %v1660 = vadd.f32 0.0, %v1659
      %v1661 = vpop.f32.mrf.mxu0
      %v1662 = vadd.f32 0.0, %v1661
      %1663 = vmatmul.bf16.gmra.mxu0 %v1518
      %v1664 = vpop.f32.mrf.mxu0
      %v1665 = vadd.f32 0.0, %v1664
      %v1666 = vpop.f32.mrf.mxu0
      %v1667 = vadd.f32 0.0, %v1666
      %1668 = vmatmul.bf16.gmra.mxu0 %v1522
      %v1669 = vpop.f32.mrf.mxu0
      %v1670 = vadd.f32 0.0, %v1669
      %v1671 = vpop.f32.mrf.mxu0
      %v1672 = vadd.f32 0.0, %v1671
      %1673 = vmatmul.bf16.gmra.mxu0 %v1526
      %v1674 = vpop.f32.mrf.mxu0
      %v1675 = vadd.f32 0.0, %v1674
      %v1676 = vpop.f32.mrf.mxu0
      %v1677 = vadd.f32 0.0, %v1676
      %1678 = vmatmul.bf16.gmra.mxu0 %v1530
      %v1679 = vpop.f32.mrf.mxu0
      %v1680 = vadd.f32 0.0, %v1679
      %v1681 = vpop.f32.mrf.mxu0
      %v1682 = vadd.f32 0.0, %v1681
      %1683 = vmatmul.bf16.gmra.mxu0 %v1534
      %v1684 = vpop.f32.mrf.mxu0
      %v1685 = vadd.f32 0.0, %v1684
      %v1686 = vpop.f32.mrf.mxu0
      %v1687 = vadd.f32 0.0, %v1686
      %1688 = vmatmul.bf16.gmra.mxu0 %v1540
      %v1689 = vpop.f32.mrf.mxu0
      %v1690 = vadd.f32 0.0, %v1689
      %v1691 = vpop.f32.mrf.mxu0
      %v1692 = vadd.f32 0.0, %v1691
      %1693 = vdwg.mxu0
      %v1694 = vadd.f32 %v1422, %v1615
      %v1695 = vadd.f32 %v1423, %v1617
      %v1696 = vadd.f32 %v1424, %v1620
      %v1697 = vadd.f32 %v1425, %v1622
      %v1698 = vadd.f32 %v1426, %v1625
      %v1699 = vadd.f32 %v1427, %v1627
      %v1700 = vadd.f32 %v1428, %v1630
      %v1701 = vadd.f32 %v1429, %v1632
      %v1702 = vadd.f32 %v1430, %v1635
      %v1703 = vadd.f32 %v1431, %v1637
      %v1704 = vadd.f32 %v1432, %v1640
      %v1705 = vadd.f32 %v1433, %v1642
      %v1706 = vadd.f32 %v1434, %v1645
      %v1707 = vadd.f32 %v1435, %v1647
      %v1708 = vadd.f32 %v1436, %v1650
      %v1709 = vadd.f32 %v1437, %v1652
      %v1710 = vadd.f32 %v1438, %v1655
      %v1711 = vadd.f32 %v1439, %v1657
      %v1712 = vadd.f32 %v1440, %v1660
      %v1713 = vadd.f32 %v1441, %v1662
      %v1714 = vadd.f32 %v1442, %v1665
      %v1715 = vadd.f32 %v1443, %v1667
      %v1716 = vadd.f32 %v1444, %v1670
      %v1717 = vadd.f32 %v1445, %v1672
      %v1718 = vadd.f32 %v1446, %v1675
      %v1719 = vadd.f32 %v1447, %v1677
      %v1720 = vadd.f32 %v1448, %v1680
      %v1721 = vadd.f32 %v1449, %v1682
      %v1722 = vadd.f32 %v1450, %v1685
      %v1723 = vadd.f32 %v1451, %v1687
      %v1724 = vadd.f32 %v1452, %v1690
      %v1725 = vadd.f32 %v1453, %v1692
      %v1726 = vpack.c.bf16 %v1695, %v1694
      %v1727 = vpack.c.bf16 %v1697, %v1696
      %v1728 = vpack.c.bf16 %v1699, %v1698
      %v1729 = vpack.c.bf16 %v1701, %v1700
      %v1730 = vpack.c.bf16 %v1703, %v1702
      %v1731 = vpack.c.bf16 %v1705, %v1704
      %v1732 = vpack.c.bf16 %v1707, %v1706
      %v1733 = vpack.c.bf16 %v1709, %v1708
      %v1734 = vpack.c.bf16 %v1711, %v1710
      %v1735 = vpack.c.bf16 %v1713, %v1712
      %v1736 = vpack.c.bf16 %v1715, %v1714
      %v1737 = vpack.c.bf16 %v1717, %v1716
      %v1738 = vpack.c.bf16 %v1719, %v1718
      %v1739 = vpack.c.bf16 %v1721, %v1720
      %v1740 = vpack.c.bf16 %v1723, %v1722
      %v1741 = vpack.c.bf16 %v1725, %v1724
      %v1742 = vld [vmem:[%s4] sm:$0xf]
      %v1743 = vld [vmem:[%s4 + $0x4] sm:$0xf]
      %v1744 = vld [vmem:[%s4 + $0x8] sm:$0xf]
      %v1745 = vld [vmem:[%s4 + $0xc] sm:$0xf]
      %v1746 = vld [vmem:[%s4 + $0x10] sm:$0xf]
      %v1747 = vld [vmem:[%s4 + $0x14] sm:$0xf]
      %v1748 = vld [vmem:[%s4 + $0x18] sm:$0xf]
      %v1749 = vld [vmem:[%s4 + $0x1c] sm:$0xf]
      %v1750 = vld [vmem:[%s4 + $0x20] sm:$0xf]
      %v1751 = vld [vmem:[%s4 + $0x24] sm:$0xf]
      %v1752 = vld [vmem:[%s4 + $0x28] sm:$0xf]
      %v1753 = vld [vmem:[%s4 + $0x2c] sm:$0xf]
      %v1754 = vld [vmem:[%s4 + $0x30] sm:$0xf]
      %v1755 = vld [vmem:[%s4 + $0x34] sm:$0xf]
      %v1756 = vld [vmem:[%s4 + $0x38] sm:$0xf]
      %v1757 = vld [vmem:[%s4 + $0x3c] sm:$0xf]
      %v1758 = vld [vmem:[%s5] sm:$0x1]
      %v1760 = vperm.slane %v1758, 0
      %v1778 = vunpack.c.l.b16 %v1742
      %v1779 = vunpack.c.l.b16 %v1743
      %v1780 = vunpack.c.l.b16 %v1744
      %v1781 = vunpack.c.l.b16 %v1745
      %v1782 = vunpack.c.l.b16 %v1746
      %v1783 = vunpack.c.l.b16 %v1747
      %v1784 = vunpack.c.l.b16 %v1748
      %v1785 = vunpack.c.l.b16 %v1749
      %v1786 = vunpack.c.l.b16 %v1750
      %v1787 = vunpack.c.l.b16 %v1751
      %v1788 = vunpack.c.l.b16 %v1752
      %v1789 = vunpack.c.l.b16 %v1753
      %v1790 = vunpack.c.l.b16 %v1754
      %v1791 = vunpack.c.l.b16 %v1755
      %v1792 = vunpack.c.l.b16 %v1756
      %v1793 = vunpack.c.l.b16 %v1757
      %v1794 = vpack.c.b16 %v1779, %v1778
      %v1795 = vpack.c.b16 %v1781, %v1780
      %v1796 = vpack.c.b16 %v1783, %v1782
      %v1797 = vpack.c.b16 %v1785, %v1784
      %v1798 = vpack.c.b16 %v1787, %v1786
      %v1799 = vpack.c.b16 %v1789, %v1788
      %v1800 = vpack.c.b16 %v1791, %v1790
      %v1801 = vpack.c.b16 %v1793, %v1792
      %1810 = vmatpush.bf16.msra.mxu0 %v1801
      %1811 = vmatpush.bf16.msra.mxu0 %v1800
      %1812 = vmatpush.bf16.msra.mxu0 %v1799
      %1813 = vmatpush.bf16.msra.mxu0 %v1798
      %1814 = vmatpush.bf16.msra.mxu0 %v1797
      %1815 = vmatpush.bf16.msra.mxu0 %v1796
      %1816 = vmatpush.bf16.msra.mxu0 %v1795
      %1817 = vmatpush.bf16.msra.mxu0 %v1794
      %1818 = vmatmul.bf16.gmra.mxu0 %v1726
      %v1819 = vpop.f32.mrf.mxu0
      %v1820 = vadd.f32 %v1760, %v1819
      %v1821 = vpop.f32.mrf.mxu0
      %v1822 = vadd.f32 %v1760, %v1821
      %1823 = vmatmul.bf16.gmra.mxu0 %v1727
      %v1824 = vpop.f32.mrf.mxu0
      %v1825 = vadd.f32 %v1760, %v1824
      %v1826 = vpop.f32.mrf.mxu0
      %v1827 = vadd.f32 %v1760, %v1826
      %1828 = vmatmul.bf16.gmra.mxu0 %v1728
      %v1829 = vpop.f32.mrf.mxu0
      %v1830 = vadd.f32 %v1760, %v1829
      %v1831 = vpop.f32.mrf.mxu0
      %v1832 = vadd.f32 %v1760, %v1831
      %1833 = vmatmul.bf16.gmra.mxu0 %v1729
      %v1834 = vpop.f32.mrf.mxu0
      %v1835 = vadd.f32 %v1760, %v1834
      %v1836 = vpop.f32.mrf.mxu0
      %v1837 = vadd.f32 %v1760, %v1836
      %1838 = vmatmul.bf16.gmra.mxu0 %v1730
      %v1839 = vpop.f32.mrf.mxu0
      %v1840 = vadd.f32 %v1760, %v1839
      %v1841 = vpop.f32.mrf.mxu0
      %v1842 = vadd.f32 %v1760, %v1841
      %1843 = vmatmul.bf16.gmra.mxu0 %v1731
      %v1844 = vpop.f32.mrf.mxu0
      %v1845 = vadd.f32 %v1760, %v1844
      %v1846 = vpop.f32.mrf.mxu0
      %v1847 = vadd.f32 %v1760, %v1846
      %1848 = vmatmul.bf16.gmra.mxu0 %v1732
      %v1849 = vpop.f32.mrf.mxu0
      %v1850 = vadd.f32 %v1760, %v1849
      %v1851 = vpop.f32.mrf.mxu0
      %v1852 = vadd.f32 %v1760, %v1851
      %1853 = vmatmul.bf16.gmra.mxu0 %v1733
      %v1854 = vpop.f32.mrf.mxu0
      %v1855 = vadd.f32 %v1760, %v1854
      %v1856 = vpop.f32.mrf.mxu0
      %v1857 = vadd.f32 %v1760, %v1856
      %1858 = vmatmul.bf16.gmra.mxu0 %v1734
      %v1859 = vpop.f32.mrf.mxu0
      %v1860 = vadd.f32 %v1760, %v1859
      %v1861 = vpop.f32.mrf.mxu0
      %v1862 = vadd.f32 %v1760, %v1861
      %1863 = vmatmul.bf16.gmra.mxu0 %v1735
      %v1864 = vpop.f32.mrf.mxu0
      %v1865 = vadd.f32 %v1760, %v1864
      %v1866 = vpop.f32.mrf.mxu0
      %v1867 = vadd.f32 %v1760, %v1866
      %1868 = vmatmul.bf16.gmra.mxu0 %v1736
      %v1869 = vpop.f32.mrf.mxu0
      %v1870 = vadd.f32 %v1760, %v1869
      %v1871 = vpop.f32.mrf.mxu0
      %v1872 = vadd.f32 %v1760, %v1871
      %1873 = vmatmul.bf16.gmra.mxu0 %v1737
      %v1874 = vpop.f32.mrf.mxu0
      %v1875 = vadd.f32 %v1760, %v1874
      %v1876 = vpop.f32.mrf.mxu0
      %v1877 = vadd.f32 %v1760, %v1876
      %1878 = vmatmul.bf16.gmra.mxu0 %v1738
      %v1879 = vpop.f32.mrf.mxu0
      %v1880 = vadd.f32 %v1760, %v1879
      %v1881 = vpop.f32.mrf.mxu0
      %v1882 = vadd.f32 %v1760, %v1881
      %1883 = vmatmul.bf16.gmra.mxu0 %v1739
      %v1884 = vpop.f32.mrf.mxu0
      %v1885 = vadd.f32 %v1760, %v1884
      %v1886 = vpop.f32.mrf.mxu0
      %v1887 = vadd.f32 %v1760, %v1886
      %1888 = vmatmul.bf16.gmra.mxu0 %v1740
      %v1889 = vpop.f32.mrf.mxu0
      %v1890 = vadd.f32 %v1760, %v1889
      %v1891 = vpop.f32.mrf.mxu0
      %v1892 = vadd.f32 %v1760, %v1891
      %1893 = vmatmul.bf16.gmra.mxu0 %v1741
      %v1894 = vpop.f32.mrf.mxu0
      %v1895 = vadd.f32 %v1760, %v1894
      %v1896 = vpop.f32.mrf.mxu0
      %v1897 = vadd.f32 %v1760, %v1896
      %1898 = vdwg.mxu0
      %v1899 = vxor.u32 %v1820, 2147483648
      %v1900 = vxor.u32 %v1822, 2147483648
      %v1901 = vxor.u32 %v1825, 2147483648
      %v1902 = vxor.u32 %v1827, 2147483648
      %v1903 = vxor.u32 %v1830, 2147483648
      %v1904 = vxor.u32 %v1832, 2147483648
      %v1905 = vxor.u32 %v1835, 2147483648
      %v1906 = vxor.u32 %v1837, 2147483648
      %v1907 = vxor.u32 %v1840, 2147483648
      %v1908 = vxor.u32 %v1842, 2147483648
      %v1909 = vxor.u32 %v1845, 2147483648
      %v1910 = vxor.u32 %v1847, 2147483648
      %v1911 = vxor.u32 %v1850, 2147483648
      %v1912 = vxor.u32 %v1852, 2147483648
      %v1913 = vxor.u32 %v1855, 2147483648
      %v1914 = vxor.u32 %v1857, 2147483648
      %v1915 = vxor.u32 %v1860, 2147483648
      %v1916 = vxor.u32 %v1862, 2147483648
      %v1917 = vxor.u32 %v1865, 2147483648
      %v1918 = vxor.u32 %v1867, 2147483648
      %v1919 = vxor.u32 %v1870, 2147483648
      %v1920 = vxor.u32 %v1872, 2147483648
      %v1921 = vxor.u32 %v1875, 2147483648
      %v1922 = vxor.u32 %v1877, 2147483648
      %v1923 = vxor.u32 %v1880, 2147483648
      %v1924 = vxor.u32 %v1882, 2147483648
      %v1925 = vxor.u32 %v1885, 2147483648
      %v1926 = vxor.u32 %v1887, 2147483648
      %v1927 = vxor.u32 %v1890, 2147483648
      %v1928 = vxor.u32 %v1892, 2147483648
      %v1929 = vxor.u32 %v1895, 2147483648
      %v1930 = vxor.u32 %v1897, 2147483648
      %v1931 = vmul.f32 %v1899, 1.442695
      %v1932 = vpow.pop %v1931
      %v1933 = vmul.f32 %v1900, 1.442695
      %v1934 = vpow.pop %v1933
      %v1935 = vmul.f32 %v1901, 1.442695
      %v1936 = vpow.pop %v1935
      %v1937 = vmul.f32 %v1902, 1.442695
      %v1938 = vpow.pop %v1937
      %v1939 = vmul.f32 %v1903, 1.442695
      %v1940 = vpow.pop %v1939
      %v1941 = vmul.f32 %v1904, 1.442695
      %v1942 = vpow.pop %v1941
      %v1943 = vmul.f32 %v1905, 1.442695
      %v1944 = vpow.pop %v1943
      %v1945 = vmul.f32 %v1906, 1.442695
      %v1946 = vpow.pop %v1945
      %v1947 = vmul.f32 %v1907, 1.442695
      %v1948 = vpow.pop %v1947
      %v1949 = vmul.f32 %v1908, 1.442695
      %v1950 = vpow.pop %v1949
      %v1951 = vmul.f32 %v1909, 1.442695
      %v1952 = vpow.pop %v1951
      %v1953 = vmul.f32 %v1910, 1.442695
      %v1954 = vpow.pop %v1953
      %v1955 = vmul.f32 %v1911, 1.442695
      %v1956 = vpow.pop %v1955
      %v1957 = vmul.f32 %v1912, 1.442695
      %v1958 = vpow.pop %v1957
      %v1959 = vmul.f32 %v1913, 1.442695
      %v1960 = vpow.pop %v1959
      %v1961 = vmul.f32 %v1914, 1.442695
      %v1962 = vpow.pop %v1961
      %v1963 = vmul.f32 %v1915, 1.442695
      %v1964 = vpow.pop %v1963
      %v1965 = vmul.f32 %v1916, 1.442695
      %v1966 = vpow.pop %v1965
      %v1967 = vmul.f32 %v1917, 1.442695
      %v1968 = vpow.pop %v1967
      %v1969 = vmul.f32 %v1918, 1.442695
      %v1970 = vpow.pop %v1969
      %v1971 = vmul.f32 %v1919, 1.442695
      %v1972 = vpow.pop %v1971
      %v1973 = vmul.f32 %v1920, 1.442695
      %v1974 = vpow.pop %v1973
      %v1975 = vmul.f32 %v1921, 1.442695
      %v1976 = vpow.pop %v1975
      %v1977 = vmul.f32 %v1922, 1.442695
      %v1978 = vpow.pop %v1977
      %v1979 = vmul.f32 %v1923, 1.442695
      %v1980 = vpow.pop %v1979
      %v1981 = vmul.f32 %v1924, 1.442695
      %v1982 = vpow.pop %v1981
      %v1983 = vmul.f32 %v1925, 1.442695
      %v1984 = vpow.pop %v1983
      %v1985 = vmul.f32 %v1926, 1.442695
      %v1986 = vpow.pop %v1985
      %v1987 = vmul.f32 %v1927, 1.442695
      %v1988 = vpow.pop %v1987
      %v1989 = vmul.f32 %v1928, 1.442695
      %v1990 = vpow.pop %v1989
      %v1991 = vmul.f32 %v1929, 1.442695
      %v1992 = vpow.pop %v1991
      %v1993 = vmul.f32 %v1930, 1.442695
      %v1994 = vpow.pop %v1993
      %v1995 = vadd.f32 %v1932, 1.0
      %v1996 = vadd.f32 %v1934, 1.0
      %v1997 = vadd.f32 %v1936, 1.0
      %v1998 = vadd.f32 %v1938, 1.0
      %v1999 = vadd.f32 %v1940, 1.0
      %v2000 = vadd.f32 %v1942, 1.0
      %v2001 = vadd.f32 %v1944, 1.0
      %v2002 = vadd.f32 %v1946, 1.0
      %v2003 = vadd.f32 %v1948, 1.0
      %v2004 = vadd.f32 %v1950, 1.0
      %v2005 = vadd.f32 %v1952, 1.0
      %v2006 = vadd.f32 %v1954, 1.0
      %v2007 = vadd.f32 %v1956, 1.0
      %v2008 = vadd.f32 %v1958, 1.0
      %v2009 = vadd.f32 %v1960, 1.0
      %v2010 = vadd.f32 %v1962, 1.0
      %v2011 = vadd.f32 %v1964, 1.0
      %v2012 = vadd.f32 %v1966, 1.0
      %v2013 = vadd.f32 %v1968, 1.0
      %v2014 = vadd.f32 %v1970, 1.0
      %v2015 = vadd.f32 %v1972, 1.0
      %v2016 = vadd.f32 %v1974, 1.0
      %v2017 = vadd.f32 %v1976, 1.0
      %v2018 = vadd.f32 %v1978, 1.0
      %v2019 = vadd.f32 %v1980, 1.0
      %v2020 = vadd.f32 %v1982, 1.0
      %v2021 = vadd.f32 %v1984, 1.0
      %v2022 = vadd.f32 %v1986, 1.0
      %v2023 = vadd.f32 %v1988, 1.0
      %v2024 = vadd.f32 %v1990, 1.0
      %v2025 = vadd.f32 %v1992, 1.0
      %v2026 = vadd.f32 %v1994, 1.0
      %v2027 = vrcp.pop %v1995
      %v2028 = vmul.f32 %v1995, %v2027
      %v2029 = vsub.f32 1.0, %v2028
      %v2030 = vmul.f32 %v2027, %v2029
      %v2031 = vadd.f32 %v2027, %v2030
      %vm2032 = vweird.f32 %v1995
      %vm2033 = vweird.f32 %v2027
      %vm2034 = vmor %vm2032, %vm2033
      %v2035 = vsel %vm2034, %v2027, %v2031
      %v2036 = vand.u32 2147483647, %v1995
      %vm2037 = vcmp.eq.f32.partialorder %v2036, 8.507059e+37
      %v2038 = vand.u32 %v1995, 2147483648
      %v2039 = vor.u32 1.1754944e-38, %v2038
      %v2040 = vsel %vm2037, %v2039, %v2035
      %v2041 = vmul.f32 1.0, %v2040
      %v2042 = vrcp.pop %v1996
      %v2043 = vmul.f32 %v1996, %v2042
      %v2044 = vsub.f32 1.0, %v2043
      %v2045 = vmul.f32 %v2042, %v2044
      %v2046 = vadd.f32 %v2042, %v2045
      %vm2047 = vweird.f32 %v1996
      %vm2048 = vweird.f32 %v2042
      %vm2049 = vmor %vm2047, %vm2048
      %v2050 = vsel %vm2049, %v2042, %v2046
      %v2051 = vand.u32 2147483647, %v1996
      %vm2052 = vcmp.eq.f32.partialorder %v2051, 8.507059e+37
      %v2053 = vand.u32 %v1996, 2147483648
      %v2054 = vor.u32 1.1754944e-38, %v2053
      %v2055 = vsel %vm2052, %v2054, %v2050
      %v2056 = vmul.f32 1.0, %v2055
      %v2057 = vrcp.pop %v1997
      %v2058 = vmul.f32 %v1997, %v2057
      %v2059 = vsub.f32 1.0, %v2058
      %v2060 = vmul.f32 %v2057, %v2059
      %v2061 = vadd.f32 %v2057, %v2060
      %vm2062 = vweird.f32 %v1997
      %vm2063 = vweird.f32 %v2057
      %vm2064 = vmor %vm2062, %vm2063
      %v2065 = vsel %vm2064, %v2057, %v2061
      %v2066 = vand.u32 2147483647, %v1997
      %vm2067 = vcmp.eq.f32.partialorder %v2066, 8.507059e+37
      %v2068 = vand.u32 %v1997, 2147483648
      %v2069 = vor.u32 1.1754944e-38, %v2068
      %v2070 = vsel %vm2067, %v2069, %v2065
      %v2071 = vmul.f32 1.0, %v2070
      %v2072 = vrcp.pop %v1998
      %v2073 = vmul.f32 %v1998, %v2072
      %v2074 = vsub.f32 1.0, %v2073
      %v2075 = vmul.f32 %v2072, %v2074
      %v2076 = vadd.f32 %v2072, %v2075
      %vm2077 = vweird.f32 %v1998
      %vm2078 = vweird.f32 %v2072
      %vm2079 = vmor %vm2077, %vm2078
      %v2080 = vsel %vm2079, %v2072, %v2076
      %v2081 = vand.u32 2147483647, %v1998
      %vm2082 = vcmp.eq.f32.partialorder %v2081, 8.507059e+37
      %v2083 = vand.u32 %v1998, 2147483648
      %v2084 = vor.u32 1.1754944e-38, %v2083
      %v2085 = vsel %vm2082, %v2084, %v2080
      %v2086 = vmul.f32 1.0, %v2085
      %v2087 = vrcp.pop %v1999
      %v2088 = vmul.f32 %v1999, %v2087
      %v2089 = vsub.f32 1.0, %v2088
      %v2090 = vmul.f32 %v2087, %v2089
      %v2091 = vadd.f32 %v2087, %v2090
      %vm2092 = vweird.f32 %v1999
      %vm2093 = vweird.f32 %v2087
      %vm2094 = vmor %vm2092, %vm2093
      %v2095 = vsel %vm2094, %v2087, %v2091
      %v2096 = vand.u32 2147483647, %v1999
      %vm2097 = vcmp.eq.f32.partialorder %v2096, 8.507059e+37
      %v2098 = vand.u32 %v1999, 2147483648
      %v2099 = vor.u32 1.1754944e-38, %v2098
      %v2100 = vsel %vm2097, %v2099, %v2095
      %v2101 = vmul.f32 1.0, %v2100
      %v2102 = vrcp.pop %v2000
      %v2103 = vmul.f32 %v2000, %v2102
      %v2104 = vsub.f32 1.0, %v2103
      %v2105 = vmul.f32 %v2102, %v2104
      %v2106 = vadd.f32 %v2102, %v2105
      %vm2107 = vweird.f32 %v2000
      %vm2108 = vweird.f32 %v2102
      %vm2109 = vmor %vm2107, %vm2108
      %v2110 = vsel %vm2109, %v2102, %v2106
      %v2111 = vand.u32 2147483647, %v2000
      %vm2112 = vcmp.eq.f32.partialorder %v2111, 8.507059e+37
      %v2113 = vand.u32 %v2000, 2147483648
      %v2114 = vor.u32 1.1754944e-38, %v2113
      %v2115 = vsel %vm2112, %v2114, %v2110
      %v2116 = vmul.f32 1.0, %v2115
      %v2117 = vrcp.pop %v2001
      %v2118 = vmul.f32 %v2001, %v2117
      %v2119 = vsub.f32 1.0, %v2118
      %v2120 = vmul.f32 %v2117, %v2119
      %v2121 = vadd.f32 %v2117, %v2120
      %vm2122 = vweird.f32 %v2001
      %vm2123 = vweird.f32 %v2117
      %vm2124 = vmor %vm2122, %vm2123
      %v2125 = vsel %vm2124, %v2117, %v2121
      %v2126 = vand.u32 2147483647, %v2001
      %vm2127 = vcmp.eq.f32.partialorder %v2126, 8.507059e+37
      %v2128 = vand.u32 %v2001, 2147483648
      %v2129 = vor.u32 1.1754944e-38, %v2128
      %v2130 = vsel %vm2127, %v2129, %v2125
      %v2131 = vmul.f32 1.0, %v2130
      %v2132 = vrcp.pop %v2002
      %v2133 = vmul.f32 %v2002, %v2132
      %v2134 = vsub.f32 1.0, %v2133
      %v2135 = vmul.f32 %v2132, %v2134
      %v2136 = vadd.f32 %v2132, %v2135
      %vm2137 = vweird.f32 %v2002
      %vm2138 = vweird.f32 %v2132
      %vm2139 = vmor %vm2137, %vm2138
      %v2140 = vsel %vm2139, %v2132, %v2136
      %v2141 = vand.u32 2147483647, %v2002
      %vm2142 = vcmp.eq.f32.partialorder %v2141, 8.507059e+37
      %v2143 = vand.u32 %v2002, 2147483648
      %v2144 = vor.u32 1.1754944e-38, %v2143
      %v2145 = vsel %vm2142, %v2144, %v2140
      %v2146 = vmul.f32 1.0, %v2145
      %v2147 = vrcp.pop %v2003
      %v2148 = vmul.f32 %v2003, %v2147
      %v2149 = vsub.f32 1.0, %v2148
      %v2150 = vmul.f32 %v2147, %v2149
      %v2151 = vadd.f32 %v2147, %v2150
      %vm2152 = vweird.f32 %v2003
      %vm2153 = vweird.f32 %v2147
      %vm2154 = vmor %vm2152, %vm2153
      %v2155 = vsel %vm2154, %v2147, %v2151
      %v2156 = vand.u32 2147483647, %v2003
      %vm2157 = vcmp.eq.f32.partialorder %v2156, 8.507059e+37
      %v2158 = vand.u32 %v2003, 2147483648
      %v2159 = vor.u32 1.1754944e-38, %v2158
      %v2160 = vsel %vm2157, %v2159, %v2155
      %v2161 = vmul.f32 1.0, %v2160
      %v2162 = vrcp.pop %v2004
      %v2163 = vmul.f32 %v2004, %v2162
      %v2164 = vsub.f32 1.0, %v2163
      %v2165 = vmul.f32 %v2162, %v2164
      %v2166 = vadd.f32 %v2162, %v2165
      %vm2167 = vweird.f32 %v2004
      %vm2168 = vweird.f32 %v2162
      %vm2169 = vmor %vm2167, %vm2168
      %v2170 = vsel %vm2169, %v2162, %v2166
      %v2171 = vand.u32 2147483647, %v2004
      %vm2172 = vcmp.eq.f32.partialorder %v2171, 8.507059e+37
      %v2173 = vand.u32 %v2004, 2147483648
      %v2174 = vor.u32 1.1754944e-38, %v2173
      %v2175 = vsel %vm2172, %v2174, %v2170
      %v2176 = vmul.f32 1.0, %v2175
      %v2177 = vrcp.pop %v2005
      %v2178 = vmul.f32 %v2005, %v2177
      %v2179 = vsub.f32 1.0, %v2178
      %v2180 = vmul.f32 %v2177, %v2179
      %v2181 = vadd.f32 %v2177, %v2180
      %vm2182 = vweird.f32 %v2005
      %vm2183 = vweird.f32 %v2177
      %vm2184 = vmor %vm2182, %vm2183
      %v2185 = vsel %vm2184, %v2177, %v2181
      %v2186 = vand.u32 2147483647, %v2005
      %vm2187 = vcmp.eq.f32.partialorder %v2186, 8.507059e+37
      %v2188 = vand.u32 %v2005, 2147483648
      %v2189 = vor.u32 1.1754944e-38, %v2188
      %v2190 = vsel %vm2187, %v2189, %v2185
      %v2191 = vmul.f32 1.0, %v2190
      %v2192 = vrcp.pop %v2006
      %v2193 = vmul.f32 %v2006, %v2192
      %v2194 = vsub.f32 1.0, %v2193
      %v2195 = vmul.f32 %v2192, %v2194
      %v2196 = vadd.f32 %v2192, %v2195
      %vm2197 = vweird.f32 %v2006
      %vm2198 = vweird.f32 %v2192
      %vm2199 = vmor %vm2197, %vm2198
      %v2200 = vsel %vm2199, %v2192, %v2196
      %v2201 = vand.u32 2147483647, %v2006
      %vm2202 = vcmp.eq.f32.partialorder %v2201, 8.507059e+37
      %v2203 = vand.u32 %v2006, 2147483648
      %v2204 = vor.u32 1.1754944e-38, %v2203
      %v2205 = vsel %vm2202, %v2204, %v2200
      %v2206 = vmul.f32 1.0, %v2205
      %v2207 = vrcp.pop %v2007
      %v2208 = vmul.f32 %v2007, %v2207
      %v2209 = vsub.f32 1.0, %v2208
      %v2210 = vmul.f32 %v2207, %v2209
      %v2211 = vadd.f32 %v2207, %v2210
      %vm2212 = vweird.f32 %v2007
      %vm2213 = vweird.f32 %v2207
      %vm2214 = vmor %vm2212, %vm2213
      %v2215 = vsel %vm2214, %v2207, %v2211
      %v2216 = vand.u32 2147483647, %v2007
      %vm2217 = vcmp.eq.f32.partialorder %v2216, 8.507059e+37
      %v2218 = vand.u32 %v2007, 2147483648
      %v2219 = vor.u32 1.1754944e-38, %v2218
      %v2220 = vsel %vm2217, %v2219, %v2215
      %v2221 = vmul.f32 1.0, %v2220
      %v2222 = vrcp.pop %v2008
      %v2223 = vmul.f32 %v2008, %v2222
      %v2224 = vsub.f32 1.0, %v2223
      %v2225 = vmul.f32 %v2222, %v2224
      %v2226 = vadd.f32 %v2222, %v2225
      %vm2227 = vweird.f32 %v2008
      %vm2228 = vweird.f32 %v2222
      %vm2229 = vmor %vm2227, %vm2228
      %v2230 = vsel %vm2229, %v2222, %v2226
      %v2231 = vand.u32 2147483647, %v2008
      %vm2232 = vcmp.eq.f32.partialorder %v2231, 8.507059e+37
      %v2233 = vand.u32 %v2008, 2147483648
      %v2234 = vor.u32 1.1754944e-38, %v2233
      %v2235 = vsel %vm2232, %v2234, %v2230
      %v2236 = vmul.f32 1.0, %v2235
      %v2237 = vrcp.pop %v2009
      %v2238 = vmul.f32 %v2009, %v2237
      %v2239 = vsub.f32 1.0, %v2238
      %v2240 = vmul.f32 %v2237, %v2239
      %v2241 = vadd.f32 %v2237, %v2240
      %vm2242 = vweird.f32 %v2009
      %vm2243 = vweird.f32 %v2237
      %vm2244 = vmor %vm2242, %vm2243
      %v2245 = vsel %vm2244, %v2237, %v2241
      %v2246 = vand.u32 2147483647, %v2009
      %vm2247 = vcmp.eq.f32.partialorder %v2246, 8.507059e+37
      %v2248 = vand.u32 %v2009, 2147483648
      %v2249 = vor.u32 1.1754944e-38, %v2248
      %v2250 = vsel %vm2247, %v2249, %v2245
      %v2251 = vmul.f32 1.0, %v2250
      %v2252 = vrcp.pop %v2010
      %v2253 = vmul.f32 %v2010, %v2252
      %v2254 = vsub.f32 1.0, %v2253
      %v2255 = vmul.f32 %v2252, %v2254
      %v2256 = vadd.f32 %v2252, %v2255
      %vm2257 = vweird.f32 %v2010
      %vm2258 = vweird.f32 %v2252
      %vm2259 = vmor %vm2257, %vm2258
      %v2260 = vsel %vm2259, %v2252, %v2256
      %v2261 = vand.u32 2147483647, %v2010
      %vm2262 = vcmp.eq.f32.partialorder %v2261, 8.507059e+37
      %v2263 = vand.u32 %v2010, 2147483648
      %v2264 = vor.u32 1.1754944e-38, %v2263
      %v2265 = vsel %vm2262, %v2264, %v2260
      %v2266 = vmul.f32 1.0, %v2265
      %v2267 = vrcp.pop %v2011
      %v2268 = vmul.f32 %v2011, %v2267
      %v2269 = vsub.f32 1.0, %v2268
      %v2270 = vmul.f32 %v2267, %v2269
      %v2271 = vadd.f32 %v2267, %v2270
      %vm2272 = vweird.f32 %v2011
      %vm2273 = vweird.f32 %v2267
      %vm2274 = vmor %vm2272, %vm2273
      %v2275 = vsel %vm2274, %v2267, %v2271
      %v2276 = vand.u32 2147483647, %v2011
      %vm2277 = vcmp.eq.f32.partialorder %v2276, 8.507059e+37
      %v2278 = vand.u32 %v2011, 2147483648
      %v2279 = vor.u32 1.1754944e-38, %v2278
      %v2280 = vsel %vm2277, %v2279, %v2275
      %v2281 = vmul.f32 1.0, %v2280
      %v2282 = vrcp.pop %v2012
      %v2283 = vmul.f32 %v2012, %v2282
      %v2284 = vsub.f32 1.0, %v2283
      %v2285 = vmul.f32 %v2282, %v2284
      %v2286 = vadd.f32 %v2282, %v2285
      %vm2287 = vweird.f32 %v2012
      %vm2288 = vweird.f32 %v2282
      %vm2289 = vmor %vm2287, %vm2288
      %v2290 = vsel %vm2289, %v2282, %v2286
      %v2291 = vand.u32 2147483647, %v2012
      %vm2292 = vcmp.eq.f32.partialorder %v2291, 8.507059e+37
      %v2293 = vand.u32 %v2012, 2147483648
      %v2294 = vor.u32 1.1754944e-38, %v2293
      %v2295 = vsel %vm2292, %v2294, %v2290
      %v2296 = vmul.f32 1.0, %v2295
      %v2297 = vrcp.pop %v2013
      %v2298 = vmul.f32 %v2013, %v2297
      %v2299 = vsub.f32 1.0, %v2298
      %v2300 = vmul.f32 %v2297, %v2299
      %v2301 = vadd.f32 %v2297, %v2300
      %vm2302 = vweird.f32 %v2013
      %vm2303 = vweird.f32 %v2297
      %vm2304 = vmor %vm2302, %vm2303
      %v2305 = vsel %vm2304, %v2297, %v2301
      %v2306 = vand.u32 2147483647, %v2013
      %vm2307 = vcmp.eq.f32.partialorder %v2306, 8.507059e+37
      %v2308 = vand.u32 %v2013, 2147483648
      %v2309 = vor.u32 1.1754944e-38, %v2308
      %v2310 = vsel %vm2307, %v2309, %v2305
      %v2311 = vmul.f32 1.0, %v2310
      %v2312 = vrcp.pop %v2014
      %v2313 = vmul.f32 %v2014, %v2312
      %v2314 = vsub.f32 1.0, %v2313
      %v2315 = vmul.f32 %v2312, %v2314
      %v2316 = vadd.f32 %v2312, %v2315
      %vm2317 = vweird.f32 %v2014
      %vm2318 = vweird.f32 %v2312
      %vm2319 = vmor %vm2317, %vm2318
      %v2320 = vsel %vm2319, %v2312, %v2316
      %v2321 = vand.u32 2147483647, %v2014
      %vm2322 = vcmp.eq.f32.partialorder %v2321, 8.507059e+37
      %v2323 = vand.u32 %v2014, 2147483648
      %v2324 = vor.u32 1.1754944e-38, %v2323
      %v2325 = vsel %vm2322, %v2324, %v2320
      %v2326 = vmul.f32 1.0, %v2325
      %v2327 = vrcp.pop %v2015
      %v2328 = vmul.f32 %v2015, %v2327
      %v2329 = vsub.f32 1.0, %v2328
      %v2330 = vmul.f32 %v2327, %v2329
      %v2331 = vadd.f32 %v2327, %v2330
      %vm2332 = vweird.f32 %v2015
      %vm2333 = vweird.f32 %v2327
      %vm2334 = vmor %vm2332, %vm2333
      %v2335 = vsel %vm2334, %v2327, %v2331
      %v2336 = vand.u32 2147483647, %v2015
      %vm2337 = vcmp.eq.f32.partialorder %v2336, 8.507059e+37
      %v2338 = vand.u32 %v2015, 2147483648
      %v2339 = vor.u32 1.1754944e-38, %v2338
      %v2340 = vsel %vm2337, %v2339, %v2335
      %v2341 = vmul.f32 1.0, %v2340
      %v2342 = vrcp.pop %v2016
      %v2343 = vmul.f32 %v2016, %v2342
      %v2344 = vsub.f32 1.0, %v2343
      %v2345 = vmul.f32 %v2342, %v2344
      %v2346 = vadd.f32 %v2342, %v2345
      %vm2347 = vweird.f32 %v2016
      %vm2348 = vweird.f32 %v2342
      %vm2349 = vmor %vm2347, %vm2348
      %v2350 = vsel %vm2349, %v2342, %v2346
      %v2351 = vand.u32 2147483647, %v2016
      %vm2352 = vcmp.eq.f32.partialorder %v2351, 8.507059e+37
      %v2353 = vand.u32 %v2016, 2147483648
      %v2354 = vor.u32 1.1754944e-38, %v2353
      %v2355 = vsel %vm2352, %v2354, %v2350
      %v2356 = vmul.f32 1.0, %v2355
      %v2357 = vrcp.pop %v2017
      %v2358 = vmul.f32 %v2017, %v2357
      %v2359 = vsub.f32 1.0, %v2358
      %v2360 = vmul.f32 %v2357, %v2359
      %v2361 = vadd.f32 %v2357, %v2360
      %vm2362 = vweird.f32 %v2017
      %vm2363 = vweird.f32 %v2357
      %vm2364 = vmor %vm2362, %vm2363
      %v2365 = vsel %vm2364, %v2357, %v2361
      %v2366 = vand.u32 2147483647, %v2017
      %vm2367 = vcmp.eq.f32.partialorder %v2366, 8.507059e+37
      %v2368 = vand.u32 %v2017, 2147483648
      %v2369 = vor.u32 1.1754944e-38, %v2368
      %v2370 = vsel %vm2367, %v2369, %v2365
      %v2371 = vmul.f32 1.0, %v2370
      %v2372 = vrcp.pop %v2018
      %v2373 = vmul.f32 %v2018, %v2372
      %v2374 = vsub.f32 1.0, %v2373
      %v2375 = vmul.f32 %v2372, %v2374
      %v2376 = vadd.f32 %v2372, %v2375
      %vm2377 = vweird.f32 %v2018
      %vm2378 = vweird.f32 %v2372
      %vm2379 = vmor %vm2377, %vm2378
      %v2380 = vsel %vm2379, %v2372, %v2376
      %v2381 = vand.u32 2147483647, %v2018
      %vm2382 = vcmp.eq.f32.partialorder %v2381, 8.507059e+37
      %v2383 = vand.u32 %v2018, 2147483648
      %v2384 = vor.u32 1.1754944e-38, %v2383
      %v2385 = vsel %vm2382, %v2384, %v2380
      %v2386 = vmul.f32 1.0, %v2385
      %v2387 = vrcp.pop %v2019
      %v2388 = vmul.f32 %v2019, %v2387
      %v2389 = vsub.f32 1.0, %v2388
      %v2390 = vmul.f32 %v2387, %v2389
      %v2391 = vadd.f32 %v2387, %v2390
      %vm2392 = vweird.f32 %v2019
      %vm2393 = vweird.f32 %v2387
      %vm2394 = vmor %vm2392, %vm2393
      %v2395 = vsel %vm2394, %v2387, %v2391
      %v2396 = vand.u32 2147483647, %v2019
      %vm2397 = vcmp.eq.f32.partialorder %v2396, 8.507059e+37
      %v2398 = vand.u32 %v2019, 2147483648
      %v2399 = vor.u32 1.1754944e-38, %v2398
      %v2400 = vsel %vm2397, %v2399, %v2395
      %v2401 = vmul.f32 1.0, %v2400
      %v2402 = vrcp.pop %v2020
      %v2403 = vmul.f32 %v2020, %v2402
      %v2404 = vsub.f32 1.0, %v2403
      %v2405 = vmul.f32 %v2402, %v2404
      %v2406 = vadd.f32 %v2402, %v2405
      %vm2407 = vweird.f32 %v2020
      %vm2408 = vweird.f32 %v2402
      %vm2409 = vmor %vm2407, %vm2408
      %v2410 = vsel %vm2409, %v2402, %v2406
      %v2411 = vand.u32 2147483647, %v2020
      %vm2412 = vcmp.eq.f32.partialorder %v2411, 8.507059e+37
      %v2413 = vand.u32 %v2020, 2147483648
      %v2414 = vor.u32 1.1754944e-38, %v2413
      %v2415 = vsel %vm2412, %v2414, %v2410
      %v2416 = vmul.f32 1.0, %v2415
      %v2417 = vrcp.pop %v2021
      %v2418 = vmul.f32 %v2021, %v2417
      %v2419 = vsub.f32 1.0, %v2418
      %v2420 = vmul.f32 %v2417, %v2419
      %v2421 = vadd.f32 %v2417, %v2420
      %vm2422 = vweird.f32 %v2021
      %vm2423 = vweird.f32 %v2417
      %vm2424 = vmor %vm2422, %vm2423
      %v2425 = vsel %vm2424, %v2417, %v2421
      %v2426 = vand.u32 2147483647, %v2021
      %vm2427 = vcmp.eq.f32.partialorder %v2426, 8.507059e+37
      %v2428 = vand.u32 %v2021, 2147483648
      %v2429 = vor.u32 1.1754944e-38, %v2428
      %v2430 = vsel %vm2427, %v2429, %v2425
      %v2431 = vmul.f32 1.0, %v2430
      %v2432 = vrcp.pop %v2022
      %v2433 = vmul.f32 %v2022, %v2432
      %v2434 = vsub.f32 1.0, %v2433
      %v2435 = vmul.f32 %v2432, %v2434
      %v2436 = vadd.f32 %v2432, %v2435
      %vm2437 = vweird.f32 %v2022
      %vm2438 = vweird.f32 %v2432
      %vm2439 = vmor %vm2437, %vm2438
      %v2440 = vsel %vm2439, %v2432, %v2436
      %v2441 = vand.u32 2147483647, %v2022
      %vm2442 = vcmp.eq.f32.partialorder %v2441, 8.507059e+37
      %v2443 = vand.u32 %v2022, 2147483648
      %v2444 = vor.u32 1.1754944e-38, %v2443
      %v2445 = vsel %vm2442, %v2444, %v2440
      %v2446 = vmul.f32 1.0, %v2445
      %v2447 = vrcp.pop %v2023
      %v2448 = vmul.f32 %v2023, %v2447
      %v2449 = vsub.f32 1.0, %v2448
      %v2450 = vmul.f32 %v2447, %v2449
      %v2451 = vadd.f32 %v2447, %v2450
      %vm2452 = vweird.f32 %v2023
      %vm2453 = vweird.f32 %v2447
      %vm2454 = vmor %vm2452, %vm2453
      %v2455 = vsel %vm2454, %v2447, %v2451
      %v2456 = vand.u32 2147483647, %v2023
      %vm2457 = vcmp.eq.f32.partialorder %v2456, 8.507059e+37
      %v2458 = vand.u32 %v2023, 2147483648
      %v2459 = vor.u32 1.1754944e-38, %v2458
      %v2460 = vsel %vm2457, %v2459, %v2455
      %v2461 = vmul.f32 1.0, %v2460
      %v2462 = vrcp.pop %v2024
      %v2463 = vmul.f32 %v2024, %v2462
      %v2464 = vsub.f32 1.0, %v2463
      %v2465 = vmul.f32 %v2462, %v2464
      %v2466 = vadd.f32 %v2462, %v2465
      %vm2467 = vweird.f32 %v2024
      %vm2468 = vweird.f32 %v2462
      %vm2469 = vmor %vm2467, %vm2468
      %v2470 = vsel %vm2469, %v2462, %v2466
      %v2471 = vand.u32 2147483647, %v2024
      %vm2472 = vcmp.eq.f32.partialorder %v2471, 8.507059e+37
      %v2473 = vand.u32 %v2024, 2147483648
      %v2474 = vor.u32 1.1754944e-38, %v2473
      %v2475 = vsel %vm2472, %v2474, %v2470
      %v2476 = vmul.f32 1.0, %v2475
      %v2477 = vrcp.pop %v2025
      %v2478 = vmul.f32 %v2025, %v2477
      %v2479 = vsub.f32 1.0, %v2478
      %v2480 = vmul.f32 %v2477, %v2479
      %v2481 = vadd.f32 %v2477, %v2480
      %vm2482 = vweird.f32 %v2025
      %vm2483 = vweird.f32 %v2477
      %vm2484 = vmor %vm2482, %vm2483
      %v2485 = vsel %vm2484, %v2477, %v2481
      %v2486 = vand.u32 2147483647, %v2025
      %vm2487 = vcmp.eq.f32.partialorder %v2486, 8.507059e+37
      %v2488 = vand.u32 %v2025, 2147483648
      %v2489 = vor.u32 1.1754944e-38, %v2488
      %v2490 = vsel %vm2487, %v2489, %v2485
      %v2491 = vmul.f32 1.0, %v2490
      %v2492 = vrcp.pop %v2026
      %v2493 = vmul.f32 %v2026, %v2492
      %v2494 = vsub.f32 1.0, %v2493
      %v2495 = vmul.f32 %v2492, %v2494
      %v2496 = vadd.f32 %v2492, %v2495
      %vm2497 = vweird.f32 %v2026
      %vm2498 = vweird.f32 %v2492
      %vm2499 = vmor %vm2497, %vm2498
      %v2500 = vsel %vm2499, %v2492, %v2496
      %v2501 = vand.u32 2147483647, %v2026
      %vm2502 = vcmp.eq.f32.partialorder %v2501, 8.507059e+37
      %v2503 = vand.u32 %v2026, 2147483648
      %v2504 = vor.u32 1.1754944e-38, %v2503
      %v2505 = vsel %vm2502, %v2504, %v2500
      %v2506 = vmul.f32 1.0, %v2505
      %v2507 = vmul.f32 %v1694, %v2041
      %v2508 = vmul.f32 %v1695, %v2056
      %v2509 = vmul.f32 %v1696, %v2071
      %v2510 = vmul.f32 %v1697, %v2086
      %v2511 = vmul.f32 %v1698, %v2101
      %v2512 = vmul.f32 %v1699, %v2116
      %v2513 = vmul.f32 %v1700, %v2131
      %v2514 = vmul.f32 %v1701, %v2146
      %v2515 = vmul.f32 %v1702, %v2161
      %v2516 = vmul.f32 %v1703, %v2176
      %v2517 = vmul.f32 %v1704, %v2191
      %v2518 = vmul.f32 %v1705, %v2206
      %v2519 = vmul.f32 %v1706, %v2221
      %v2520 = vmul.f32 %v1707, %v2236
      %v2521 = vmul.f32 %v1708, %v2251
      %v2522 = vmul.f32 %v1709, %v2266
      %v2523 = vmul.f32 %v1710, %v2281
      %v2524 = vmul.f32 %v1711, %v2296
      %v2525 = vmul.f32 %v1712, %v2311
      %v2526 = vmul.f32 %v1713, %v2326
      %v2527 = vmul.f32 %v1714, %v2341
      %v2528 = vmul.f32 %v1715, %v2356
      %v2529 = vmul.f32 %v1716, %v2371
      %v2530 = vmul.f32 %v1717, %v2386
      %v2531 = vmul.f32 %v1718, %v2401
      %v2532 = vmul.f32 %v1719, %v2416
      %v2533 = vmul.f32 %v1720, %v2431
      %v2534 = vmul.f32 %v1721, %v2446
      %v2535 = vmul.f32 %v1722, %v2461
      %v2536 = vmul.f32 %v1723, %v2476
      %v2537 = vmul.f32 %v1724, %v2491
      %v2538 = vmul.f32 %v1725, %v2506
      %v2539 = vpack.c.bf16 %v2508, %v2507
      %v2540 = vpack.c.bf16 %v2510, %v2509
      %v2541 = vpack.c.bf16 %v2512, %v2511
      %v2542 = vpack.c.bf16 %v2514, %v2513
      %v2543 = vpack.c.bf16 %v2516, %v2515
      %v2544 = vpack.c.bf16 %v2518, %v2517
      %v2545 = vpack.c.bf16 %v2520, %v2519
      %v2546 = vpack.c.bf16 %v2522, %v2521
      %v2547 = vpack.c.bf16 %v2524, %v2523
      %v2548 = vpack.c.bf16 %v2526, %v2525
      %v2549 = vpack.c.bf16 %v2528, %v2527
      %v2550 = vpack.c.bf16 %v2530, %v2529
      %v2551 = vpack.c.bf16 %v2532, %v2531
      %v2552 = vpack.c.bf16 %v2534, %v2533
      %v2553 = vpack.c.bf16 %v2536, %v2535
      %v2554 = vpack.c.bf16 %v2538, %v2537
      %v2555 = vld [vmem:[%s6] sm:$0xff]
      %v2556 = vld [vmem:[%s6 + $0x8] sm:$0xff]
      %v2557 = vld [vmem:[%s6 + $0x10] sm:$0xff]
      %v2558 = vld [vmem:[%s6 + $0x18] sm:$0xff]
      %v2559 = vld [vmem:[%s6 + $0x20] sm:$0xff]
      %v2560 = vld [vmem:[%s6 + $0x28] sm:$0xff]
      %v2561 = vld [vmem:[%s6 + $0x30] sm:$0xff]
      %v2562 = vld [vmem:[%s6 + $0x38] sm:$0xff]
      %v2563 = vld [vmem:[%s6 + $0x40] sm:$0xff]
      %v2564 = vld [vmem:[%s6 + $0x48] sm:$0xff]
      %v2565 = vld [vmem:[%s6 + $0x50] sm:$0xff]
      %v2566 = vld [vmem:[%s6 + $0x58] sm:$0xff]
      %v2567 = vld [vmem:[%s6 + $0x60] sm:$0xff]
      %v2568 = vld [vmem:[%s6 + $0x68] sm:$0xff]
      %v2569 = vld [vmem:[%s6 + $0x70] sm:$0xff]
      %v2570 = vld [vmem:[%s6 + $0x78] sm:$0xff]
      %v2571 = vld [vmem:[%s7] sm:$0x3]
      %v2573 = vperm.slane %v2571, 0
      %v2574 = vperm.slane %v2571, 1
      %v2593 = vunpack.c.l.b16 %v2555
      %v2594 = vunpack.c.h.b16 %v2555
      %v2595 = vunpack.c.l.b16 %v2556
      %v2596 = vunpack.c.h.b16 %v2556
      %v2597 = vunpack.c.l.b16 %v2557
      %v2598 = vunpack.c.h.b16 %v2557
      %v2599 = vunpack.c.l.b16 %v2558
      %v2600 = vunpack.c.h.b16 %v2558
      %v2601 = vunpack.c.l.b16 %v2559
      %v2602 = vunpack.c.h.b16 %v2559
      %v2603 = vunpack.c.l.b16 %v2560
      %v2604 = vunpack.c.h.b16 %v2560
      %v2605 = vunpack.c.l.b16 %v2561
      %v2606 = vunpack.c.h.b16 %v2561
      %v2607 = vunpack.c.l.b16 %v2562
      %v2608 = vunpack.c.h.b16 %v2562
      %v2609 = vunpack.c.l.b16 %v2563
      %v2610 = vunpack.c.h.b16 %v2563
      %v2611 = vunpack.c.l.b16 %v2564
      %v2612 = vunpack.c.h.b16 %v2564
      %v2613 = vunpack.c.l.b16 %v2565
      %v2614 = vunpack.c.h.b16 %v2565
      %v2615 = vunpack.c.l.b16 %v2566
      %v2616 = vunpack.c.h.b16 %v2566
      %v2617 = vunpack.c.l.b16 %v2567
      %v2618 = vunpack.c.h.b16 %v2567
      %v2619 = vunpack.c.l.b16 %v2568
      %v2620 = vunpack.c.h.b16 %v2568
      %v2621 = vunpack.c.l.b16 %v2569
      %v2622 = vunpack.c.h.b16 %v2569
      %v2623 = vunpack.c.l.b16 %v2570
      %v2624 = vunpack.c.h.b16 %v2570
      %v2625 = vpack.c.b16 %v2595, %v2593
      %v2626 = vpack.c.b16 %v2596, %v2594
      %v2627 = vpack.c.b16 %v2599, %v2597
      %v2628 = vpack.c.b16 %v2600, %v2598
      %v2629 = vpack.c.b16 %v2603, %v2601
      %v2630 = vpack.c.b16 %v2604, %v2602
      %v2631 = vpack.c.b16 %v2607, %v2605
      %v2632 = vpack.c.b16 %v2608, %v2606
      %v2633 = vpack.c.b16 %v2611, %v2609
      %v2634 = vpack.c.b16 %v2612, %v2610
      %v2635 = vpack.c.b16 %v2615, %v2613
      %v2636 = vpack.c.b16 %v2616, %v2614
      %v2637 = vpack.c.b16 %v2619, %v2617
      %v2638 = vpack.c.b16 %v2620, %v2618
      %v2639 = vpack.c.b16 %v2623, %v2621
      %v2640 = vpack.c.b16 %v2624, %v2622
      %2657 = vmatpush.bf16.msra.mxu0 %v2639
      %2658 = vmatpush.bf16.msra.mxu0 %v2637
      %2659 = vmatpush.bf16.msra.mxu0 %v2635
      %2660 = vmatpush.bf16.msra.mxu0 %v2633
      %2661 = vmatpush.bf16.msra.mxu0 %v2631
      %2662 = vmatpush.bf16.msra.mxu0 %v2629
      %2663 = vmatpush.bf16.msra.mxu0 %v2627
      %2664 = vmatpush.bf16.msra.mxu0 %v2625
      %2665 = vmatmul.bf16.gmra.mxu0 %v2539
      %v2666 = vpop.f32.mrf.mxu0
      %v2667 = vadd.f32 %v2573, %v2666
      %v2668 = vpop.f32.mrf.mxu0
      %v2669 = vadd.f32 %v2573, %v2668
      %2670 = vmatmul.bf16.gmra.mxu0 %v2540
      %v2671 = vpop.f32.mrf.mxu0
      %v2672 = vadd.f32 %v2573, %v2671
      %v2673 = vpop.f32.mrf.mxu0
      %v2674 = vadd.f32 %v2573, %v2673
      %2675 = vmatmul.bf16.gmra.mxu0 %v2541
      %v2676 = vpop.f32.mrf.mxu0
      %v2677 = vadd.f32 %v2573, %v2676
      %v2678 = vpop.f32.mrf.mxu0
      %v2679 = vadd.f32 %v2573, %v2678
      %2680 = vmatmul.bf16.gmra.mxu0 %v2542
      %v2681 = vpop.f32.mrf.mxu0
      %v2682 = vadd.f32 %v2573, %v2681
      %v2683 = vpop.f32.mrf.mxu0
      %v2684 = vadd.f32 %v2573, %v2683
      %2685 = vmatmul.bf16.gmra.mxu0 %v2543
      %v2686 = vpop.f32.mrf.mxu0
      %v2687 = vadd.f32 %v2573, %v2686
      %v2688 = vpop.f32.mrf.mxu0
      %v2689 = vadd.f32 %v2573, %v2688
      %2690 = vmatmul.bf16.gmra.mxu0 %v2544
      %v2691 = vpop.f32.mrf.mxu0
      %v2692 = vadd.f32 %v2573, %v2691
      %v2693 = vpop.f32.mrf.mxu0
      %v2694 = vadd.f32 %v2573, %v2693
      %2695 = vmatmul.bf16.gmra.mxu0 %v2545
      %v2696 = vpop.f32.mrf.mxu0
      %v2697 = vadd.f32 %v2573, %v2696
      %v2698 = vpop.f32.mrf.mxu0
      %v2699 = vadd.f32 %v2573, %v2698
      %2700 = vmatmul.bf16.gmra.mxu0 %v2546
      %v2701 = vpop.f32.mrf.mxu0
      %v2702 = vadd.f32 %v2573, %v2701
      %v2703 = vpop.f32.mrf.mxu0
      %v2704 = vadd.f32 %v2573, %v2703
      %2705 = vmatmul.bf16.gmra.mxu0 %v2547
      %v2706 = vpop.f32.mrf.mxu0
      %v2707 = vadd.f32 %v2573, %v2706
      %v2708 = vpop.f32.mrf.mxu0
      %v2709 = vadd.f32 %v2573, %v2708
      %2710 = vmatmul.bf16.gmra.mxu0 %v2548
      %v2711 = vpop.f32.mrf.mxu0
      %v2712 = vadd.f32 %v2573, %v2711
      %v2713 = vpop.f32.mrf.mxu0
      %v2714 = vadd.f32 %v2573, %v2713
      %2715 = vmatmul.bf16.gmra.mxu0 %v2549
      %v2716 = vpop.f32.mrf.mxu0
      %v2717 = vadd.f32 %v2573, %v2716
      %v2718 = vpop.f32.mrf.mxu0
      %v2719 = vadd.f32 %v2573, %v2718
      %2720 = vmatmul.bf16.gmra.mxu0 %v2550
      %v2721 = vpop.f32.mrf.mxu0
      %v2722 = vadd.f32 %v2573, %v2721
      %v2723 = vpop.f32.mrf.mxu0
      %v2724 = vadd.f32 %v2573, %v2723
      %2725 = vmatmul.bf16.gmra.mxu0 %v2551
      %v2726 = vpop.f32.mrf.mxu0
      %v2727 = vadd.f32 %v2573, %v2726
      %v2728 = vpop.f32.mrf.mxu0
      %v2729 = vadd.f32 %v2573, %v2728
      %2730 = vmatmul.bf16.gmra.mxu0 %v2552
      %v2731 = vpop.f32.mrf.mxu0
      %v2732 = vadd.f32 %v2573, %v2731
      %v2733 = vpop.f32.mrf.mxu0
      %v2734 = vadd.f32 %v2573, %v2733
      %2735 = vmatmul.bf16.gmra.mxu0 %v2553
      %v2736 = vpop.f32.mrf.mxu0
      %v2737 = vadd.f32 %v2573, %v2736
      %v2738 = vpop.f32.mrf.mxu0
      %v2739 = vadd.f32 %v2573, %v2738
      %2740 = vmatmul.bf16.gmra.mxu0 %v2554
      %v2741 = vpop.f32.mrf.mxu0
      %v2742 = vadd.f32 %v2573, %v2741
      %v2743 = vpop.f32.mrf.mxu0
      %v2744 = vadd.f32 %v2573, %v2743
      %2745 = vdwg.mxu0
      %2746 = vmatpush.bf16.msra.mxu0 %v2640
      %2747 = vmatpush.bf16.msra.mxu0 %v2638
      %2748 = vmatpush.bf16.msra.mxu0 %v2636
      %2749 = vmatpush.bf16.msra.mxu0 %v2634
      %2750 = vmatpush.bf16.msra.mxu0 %v2632
      %2751 = vmatpush.bf16.msra.mxu0 %v2630
      %2752 = vmatpush.bf16.msra.mxu0 %v2628
      %2753 = vmatpush.bf16.msra.mxu0 %v2626
      %2754 = vmatmul.bf16.gmra.mxu0 %v2539
      %v2755 = vpop.f32.mrf.mxu0
      %v2756 = vadd.f32 %v2574, %v2755
      %v2757 = vpop.f32.mrf.mxu0
      %v2758 = vadd.f32 %v2574, %v2757
      %2759 = vmatmul.bf16.gmra.mxu0 %v2540
      %v2760 = vpop.f32.mrf.mxu0
      %v2761 = vadd.f32 %v2574, %v2760
      %v2762 = vpop.f32.mrf.mxu0
      %v2763 = vadd.f32 %v2574, %v2762
      %2764 = vmatmul.bf16.gmra.mxu0 %v2541
      %v2765 = vpop.f32.mrf.mxu0
      %v2766 = vadd.f32 %v2574, %v2765
      %v2767 = vpop.f32.mrf.mxu0
      %v2768 = vadd.f32 %v2574, %v2767
      %2769 = vmatmul.bf16.gmra.mxu0 %v2542
      %v2770 = vpop.f32.mrf.mxu0
      %v2771 = vadd.f32 %v2574, %v2770
      %v2772 = vpop.f32.mrf.mxu0
      %v2773 = vadd.f32 %v2574, %v2772
      %2774 = vmatmul.bf16.gmra.mxu0 %v2543
      %v2775 = vpop.f32.mrf.mxu0
      %v2776 = vadd.f32 %v2574, %v2775
      %v2777 = vpop.f32.mrf.mxu0
      %v2778 = vadd.f32 %v2574, %v2777
      %2779 = vmatmul.bf16.gmra.mxu0 %v2544
      %v2780 = vpop.f32.mrf.mxu0
      %v2781 = vadd.f32 %v2574, %v2780
      %v2782 = vpop.f32.mrf.mxu0
      %v2783 = vadd.f32 %v2574, %v2782
      %2784 = vmatmul.bf16.gmra.mxu0 %v2545
      %v2785 = vpop.f32.mrf.mxu0
      %v2786 = vadd.f32 %v2574, %v2785
      %v2787 = vpop.f32.mrf.mxu0
      %v2788 = vadd.f32 %v2574, %v2787
      %2789 = vmatmul.bf16.gmra.mxu0 %v2546
      %v2790 = vpop.f32.mrf.mxu0
      %v2791 = vadd.f32 %v2574, %v2790
      %v2792 = vpop.f32.mrf.mxu0
      %v2793 = vadd.f32 %v2574, %v2792
      %2794 = vmatmul.bf16.gmra.mxu0 %v2547
      %v2795 = vpop.f32.mrf.mxu0
      %v2796 = vadd.f32 %v2574, %v2795
      %v2797 = vpop.f32.mrf.mxu0
      %v2798 = vadd.f32 %v2574, %v2797
      %2799 = vmatmul.bf16.gmra.mxu0 %v2548
      %v2800 = vpop.f32.mrf.mxu0
      %v2801 = vadd.f32 %v2574, %v2800
      %v2802 = vpop.f32.mrf.mxu0
      %v2803 = vadd.f32 %v2574, %v2802
      %2804 = vmatmul.bf16.gmra.mxu0 %v2549
      %v2805 = vpop.f32.mrf.mxu0
      %v2806 = vadd.f32 %v2574, %v2805
      %v2807 = vpop.f32.mrf.mxu0
      %v2808 = vadd.f32 %v2574, %v2807
      %2809 = vmatmul.bf16.gmra.mxu0 %v2550
      %v2810 = vpop.f32.mrf.mxu0
      %v2811 = vadd.f32 %v2574, %v2810
      %v2812 = vpop.f32.mrf.mxu0
      %v2813 = vadd.f32 %v2574, %v2812
      %2814 = vmatmul.bf16.gmra.mxu0 %v2551
      %v2815 = vpop.f32.mrf.mxu0
      %v2816 = vadd.f32 %v2574, %v2815
      %v2817 = vpop.f32.mrf.mxu0
      %v2818 = vadd.f32 %v2574, %v2817
      %2819 = vmatmul.bf16.gmra.mxu0 %v2552
      %v2820 = vpop.f32.mrf.mxu0
      %v2821 = vadd.f32 %v2574, %v2820
      %v2822 = vpop.f32.mrf.mxu0
      %v2823 = vadd.f32 %v2574, %v2822
      %2824 = vmatmul.bf16.gmra.mxu0 %v2553
      %v2825 = vpop.f32.mrf.mxu0
      %v2826 = vadd.f32 %v2574, %v2825
      %v2827 = vpop.f32.mrf.mxu0
      %v2828 = vadd.f32 %v2574, %v2827
      %2829 = vmatmul.bf16.gmra.mxu0 %v2554
      %v2830 = vpop.f32.mrf.mxu0
      %v2831 = vadd.f32 %v2574, %v2830
      %v2832 = vpop.f32.mrf.mxu0
      %v2833 = vadd.f32 %v2574, %v2832
      %2834 = vdwg.mxu0
      %v2835 = vmax.f32 %v2667, 0.0
      %v2836 = vmax.f32 %v2756, 0.0
      %v2837 = vmax.f32 %v2669, 0.0
      %v2838 = vmax.f32 %v2758, 0.0
      %v2839 = vmax.f32 %v2672, 0.0
      %v2840 = vmax.f32 %v2761, 0.0
      %v2841 = vmax.f32 %v2674, 0.0
      %v2842 = vmax.f32 %v2763, 0.0
      %v2843 = vmax.f32 %v2677, 0.0
      %v2844 = vmax.f32 %v2766, 0.0
      %v2845 = vmax.f32 %v2679, 0.0
      %v2846 = vmax.f32 %v2768, 0.0
      %v2847 = vmax.f32 %v2682, 0.0
      %v2848 = vmax.f32 %v2771, 0.0
      %v2849 = vmax.f32 %v2684, 0.0
      %v2850 = vmax.f32 %v2773, 0.0
      %v2851 = vmax.f32 %v2687, 0.0
      %v2852 = vmax.f32 %v2776, 0.0
      %v2853 = vmax.f32 %v2689, 0.0
      %v2854 = vmax.f32 %v2778, 0.0
      %v2855 = vmax.f32 %v2692, 0.0
      %v2856 = vmax.f32 %v2781, 0.0
      %v2857 = vmax.f32 %v2694, 0.0
      %v2858 = vmax.f32 %v2783, 0.0
      %v2859 = vmax.f32 %v2697, 0.0
      %v2860 = vmax.f32 %v2786, 0.0
      %v2861 = vmax.f32 %v2699, 0.0
      %v2862 = vmax.f32 %v2788, 0.0
      %v2863 = vmax.f32 %v2702, 0.0
      %v2864 = vmax.f32 %v2791, 0.0
      %v2865 = vmax.f32 %v2704, 0.0
      %v2866 = vmax.f32 %v2793, 0.0
      %v2867 = vmax.f32 %v2707, 0.0
      %v2868 = vmax.f32 %v2796, 0.0
      %v2869 = vmax.f32 %v2709, 0.0
      %v2870 = vmax.f32 %v2798, 0.0
      %v2871 = vmax.f32 %v2712, 0.0
      %v2872 = vmax.f32 %v2801, 0.0
      %v2873 = vmax.f32 %v2714, 0.0
      %v2874 = vmax.f32 %v2803, 0.0
      %v2875 = vmax.f32 %v2717, 0.0
      %v2876 = vmax.f32 %v2806, 0.0
      %v2877 = vmax.f32 %v2719, 0.0
      %v2878 = vmax.f32 %v2808, 0.0
      %v2879 = vmax.f32 %v2722, 0.0
      %v2880 = vmax.f32 %v2811, 0.0
      %v2881 = vmax.f32 %v2724, 0.0
      %v2882 = vmax.f32 %v2813, 0.0
      %v2883 = vmax.f32 %v2727, 0.0
      %v2884 = vmax.f32 %v2816, 0.0
      %v2885 = vmax.f32 %v2729, 0.0
      %v2886 = vmax.f32 %v2818, 0.0
      %v2887 = vmax.f32 %v2732, 0.0
      %v2888 = vmax.f32 %v2821, 0.0
      %v2889 = vmax.f32 %v2734, 0.0
      %v2890 = vmax.f32 %v2823, 0.0
      %v2891 = vmax.f32 %v2737, 0.0
      %v2892 = vmax.f32 %v2826, 0.0
      %v2893 = vmax.f32 %v2739, 0.0
      %v2894 = vmax.f32 %v2828, 0.0
      %v2895 = vmax.f32 %v2742, 0.0
      %v2896 = vmax.f32 %v2831, 0.0
      %v2897 = vmax.f32 %v2744, 0.0
      %v2898 = vmax.f32 %v2833, 0.0
      %v2899 = vpack.c.bf16 %v2837, %v2835
      %v2900 = vpack.c.bf16 %v2838, %v2836
      %v2901 = vpack.c.bf16 %v2841, %v2839
      %v2902 = vpack.c.bf16 %v2842, %v2840
      %v2903 = vpack.c.bf16 %v2845, %v2843
      %v2904 = vpack.c.bf16 %v2846, %v2844
      %v2905 = vpack.c.bf16 %v2849, %v2847
      %v2906 = vpack.c.bf16 %v2850, %v2848
      %v2907 = vpack.c.bf16 %v2853, %v2851
      %v2908 = vpack.c.bf16 %v2854, %v2852
      %v2909 = vpack.c.bf16 %v2857, %v2855
      %v2910 = vpack.c.bf16 %v2858, %v2856
      %v2911 = vpack.c.bf16 %v2861, %v2859
      %v2912 = vpack.c.bf16 %v2862, %v2860
      %v2913 = vpack.c.bf16 %v2865, %v2863
      %v2914 = vpack.c.bf16 %v2866, %v2864
      %v2915 = vpack.c.bf16 %v2869, %v2867
      %v2916 = vpack.c.bf16 %v2870, %v2868
      %v2917 = vpack.c.bf16 %v2873, %v2871
      %v2918 = vpack.c.bf16 %v2874, %v2872
      %v2919 = vpack.c.bf16 %v2877, %v2875
      %v2920 = vpack.c.bf16 %v2878, %v2876
      %v2921 = vpack.c.bf16 %v2881, %v2879
      %v2922 = vpack.c.bf16 %v2882, %v2880
      %v2923 = vpack.c.bf16 %v2885, %v2883
      %v2924 = vpack.c.bf16 %v2886, %v2884
      %v2925 = vpack.c.bf16 %v2889, %v2887
      %v2926 = vpack.c.bf16 %v2890, %v2888
      %v2927 = vpack.c.bf16 %v2893, %v2891
      %v2928 = vpack.c.bf16 %v2894, %v2892
      %v2929 = vpack.c.bf16 %v2897, %v2895
      %v2930 = vpack.c.bf16 %v2898, %v2896
      %v2931 = vld [vmem:[%s8] sm:$0xf]
      %v2932 = vld [vmem:[%s8 + $0x4] sm:$0xf]
      %v2933 = vld [vmem:[%s8 + $0x8] sm:$0xf]
      %v2934 = vld [vmem:[%s8 + $0xc] sm:$0xf]
      %v2935 = vld [vmem:[%s8 + $0x10] sm:$0xf]
      %v2936 = vld [vmem:[%s8 + $0x14] sm:$0xf]
      %v2937 = vld [vmem:[%s8 + $0x18] sm:$0xf]
      %v2938 = vld [vmem:[%s8 + $0x1c] sm:$0xf]
      %v2939 = vld [vmem:[%s8 + $0x20] sm:$0xf]
      %v2940 = vld [vmem:[%s8 + $0x24] sm:$0xf]
      %v2941 = vld [vmem:[%s8 + $0x28] sm:$0xf]
      %v2942 = vld [vmem:[%s8 + $0x2c] sm:$0xf]
      %v2943 = vld [vmem:[%s8 + $0x30] sm:$0xf]
      %v2944 = vld [vmem:[%s8 + $0x34] sm:$0xf]
      %v2945 = vld [vmem:[%s8 + $0x38] sm:$0xf]
      %v2946 = vld [vmem:[%s8 + $0x3c] sm:$0xf]
      %v2947 = vld [vmem:[%s8 + $0x40] sm:$0xf]
      %v2948 = vld [vmem:[%s8 + $0x44] sm:$0xf]
      %v2949 = vld [vmem:[%s8 + $0x48] sm:$0xf]
      %v2950 = vld [vmem:[%s8 + $0x4c] sm:$0xf]
      %v2951 = vld [vmem:[%s8 + $0x50] sm:$0xf]
      %v2952 = vld [vmem:[%s8 + $0x54] sm:$0xf]
      %v2953 = vld [vmem:[%s8 + $0x58] sm:$0xf]
      %v2954 = vld [vmem:[%s8 + $0x5c] sm:$0xf]
      %v2955 = vld [vmem:[%s8 + $0x60] sm:$0xf]
      %v2956 = vld [vmem:[%s8 + $0x64] sm:$0xf]
      %v2957 = vld [vmem:[%s8 + $0x68] sm:$0xf]
      %v2958 = vld [vmem:[%s8 + $0x6c] sm:$0xf]
      %v2959 = vld [vmem:[%s8 + $0x70] sm:$0xf]
      %v2960 = vld [vmem:[%s8 + $0x74] sm:$0xf]
      %v2961 = vld [vmem:[%s8 + $0x78] sm:$0xf]
      %v2962 = vld [vmem:[%s8 + $0x7c] sm:$0xf]
      %v2963 = vld [vmem:[%s9] sm:$0x1]
      %v2965 = vperm.slane %v2963, 0
      %v2999 = vunpack.c.l.b16 %v2931
      %v3000 = vunpack.c.l.b16 %v2932
      %v3001 = vunpack.c.l.b16 %v2933
      %v3002 = vunpack.c.l.b16 %v2934
      %v3003 = vunpack.c.l.b16 %v2935
      %v3004 = vunpack.c.l.b16 %v2936
      %v3005 = vunpack.c.l.b16 %v2937
      %v3006 = vunpack.c.l.b16 %v2938
      %v3007 = vunpack.c.l.b16 %v2939
      %v3008 = vunpack.c.l.b16 %v2940
      %v3009 = vunpack.c.l.b16 %v2941
      %v3010 = vunpack.c.l.b16 %v2942
      %v3011 = vunpack.c.l.b16 %v2943
      %v3012 = vunpack.c.l.b16 %v2944
      %v3013 = vunpack.c.l.b16 %v2945
      %v3014 = vunpack.c.l.b16 %v2946
      %v3015 = vunpack.c.l.b16 %v2947
      %v3016 = vunpack.c.l.b16 %v2948
      %v3017 = vunpack.c.l.b16 %v2949
      %v3018 = vunpack.c.l.b16 %v2950
      %v3019 = vunpack.c.l.b16 %v2951
      %v3020 = vunpack.c.l.b16 %v2952
      %v3021 = vunpack.c.l.b16 %v2953
      %v3022 = vunpack.c.l.b16 %v2954
      %v3023 = vunpack.c.l.b16 %v2955
      %v3024 = vunpack.c.l.b16 %v2956
      %v3025 = vunpack.c.l.b16 %v2957
      %v3026 = vunpack.c.l.b16 %v2958
      %v3027 = vunpack.c.l.b16 %v2959
      %v3028 = vunpack.c.l.b16 %v2960
      %v3029 = vunpack.c.l.b16 %v2961
      %v3030 = vunpack.c.l.b16 %v2962
      %v3031 = vpack.c.b16 %v3000, %v2999
      %v3032 = vpack.c.b16 %v3002, %v3001
      %v3033 = vpack.c.b16 %v3004, %v3003
      %v3034 = vpack.c.b16 %v3006, %v3005
      %v3035 = vpack.c.b16 %v3008, %v3007
      %v3036 = vpack.c.b16 %v3010, %v3009
      %v3037 = vpack.c.b16 %v3012, %v3011
      %v3038 = vpack.c.b16 %v3014, %v3013
      %v3039 = vpack.c.b16 %v3016, %v3015
      %v3040 = vpack.c.b16 %v3018, %v3017
      %v3041 = vpack.c.b16 %v3020, %v3019
      %v3042 = vpack.c.b16 %v3022, %v3021
      %v3043 = vpack.c.b16 %v3024, %v3023
      %v3044 = vpack.c.b16 %v3026, %v3025
      %v3045 = vpack.c.b16 %v3028, %v3027
      %v3046 = vpack.c.b16 %v3030, %v3029
      %3063 = vmatpush.bf16.msra.mxu0 %v3038
      %3064 = vmatpush.bf16.msra.mxu0 %v3037
      %3065 = vmatpush.bf16.msra.mxu0 %v3036
      %3066 = vmatpush.bf16.msra.mxu0 %v3035
      %3067 = vmatpush.bf16.msra.mxu0 %v3034
      %3068 = vmatpush.bf16.msra.mxu0 %v3033
      %3069 = vmatpush.bf16.msra.mxu0 %v3032
      %3070 = vmatpush.bf16.msra.mxu0 %v3031
      %3071 = vmatmul.bf16.gmra.mxu0 %v2899
      %v3072 = vpop.f32.mrf.mxu0
      %v3073 = vadd.f32 %v2965, %v3072
      %v3074 = vpop.f32.mrf.mxu0
      %v3075 = vadd.f32 %v2965, %v3074
      %3076 = vmatmul.bf16.gmra.mxu0 %v2901
      %v3077 = vpop.f32.mrf.mxu0
      %v3078 = vadd.f32 %v2965, %v3077
      %v3079 = vpop.f32.mrf.mxu0
      %v3080 = vadd.f32 %v2965, %v3079
      %3081 = vmatmul.bf16.gmra.mxu0 %v2903
      %v3082 = vpop.f32.mrf.mxu0
      %v3083 = vadd.f32 %v2965, %v3082
      %v3084 = vpop.f32.mrf.mxu0
      %v3085 = vadd.f32 %v2965, %v3084
      %3086 = vmatmul.bf16.gmra.mxu0 %v2905
      %v3087 = vpop.f32.mrf.mxu0
      %v3088 = vadd.f32 %v2965, %v3087
      %v3089 = vpop.f32.mrf.mxu0
      %v3090 = vadd.f32 %v2965, %v3089
      %3091 = vmatmul.bf16.gmra.mxu0 %v2907
      %v3092 = vpop.f32.mrf.mxu0
      %v3093 = vadd.f32 %v2965, %v3092
      %v3094 = vpop.f32.mrf.mxu0
      %v3095 = vadd.f32 %v2965, %v3094
      %3096 = vmatmul.bf16.gmra.mxu0 %v2909
      %v3097 = vpop.f32.mrf.mxu0
      %v3098 = vadd.f32 %v2965, %v3097
      %v3099 = vpop.f32.mrf.mxu0
      %v3100 = vadd.f32 %v2965, %v3099
      %3101 = vmatmul.bf16.gmra.mxu0 %v2911
      %v3102 = vpop.f32.mrf.mxu0
      %v3103 = vadd.f32 %v2965, %v3102
      %v3104 = vpop.f32.mrf.mxu0
      %v3105 = vadd.f32 %v2965, %v3104
      %3106 = vmatmul.bf16.gmra.mxu0 %v2913
      %v3107 = vpop.f32.mrf.mxu0
      %v3108 = vadd.f32 %v2965, %v3107
      %v3109 = vpop.f32.mrf.mxu0
      %v3110 = vadd.f32 %v2965, %v3109
      %3111 = vmatmul.bf16.gmra.mxu0 %v2915
      %v3112 = vpop.f32.mrf.mxu0
      %v3113 = vadd.f32 %v2965, %v3112
      %v3114 = vpop.f32.mrf.mxu0
      %v3115 = vadd.f32 %v2965, %v3114
      %3116 = vmatmul.bf16.gmra.mxu0 %v2917
      %v3117 = vpop.f32.mrf.mxu0
      %v3118 = vadd.f32 %v2965, %v3117
      %v3119 = vpop.f32.mrf.mxu0
      %v3120 = vadd.f32 %v2965, %v3119
      %3121 = vmatmul.bf16.gmra.mxu0 %v2919
      %v3122 = vpop.f32.mrf.mxu0
      %v3123 = vadd.f32 %v2965, %v3122
      %v3124 = vpop.f32.mrf.mxu0
      %v3125 = vadd.f32 %v2965, %v3124
      %3126 = vmatmul.bf16.gmra.mxu0 %v2921
      %v3127 = vpop.f32.mrf.mxu0
      %v3128 = vadd.f32 %v2965, %v3127
      %v3129 = vpop.f32.mrf.mxu0
      %v3130 = vadd.f32 %v2965, %v3129
      %3131 = vmatmul.bf16.gmra.mxu0 %v2923
      %v3132 = vpop.f32.mrf.mxu0
      %v3133 = vadd.f32 %v2965, %v3132
      %v3134 = vpop.f32.mrf.mxu0
      %v3135 = vadd.f32 %v2965, %v3134
      %3136 = vmatmul.bf16.gmra.mxu0 %v2925
      %v3137 = vpop.f32.mrf.mxu0
      %v3138 = vadd.f32 %v2965, %v3137
      %v3139 = vpop.f32.mrf.mxu0
      %v3140 = vadd.f32 %v2965, %v3139
      %3141 = vmatmul.bf16.gmra.mxu0 %v2927
      %v3142 = vpop.f32.mrf.mxu0
      %v3143 = vadd.f32 %v2965, %v3142
      %v3144 = vpop.f32.mrf.mxu0
      %v3145 = vadd.f32 %v2965, %v3144
      %3146 = vmatmul.bf16.gmra.mxu0 %v2929
      %v3147 = vpop.f32.mrf.mxu0
      %v3148 = vadd.f32 %v2965, %v3147
      %v3149 = vpop.f32.mrf.mxu0
      %v3150 = vadd.f32 %v2965, %v3149
      %3151 = vdwg.mxu0
      %3152 = vmatpush.bf16.msra.mxu0 %v3046
      %3153 = vmatpush.bf16.msra.mxu0 %v3045
      %3154 = vmatpush.bf16.msra.mxu0 %v3044
      %3155 = vmatpush.bf16.msra.mxu0 %v3043
      %3156 = vmatpush.bf16.msra.mxu0 %v3042
      %3157 = vmatpush.bf16.msra.mxu0 %v3041
      %3158 = vmatpush.bf16.msra.mxu0 %v3040
      %3159 = vmatpush.bf16.msra.mxu0 %v3039
      %3160 = vmatmul.bf16.gmra.mxu0 %v2900
      %v3161 = vpop.f32.mrf.mxu0
      %v3162 = vadd.f32 %v3073, %v3161
      %v3163 = vpop.f32.mrf.mxu0
      %v3164 = vadd.f32 %v3075, %v3163
      %3165 = vmatmul.bf16.gmra.mxu0 %v2902
      %v3166 = vpop.f32.mrf.mxu0
      %v3167 = vadd.f32 %v3078, %v3166
      %v3168 = vpop.f32.mrf.mxu0
      %v3169 = vadd.f32 %v3080, %v3168
      %3170 = vmatmul.bf16.gmra.mxu0 %v2904
      %v3171 = vpop.f32.mrf.mxu0
      %v3172 = vadd.f32 %v3083, %v3171
      %v3173 = vpop.f32.mrf.mxu0
      %v3174 = vadd.f32 %v3085, %v3173
      %3175 = vmatmul.bf16.gmra.mxu0 %v2906
      %v3176 = vpop.f32.mrf.mxu0
      %v3177 = vadd.f32 %v3088, %v3176
      %v3178 = vpop.f32.mrf.mxu0
      %v3179 = vadd.f32 %v3090, %v3178
      %3180 = vmatmul.bf16.gmra.mxu0 %v2908
      %v3181 = vpop.f32.mrf.mxu0
      %v3182 = vadd.f32 %v3093, %v3181
      %v3183 = vpop.f32.mrf.mxu0
      %v3184 = vadd.f32 %v3095, %v3183
      %3185 = vmatmul.bf16.gmra.mxu0 %v2910
      %v3186 = vpop.f32.mrf.mxu0
      %v3187 = vadd.f32 %v3098, %v3186
      %v3188 = vpop.f32.mrf.mxu0
      %v3189 = vadd.f32 %v3100, %v3188
      %3190 = vmatmul.bf16.gmra.mxu0 %v2912
      %v3191 = vpop.f32.mrf.mxu0
      %v3192 = vadd.f32 %v3103, %v3191
      %v3193 = vpop.f32.mrf.mxu0
      %v3194 = vadd.f32 %v3105, %v3193
      %3195 = vmatmul.bf16.gmra.mxu0 %v2914
      %v3196 = vpop.f32.mrf.mxu0
      %v3197 = vadd.f32 %v3108, %v3196
      %v3198 = vpop.f32.mrf.mxu0
      %v3199 = vadd.f32 %v3110, %v3198
      %3200 = vmatmul.bf16.gmra.mxu0 %v2916
      %v3201 = vpop.f32.mrf.mxu0
      %v3202 = vadd.f32 %v3113, %v3201
      %v3203 = vpop.f32.mrf.mxu0
      %v3204 = vadd.f32 %v3115, %v3203
      %3205 = vmatmul.bf16.gmra.mxu0 %v2918
      %v3206 = vpop.f32.mrf.mxu0
      %v3207 = vadd.f32 %v3118, %v3206
      %v3208 = vpop.f32.mrf.mxu0
      %v3209 = vadd.f32 %v3120, %v3208
      %3210 = vmatmul.bf16.gmra.mxu0 %v2920
      %v3211 = vpop.f32.mrf.mxu0
      %v3212 = vadd.f32 %v3123, %v3211
      %v3213 = vpop.f32.mrf.mxu0
      %v3214 = vadd.f32 %v3125, %v3213
      %3215 = vmatmul.bf16.gmra.mxu0 %v2922
      %v3216 = vpop.f32.mrf.mxu0
      %v3217 = vadd.f32 %v3128, %v3216
      %v3218 = vpop.f32.mrf.mxu0
      %v3219 = vadd.f32 %v3130, %v3218
      %3220 = vmatmul.bf16.gmra.mxu0 %v2924
      %v3221 = vpop.f32.mrf.mxu0
      %v3222 = vadd.f32 %v3133, %v3221
      %v3223 = vpop.f32.mrf.mxu0
      %v3224 = vadd.f32 %v3135, %v3223
      %3225 = vmatmul.bf16.gmra.mxu0 %v2926
      %v3226 = vpop.f32.mrf.mxu0
      %v3227 = vadd.f32 %v3138, %v3226
      %v3228 = vpop.f32.mrf.mxu0
      %v3229 = vadd.f32 %v3140, %v3228
      %3230 = vmatmul.bf16.gmra.mxu0 %v2928
      %v3231 = vpop.f32.mrf.mxu0
      %v3232 = vadd.f32 %v3143, %v3231
      %v3233 = vpop.f32.mrf.mxu0
      %v3234 = vadd.f32 %v3145, %v3233
      %3235 = vmatmul.bf16.gmra.mxu0 %v2930
      %v3236 = vpop.f32.mrf.mxu0
      %v3237 = vadd.f32 %v3148, %v3236
      %v3238 = vpop.f32.mrf.mxu0
      %v3239 = vadd.f32 %v3150, %v3238
      %3240 = vdwg.mxu0
      %v3241 = vpack.c.bf16 %v3162, %v3162
      %v3242 = vpack.c.bf16 %v3164, %v3164
      %v3243 = vpack.c.bf16 %v3167, %v3167
      %v3244 = vpack.c.bf16 %v3169, %v3169
      %v3245 = vpack.c.bf16 %v3172, %v3172
      %v3246 = vpack.c.bf16 %v3174, %v3174
      %v3247 = vpack.c.bf16 %v3177, %v3177
      %v3248 = vpack.c.bf16 %v3179, %v3179
      %v3249 = vpack.c.bf16 %v3182, %v3182
      %v3250 = vpack.c.bf16 %v3184, %v3184
      %v3251 = vpack.c.bf16 %v3187, %v3187
      %v3252 = vpack.c.bf16 %v3189, %v3189
      %v3253 = vpack.c.bf16 %v3192, %v3192
      %v3254 = vpack.c.bf16 %v3194, %v3194
      %v3255 = vpack.c.bf16 %v3197, %v3197
      %v3256 = vpack.c.bf16 %v3199, %v3199
      %v3257 = vpack.c.bf16 %v3202, %v3202
      %v3258 = vpack.c.bf16 %v3204, %v3204
      %v3259 = vpack.c.bf16 %v3207, %v3207
      %v3260 = vpack.c.bf16 %v3209, %v3209
      %v3261 = vpack.c.bf16 %v3212, %v3212
      %v3262 = vpack.c.bf16 %v3214, %v3214
      %v3263 = vpack.c.bf16 %v3217, %v3217
      %v3264 = vpack.c.bf16 %v3219, %v3219
      %v3265 = vpack.c.bf16 %v3222, %v3222
      %v3266 = vpack.c.bf16 %v3224, %v3224
      %v3267 = vpack.c.bf16 %v3227, %v3227
      %v3268 = vpack.c.bf16 %v3229, %v3229
      %v3269 = vpack.c.bf16 %v3232, %v3232
      %v3270 = vpack.c.bf16 %v3234, %v3234
      %v3271 = vpack.c.bf16 %v3237, %v3237
      %v3272 = vpack.c.bf16 %v3239, %v3239
      %3273 = vst [vmem:[%s428] sm:$0xf] %v3241
      %3274 = vst [vmem:[%s428 + $0x4] sm:$0xf] %v3242
      %3275 = vst [vmem:[%s428 + $0x8] sm:$0xf] %v3243
      %3276 = vst [vmem:[%s428 + $0xc] sm:$0xf] %v3244
      %3277 = vst [vmem:[%s428 + $0x10] sm:$0xf] %v3245
      %3278 = vst [vmem:[%s428 + $0x14] sm:$0xf] %v3246
      %3279 = vst [vmem:[%s428 + $0x18] sm:$0xf] %v3247
      %3280 = vst [vmem:[%s428 + $0x1c] sm:$0xf] %v3248
      %3281 = vst [vmem:[%s428 + $0x20] sm:$0xf] %v3249
      %3282 = vst [vmem:[%s428 + $0x24] sm:$0xf] %v3250
      %3283 = vst [vmem:[%s428 + $0x28] sm:$0xf] %v3251
      %3284 = vst [vmem:[%s428 + $0x2c] sm:$0xf] %v3252
      %3285 = vst [vmem:[%s428 + $0x30] sm:$0xf] %v3253
      %3286 = vst [vmem:[%s428 + $0x34] sm:$0xf] %v3254
      %3287 = vst [vmem:[%s428 + $0x38] sm:$0xf] %v3255
      %3288 = vst [vmem:[%s428 + $0x3c] sm:$0xf] %v3256
      %3289 = vst [vmem:[%s428 + $0x40] sm:$0xf] %v3257
      %3290 = vst [vmem:[%s428 + $0x44] sm:$0xf] %v3258
      %3291 = vst [vmem:[%s428 + $0x48] sm:$0xf] %v3259
      %3292 = vst [vmem:[%s428 + $0x4c] sm:$0xf] %v3260
      %3293 = vst [vmem:[%s428 + $0x50] sm:$0xf] %v3261
      %3294 = vst [vmem:[%s428 + $0x54] sm:$0xf] %v3262
      %3295 = vst [vmem:[%s428 + $0x58] sm:$0xf] %v3263
      %3296 = vst [vmem:[%s428 + $0x5c] sm:$0xf] %v3264
      %3297 = vst [vmem:[%s428 + $0x60] sm:$0xf] %v3265
      %3298 = vst [vmem:[%s428 + $0x64] sm:$0xf] %v3266
      %3299 = vst [vmem:[%s428 + $0x68] sm:$0xf] %v3267
      %3300 = vst [vmem:[%s428 + $0x6c] sm:$0xf] %v3268
      %3301 = vst [vmem:[%s428 + $0x70] sm:$0xf] %v3269
      %3302 = vst [vmem:[%s428 + $0x74] sm:$0xf] %v3270
      %3303 = vst [vmem:[%s428 + $0x78] sm:$0xf] %v3271
      %3304 = vst [vmem:[%s428 + $0x7c] sm:$0xf] %v3272
      %s3305 = smul.u32 32, %s26
      %p3306 = scmp.lt.s32.totalorder %s25, 1
      %s3307 = scalar_select %p3306, %s25, 1
      %p3308 = scmp.lt.s32.totalorder %s3305, 95
      %s3309 = scalar_select %p3308, %s3305, 95
      %s3310 = smul.addr %s3307, 96
      %s3311 = sadd.s32 %s3309, %s3310
      %s3312 = smul.addr %s3311, 4
      %s3313 = scalar_lea.vmem %s10, %s3312
      // Predicated region
      $region61: #{hyena_forward.3} parent=59 // pred_check
        %p3314 = pneg %p277
      $region62: #{hyena_forward.3} parent=59 // pred_check_branch
        %3316 = sbr.rel (%p3314) target = $region64
      $region63: #{hyena_forward.3} parent=59 // pred_region
        %s3317 = smul.u32 32, %s26
      $region64: #{hyena_forward.3} parent=59 // pred_fallthru
        _
    $region60: #{hyena_forward.3} parent=5 // pred_fallthru
      _
    %p3318 = scmp.le.s32.totalorder 2, %s16
    // Predicated region
    $region65: #{hyena_forward.3} parent=5 // pred_check
      %p3319 = pneg %p3318
    $region66: #{hyena_forward.3} parent=5 // pred_check_branch
      %3321 = sbr.rel (%p3319) target = $region68
    $region67: #{hyena_forward.3} parent=5 // pred_region
      %s3322 = ssub.s32 %s16, 2
      // Predicated region
      $region69: #{hyena_forward.3} parent=67 // pred_check
        %p3323 = pneg %p283
      $region70: #{hyena_forward.3} parent=67 // pred_check_branch
        %3325 = sbr.rel (%p3323) target = $region72
      $region71: #{hyena_forward.3} parent=67 // pred_region
        %s3326 = smul.u32 32, %s28
        %p3327 = scmp.lt.s32.totalorder %s27, 1
        %s3328 = scalar_select %p3327, %s27, 1
        %p3329 = scmp.lt.s32.totalorder %s3326, 95
        %s3330 = scalar_select %p3329, %s3326, 95
        %s3331 = smul.addr %s3328, 96
        %s3332 = sadd.s32 %s3330, %s3331
        %s3333 = smul.addr %s3332, 4
        %s3334 = scalar_lea.vmem %s10, %s3333
      $region72: #{hyena_forward.3} parent=67 // pred_fallthru
        _
    $region68: #{hyena_forward.3} parent=5 // pred_fallthru
      _
  $region6: #{hyena_forward.3} parent=0 // loop_footer
    %s20 = sadd.s32 1, %s16
  $region7: #{hyena_forward.3} parent=0 // loop_footer_branch
    %15 = sbr.rel target = $region3
  $region8: #{hyena_forward.3} parent=0 // loop_exit
    _

</llo_original>
